<compile_context>
chip_gen: v5e
topology: v5e:2x2
jax: 0.10.0
libtpu: 0.0.40
codegen_flags: <defaults>
</compile_context>

<pallas_src>
import jax
import jax.numpy as jnp
from jax.experimental import pallas as pl
from jax.experimental.pallas import tpu as pltpu

# ---------------- small synthetic ViT config ----------------
B = 2            # batch
C = 3            # image channels
IMG = 16         # image height = width
P = 4            # patch size
N_PATCH = (IMG // P) ** 2   # 16 patches
S = N_PATCH + 1             # 17 tokens (CLS + patches)
BS = B * S                  # 34 flattened tokens
CPP = C * P * P             # 48 unfolded patch pixels
D = 32           # hidden size
H = 4            # attention heads
HD = D // H      # head dim = 8
FF = 4 * D       # MLP intermediate = 128
L = 2            # encoder layers
NUM_CLASSES = 10
NC_PAD = 128     # lane-dense padded classifier width
LN_EPS = 1e-12   # HF ViT layer_norm_eps
NEG_INF = -1e30


# ---------------- in-kernel helpers ----------------
def _layer_norm(x, g, b):
    # PyTorch LayerNorm semantics: biased variance over last dim, f32 math.
    mu = jnp.mean(x, axis=-1, keepdims=True)
    var = jnp.mean(jnp.square(x - mu), axis=-1, keepdims=True)
    return (x - mu) * jax.lax.rsqrt(var + LN_EPS) * g + b


# ---------------- single fused ViT kernel ----------------
def _vit_fused_kernel(*refs):
    # refs: patches, base, attn_bias, patch_w, [12 params per layer]*L,
    #       ln_f_g, ln_f_b, cls_w_pad, cls_b_pad, out
    patches_ref, base_ref, attn_bias_ref, pw_ref = refs[:4]
    out_ref = refs[-1]
    rest = refs[4:-1]
    layer_refs = rest[:12 * L]
    lnf_g_ref, lnf_b_ref, clsw_ref, clsb_ref = rest[12 * L:]

    f32 = jnp.float32
    bf16 = jnp.bfloat16

    # ---- patch embedding; CLS token / position embedding / patch bias come in via
    #      the precomputed `base` slab (CLS rows of `patches` are zero) ----
    x = jnp.dot(patches_ref[...].astype(bf16), pw_ref[...].astype(bf16),
                preferred_element_type=f32) + base_ref[...]            # (B*S, D)

    attn_bias = attn_bias_ref[...]                                      # (B*S, B*S)
    scale = 1.0 / float(HD) ** 0.5

    # ---- L pre-LN encoder layers (static unroll) ----
    for l in range(L):
        (ln1_g, ln1_b, wqkv, bqkv, wo, bo,
         ln2_g, ln2_b, w1, b1, w2, b2) = layer_refs[12 * l:12 * (l + 1)]

        # layernorm_before + fused QKV projection
        h = _layer_norm(x, ln1_g[...], ln1_b[...])
        qkv = jnp.dot(h.astype(bf16), wqkv[...].astype(bf16),
                      preferred_element_type=f32) + bqkv[...]           # (B*S, 3D)
        q = qkv[:, :D] * scale          # scale hoisted out of the head loop
        k = qkv[:, D:2 * D]
        v = qkv[:, 2 * D:]

        ctx_parts = []
        for hh in range(H):             # static unroll over heads
            sl = slice(hh * HD, (hh + 1) * HD)
            s = jax.lax.dot_general(q[:, sl].astype(bf16), k[:, sl].astype(bf16),
                                    (((1,), (1,)), ((), ())),
                                    preferred_element_type=f32)         # (B*S, B*S)
            s = s + attn_bias           # block-diagonal mask keeps batches independent
            s = s - jnp.max(s, axis=-1, keepdims=True)
            p = jnp.exp(s)
            p = p / jnp.sum(p, axis=-1, keepdims=True)
            ctx_parts.append(jnp.dot(p.astype(bf16), v[:, sl].astype(bf16),
                                     preferred_element_type=f32))
        ctx = jnp.concatenate(ctx_parts, axis=-1)                       # (B*S, D)

        attn_out = jnp.dot(ctx.astype(bf16), wo[...].astype(bf16),
                           preferred_element_type=f32) + bo[...]
        x = x + attn_out                                                # residual 1

        # layernorm_after + MLP
        h2 = _layer_norm(x, ln2_g[...], ln2_b[...])
        ff = jnp.dot(h2.astype(bf16), w1[...].astype(bf16),
                     preferred_element_type=f32) + b1[...]
        # TODO(synk): HF ViT uses exact erf-GELU; tanh approximation used for Mosaic-safe lowering.
        ff = jax.nn.gelu(ff, approximate=True)
        ff = jnp.dot(ff.astype(bf16), w2[...].astype(bf16),
                     preferred_element_type=f32) + b2[...]
        x = x + ff                                                      # residual 2

    # ---- final LayerNorm + classifier + softmax over all rows (lane-dense 128-wide
    #      output); the wrapper slices the CLS rows and the first NUM_CLASSES lanes ----
    hf = _layer_norm(x, lnf_g_ref[...], lnf_b_ref[...])
    logits = jnp.dot(hf.astype(bf16), clsw_ref[...].astype(bf16),
                     preferred_element_type=f32) + clsb_ref[...]        # (B*S, 128)
    logits = logits - jnp.max(logits, axis=-1, keepdims=True)           # nn.Softmax(dim=1)
    e = jnp.exp(logits)                                                 # pad cols -> exactly 0
    out_ref[...] = e / jnp.sum(e, axis=-1, keepdims=True)


# ---------------- parameters (deterministic synthetic init) ----------------
def init_params(key):
    keys = iter(jax.random.split(key, 64))

    def nrm(shape, scale=0.02):
        return (scale * jax.random.normal(next(keys), shape)).astype(jnp.float32)

    params = {
        "patch_w": nrm((CPP, D)),                # Conv2d(C, D, P, stride=P) as matmul
        "patch_b": jnp.zeros((D,), jnp.float32),
        "cls": nrm((1, 1, D)),
        "pos": nrm((1, S, D)),
        "layers": [],
        "ln_f_g": jnp.ones((D,), jnp.float32),
        "ln_f_b": jnp.zeros((D,), jnp.float32),
        "cls_w": nrm((D, NUM_CLASSES)),
        "cls_b": jnp.zeros((NUM_CLASSES,), jnp.float32),
    }
    for _ in range(L):
        params["layers"].append(dict(
            ln1_g=jnp.ones((D,), jnp.float32), ln1_b=jnp.zeros((D,), jnp.float32),
            wq=nrm((D, D)), bq=jnp.zeros((D,), jnp.float32),
            wk=nrm((D, D)), bk=jnp.zeros((D,), jnp.float32),
            wv=nrm((D, D)), bv=jnp.zeros((D,), jnp.float32),
            wo=nrm((D, D)), bo=jnp.zeros((D,), jnp.float32),
            ln2_g=jnp.ones((D,), jnp.float32), ln2_b=jnp.zeros((D,), jnp.float32),
            w1=nrm((D, FF)), b1=jnp.zeros((FF,), jnp.float32),
            w2=nrm((FF, D)), b2=jnp.zeros((D,), jnp.float32),
        ))
    return params


# ---------------- full forward (ViT -> logits -> softmax), one pallas_call ----------------
def vit_logits_forward(x_nchw, params):
    # glue: unfold NCHW image into patch rows; flatten order (C, ph, pw) matches
    # torch Conv2d weight (D, C, P, P).reshape(D, -1).
    xb = x_nchw.reshape(B, C, IMG // P, P, IMG // P, P)
    xb = xb.transpose(0, 2, 4, 1, 3, 5).reshape(B, N_PATCH, CPP)
    # zero row in the CLS slot so one (B*S, CPP) @ (CPP, D) matmul covers all tokens
    patches = jnp.concatenate([jnp.zeros((B, 1, CPP), jnp.float32), xb], axis=1)
    patches = patches.reshape(BS, CPP)

    # glue (parameter-only): base slab = pos + [cls | patch_bias] broadcast over batch
    cls = params["cls"].reshape(1, 1, D)
    pb = jnp.broadcast_to(params["patch_b"].reshape(1, 1, D), (1, N_PATCH, D))
    base = params["pos"] + jnp.concatenate([cls, pb], axis=1)            # (1, S, D)
    base = jnp.broadcast_to(base, (B, S, D)).reshape(BS, D)

    # glue (constant): block-diagonal additive attention bias so the flattened-token
    # attention never mixes batch elements
    ids = jnp.arange(BS) // S
    attn_bias = jnp.where(ids[:, None] == ids[None, :], 0.0, NEG_INF).astype(jnp.float32)

    args = [patches, base, attn_bias, params["patch_w"]]
    for layer in params["layers"]:
        wqkv = jnp.concatenate([layer["wq"], layer["wk"], layer["wv"]], axis=1)   # (D, 3D)
        bqkv = jnp.concatenate([layer["bq"], layer["bk"], layer["bv"]]).reshape(1, 3 * D)
        args += [layer["ln1_g"].reshape(1, D), layer["ln1_b"].reshape(1, D),
                 wqkv, bqkv,
                 layer["wo"], layer["bo"].reshape(1, D),
                 layer["ln2_g"].reshape(1, D), layer["ln2_b"].reshape(1, D),
                 layer["w1"], layer["b1"].reshape(1, FF),
                 layer["w2"], layer["b2"].reshape(1, D)]

    # classifier padded to 128 lanes: zero weights + -1e30 bias in pad columns
    clsw_pad = jnp.zeros((D, NC_PAD), jnp.float32).at[:, :NUM_CLASSES].set(params["cls_w"])
    clsb_pad = jnp.full((NC_PAD,), NEG_INF, jnp.float32).at[:NUM_CLASSES].set(
        params["cls_b"]).reshape(1, NC_PAD)
    args += [params["ln_f_g"].reshape(1, D), params["ln_f_b"].reshape(1, D),
             clsw_pad, clsb_pad]

    in_specs = [pl.BlockSpec(a.shape, lambda i: (0, 0)) for a in args]

    probs_full = pl.pallas_call(
        _vit_fused_kernel,
        out_shape=jax.ShapeDtypeStruct((BS, NC_PAD), jnp.float32),
        grid=(1,),
        in_specs=in_specs,
        out_specs=pl.BlockSpec((BS, NC_PAD), lambda i: (0, 0)),
        compiler_params=pltpu.CompilerParams(dimension_semantics=("arbitrary",)),
    )(*args)

    # glue: take the CLS row of each batch element and the real class columns
    return probs_full.reshape(B, S, NC_PAD)[:, 0, :NUM_CLASSES]


if __name__ == "__main__":
    key = jax.random.PRNGKey(0)
    pkey, xkey = jax.random.split(key)
    params = init_params(pkey)
    x = jax.random.normal(xkey, (B, C, IMG, IMG), jnp.float32)

    forward = jax.jit(vit_logits_forward)
    probs = forward(x, params)
    probs = jax.block_until_ready(probs)

    assert probs.shape == (B, NUM_CLASSES)
    assert bool(jnp.all(jnp.isfinite(probs)))
    assert bool(jnp.allclose(jnp.sum(probs, axis=-1), 1.0, atol=1e-5))
    print("KERNEL_OK")
</pallas_src>

<mosaic_0001>
module attributes {stable_mosaic.version = 11 : i64} {
  func.func @_vit_fused_kernel(%arg0: i32, %arg1: memref<34x48xf32, #tpu.memory_space<vmem>>, %arg2: memref<34x32xf32, #tpu.memory_space<vmem>>, %arg3: memref<34x34xf32, #tpu.memory_space<vmem>>, %arg4: memref<48x32xf32, #tpu.memory_space<vmem>>, %arg5: memref<1x32xf32, #tpu.memory_space<vmem>>, %arg6: memref<1x32xf32, #tpu.memory_space<vmem>>, %arg7: memref<32x96xf32, #tpu.memory_space<vmem>>, %arg8: memref<1x96xf32, #tpu.memory_space<vmem>>, %arg9: memref<32x32xf32, #tpu.memory_space<vmem>>, %arg10: memref<1x32xf32, #tpu.memory_space<vmem>>, %arg11: memref<1x32xf32, #tpu.memory_space<vmem>>, %arg12: memref<1x32xf32, #tpu.memory_space<vmem>>, %arg13: memref<32x128xf32, #tpu.memory_space<vmem>>, %arg14: memref<1x128xf32, #tpu.memory_space<vmem>>, %arg15: memref<128x32xf32, #tpu.memory_space<vmem>>, %arg16: memref<1x32xf32, #tpu.memory_space<vmem>>, %arg17: memref<1x32xf32, #tpu.memory_space<vmem>>, %arg18: memref<1x32xf32, #tpu.memory_space<vmem>>, %arg19: memref<32x96xf32, #tpu.memory_space<vmem>>, %arg20: memref<1x96xf32, #tpu.memory_space<vmem>>, %arg21: memref<32x32xf32, #tpu.memory_space<vmem>>, %arg22: memref<1x32xf32, #tpu.memory_space<vmem>>, %arg23: memref<1x32xf32, #tpu.memory_space<vmem>>, %arg24: memref<1x32xf32, #tpu.memory_space<vmem>>, %arg25: memref<32x128xf32, #tpu.memory_space<vmem>>, %arg26: memref<1x128xf32, #tpu.memory_space<vmem>>, %arg27: memref<128x32xf32, #tpu.memory_space<vmem>>, %arg28: memref<1x32xf32, #tpu.memory_space<vmem>>, %arg29: memref<1x32xf32, #tpu.memory_space<vmem>>, %arg30: memref<1x32xf32, #tpu.memory_space<vmem>>, %arg31: memref<32x128xf32, #tpu.memory_space<vmem>>, %arg32: memref<1x128xf32, #tpu.memory_space<vmem>>, %arg33: memref<34x128xf32, #tpu.memory_space<vmem>>) attributes {dimension_semantics = [#tpu.dimension_semantics<arbitrary>], iteration_bounds = array<i64: 1>, scalar_prefetch = 0 : i64, scratch_operands = 0 : i64, tpu.core_type = #tpu.core_type<tc>, window_params = [{pipeline_mode = #tpu.pipeline_mode<synchronous>, transform_indices = @transform_0, window_bounds = array<i64: 34, 48>}, {pipeline_mode = #tpu.pipeline_mode<synchronous>, transform_indices = @transform_1, window_bounds = array<i64: 34, 32>}, {pipeline_mode = #tpu.pipeline_mode<synchronous>, transform_indices = @transform_2, window_bounds = array<i64: 34, 34>}, {pipeline_mode = #tpu.pipeline_mode<synchronous>, transform_indices = @transform_3, window_bounds = array<i64: 48, 32>}, {pipeline_mode = #tpu.pipeline_mode<synchronous>, transform_indices = @transform_4, window_bounds = array<i64: 1, 32>}, {pipeline_mode = #tpu.pipeline_mode<synchronous>, transform_indices = @transform_5, window_bounds = array<i64: 1, 32>}, {pipeline_mode = #tpu.pipeline_mode<synchronous>, transform_indices = @transform_6, window_bounds = array<i64: 32, 96>}, {pipeline_mode = #tpu.pipeline_mode<synchronous>, transform_indices = @transform_7, window_bounds = array<i64: 1, 96>}, {pipeline_mode = #tpu.pipeline_mode<synchronous>, transform_indices = @transform_8, window_bounds = array<i64: 32, 32>}, {pipeline_mode = #tpu.pipeline_mode<synchronous>, transform_indices = @transform_9, window_bounds = array<i64: 1, 32>}, {pipeline_mode = #tpu.pipeline_mode<synchronous>, transform_indices = @transform_10, window_bounds = array<i64: 1, 32>}, {pipeline_mode = #tpu.pipeline_mode<synchronous>, transform_indices = @transform_11, window_bounds = array<i64: 1, 32>}, {pipeline_mode = #tpu.pipeline_mode<synchronous>, transform_indices = @transform_12, window_bounds = array<i64: 32, 128>}, {pipeline_mode = #tpu.pipeline_mode<synchronous>, transform_indices = @transform_13, window_bounds = array<i64: 1, 128>}, {pipeline_mode = #tpu.pipeline_mode<synchronous>, transform_indices = @transform_14, window_bounds = array<i64: 128, 32>}, {pipeline_mode = #tpu.pipeline_mode<synchronous>, transform_indices = @transform_15, window_bounds = array<i64: 1, 32>}, {pipeline_mode = #tpu.pipeline_mode<synchronous>, transform_indices = @transform_16, window_bounds = array<i64: 1, 32>}, {pipeline_mode = #tpu.pipeline_mode<synchronous>, transform_indices = @transform_17, window_bounds = array<i64: 1, 32>}, {pipeline_mode = #tpu.pipeline_mode<synchronous>, transform_indices = @transform_18, window_bounds = array<i64: 32, 96>}, {pipeline_mode = #tpu.pipeline_mode<synchronous>, transform_indices = @transform_19, window_bounds = array<i64: 1, 96>}, {pipeline_mode = #tpu.pipeline_mode<synchronous>, transform_indices = @transform_20, window_bounds = array<i64: 32, 32>}, {pipeline_mode = #tpu.pipeline_mode<synchronous>, transform_indices = @transform_21, window_bounds = array<i64: 1, 32>}, {pipeline_mode = #tpu.pipeline_mode<synchronous>, transform_indices = @transform_22, window_bounds = array<i64: 1, 32>}, {pipeline_mode = #tpu.pipeline_mode<synchronous>, transform_indices = @transform_23, window_bounds = array<i64: 1, 32>}, {pipeline_mode = #tpu.pipeline_mode<synchronous>, transform_indices = @transform_24, window_bounds = array<i64: 32, 128>}, {pipeline_mode = #tpu.pipeline_mode<synchronous>, transform_indices = @transform_25, window_bounds = array<i64: 1, 128>}, {pipeline_mode = #tpu.pipeline_mode<synchronous>, transform_indices = @transform_26, window_bounds = array<i64: 128, 32>}, {pipeline_mode = #tpu.pipeline_mode<synchronous>, transform_indices = @transform_27, window_bounds = array<i64: 1, 32>}, {pipeline_mode = #tpu.pipeline_mode<synchronous>, transform_indices = @transform_28, window_bounds = array<i64: 1, 32>}, {pipeline_mode = #tpu.pipeline_mode<synchronous>, transform_indices = @transform_29, window_bounds = array<i64: 1, 32>}, {pipeline_mode = #tpu.pipeline_mode<synchronous>, transform_indices = @transform_30, window_bounds = array<i64: 32, 128>}, {pipeline_mode = #tpu.pipeline_mode<synchronous>, transform_indices = @transform_31, window_bounds = array<i64: 1, 128>}, {pipeline_mode = #tpu.pipeline_mode<synchronous>, transform_indices = @transform_32, window_bounds = array<i64: 34, 128>}]} {
    %c0 = arith.constant 0 : index
    %c0_0 = arith.constant 0 : index
    %0 = vector.load %arg1[%c0, %c0_0] : memref<34x48xf32, #tpu.memory_space<vmem>>, vector<34x48xf32>
    %1 = arith.truncf %0 : vector<34x48xf32> to vector<34x48xbf16>
    %c0_1 = arith.constant 0 : index
    %c0_2 = arith.constant 0 : index
    %2 = vector.load %arg4[%c0_1, %c0_2] : memref<48x32xf32, #tpu.memory_space<vmem>>, vector<48x32xf32>
    %3 = arith.truncf %2 : vector<48x32xf32> to vector<48x32xbf16>
    %cst = arith.constant dense<0.000000e+00> : vector<34x32xf32>
    %4 = tpu.matmul %1, %3, %cst {dimension_numbers = #tpu.dot_dimension_numbers<[1], [0], [0], [1], [0, 0, 1, 1], [], []>} : vector<34x48xbf16>, vector<48x32xbf16>, vector<34x32xf32> -> vector<34x32xf32>
    %c0_3 = arith.constant 0 : index
    %c0_4 = arith.constant 0 : index
    %5 = vector.load %arg2[%c0_3, %c0_4] : memref<34x32xf32, #tpu.memory_space<vmem>>, vector<34x32xf32>
    %6 = arith.addf %4, %5 : vector<34x32xf32>
    %c0_5 = arith.constant 0 : index
    %c0_6 = arith.constant 0 : index
    %7 = vector.load %arg3[%c0_5, %c0_6] : memref<34x34xf32, #tpu.memory_space<vmem>>, vector<34x34xf32>
    %c0_7 = arith.constant 0 : index
    %c0_8 = arith.constant 0 : index
    %8 = vector.load %arg5[%c0_7, %c0_8] : memref<1x32xf32, #tpu.memory_space<vmem>>, vector<1x32xf32>
    %c0_9 = arith.constant 0 : index
    %c0_10 = arith.constant 0 : index
    %9 = vector.load %arg6[%c0_9, %c0_10] : memref<1x32xf32, #tpu.memory_space<vmem>>, vector<1x32xf32>
    %cst_11 = arith.constant dense<0.000000e+00> : vector<34xf32>
    %10 = vector.multi_reduction <add>, %6, %cst_11 [1] : vector<34x32xf32> to vector<34xf32>
    %11 = vector.shape_cast %10 : vector<34xf32> to vector<34x1xf32>
    %cst_12 = arith.constant 3.200000e+01 : f32
    %12 = vector.broadcast %cst_12 : f32 to vector<34x1xf32>
    %13 = arith.divf %11, %12 : vector<34x1xf32>
    %14 = vector.broadcast %13 : vector<34x1xf32> to vector<34x32xf32>
    %15 = arith.subf %6, %14 : vector<34x32xf32>
    %16 = arith.mulf %15, %15 : vector<34x32xf32>
    %cst_13 = arith.constant dense<0.000000e+00> : vector<34xf32>
    %17 = vector.multi_reduction <add>, %16, %cst_13 [1] : vector<34x32xf32> to vector<34xf32>
    %18 = vector.shape_cast %17 : vector<34xf32> to vector<34x1xf32>
    %cst_14 = arith.constant 3.200000e+01 : f32
    %19 = vector.broadcast %cst_14 : f32 to vector<34x1xf32>
    %20 = arith.divf %18, %19 : vector<34x1xf32>
    %21 = vector.broadcast %13 : vector<34x1xf32> to vector<34x32xf32>
    %22 = arith.subf %6, %21 : vector<34x32xf32>
    %cst_15 = arith.constant 9.99999996E-13 : f32
    %23 = vector.broadcast %cst_15 : f32 to vector<34x1xf32>
    %24 = arith.addf %20, %23 : vector<34x1xf32>
    %25 = math.rsqrt %24 : vector<34x1xf32>
    %26 = vector.broadcast %25 : vector<34x1xf32> to vector<34x32xf32>
    %27 = arith.mulf %22, %26 : vector<34x32xf32>
    %28 = vector.broadcast %8 : vector<1x32xf32> to vector<34x32xf32>
    %29 = arith.mulf %27, %28 : vector<34x32xf32>
    %30 = vector.broadcast %9 : vector<1x32xf32> to vector<34x32xf32>
    %31 = arith.addf %29, %30 : vector<34x32xf32>
    %32 = arith.truncf %31 : vector<34x32xf32> to vector<34x32xbf16>
    %c0_16 = arith.constant 0 : index
    %c0_17 = arith.constant 0 : index
    %33 = vector.load %arg7[%c0_16, %c0_17] : memref<32x96xf32, #tpu.memory_space<vmem>>, vector<32x96xf32>
    %34 = arith.truncf %33 : vector<32x96xf32> to vector<32x96xbf16>
    %cst_18 = arith.constant dense<0.000000e+00> : vector<34x96xf32>
    %35 = tpu.matmul %32, %34, %cst_18 {dimension_numbers = #tpu.dot_dimension_numbers<[1], [0], [0], [1], [0, 0, 1, 1], [], []>} : vector<34x32xbf16>, vector<32x96xbf16>, vector<34x96xf32> -> vector<34x96xf32>
    %c0_19 = arith.constant 0 : index
    %c0_20 = arith.constant 0 : index
    %36 = vector.load %arg8[%c0_19, %c0_20] : memref<1x96xf32, #tpu.memory_space<vmem>>, vector<1x96xf32>
    %37 = vector.broadcast %36 : vector<1x96xf32> to vector<34x96xf32>
    %38 = arith.addf %35, %37 : vector<34x96xf32>
    %39 = vector.extract_strided_slice %38 {offsets = [0, 0], sizes = [34, 32], strides = [1, 1]} : vector<34x96xf32> to vector<34x32xf32>
    %cst_21 = arith.constant 0.353553385 : f32
    %40 = vector.broadcast %cst_21 : f32 to vector<34x32xf32>
    %41 = arith.mulf %39, %40 : vector<34x32xf32>
    %42 = vector.extract_strided_slice %38 {offsets = [0, 32], sizes = [34, 32], strides = [1, 1]} : vector<34x96xf32> to vector<34x32xf32>
    %43 = vector.extract_strided_slice %38 {offsets = [0, 64], sizes = [34, 32], strides = [1, 1]} : vector<34x96xf32> to vector<34x32xf32>
    %44 = vector.extract_strided_slice %41 {offsets = [0, 0], sizes = [34, 8], strides = [1, 1]} : vector<34x32xf32> to vector<34x8xf32>
    %45 = arith.truncf %44 : vector<34x8xf32> to vector<34x8xbf16>
    %46 = vector.extract_strided_slice %42 {offsets = [0, 0], sizes = [34, 8], strides = [1, 1]} : vector<34x32xf32> to vector<34x8xf32>
    %47 = arith.truncf %46 : vector<34x8xf32> to vector<34x8xbf16>
    %cst_22 = arith.constant dense<0.000000e+00> : vector<34x34xf32>
    %48 = tpu.matmul %45, %47, %cst_22 {dimension_numbers = #tpu.dot_dimension_numbers<[1], [1], [0], [0], [0, 0, 1, 0], [], []>} : vector<34x8xbf16>, vector<34x8xbf16>, vector<34x34xf32> -> vector<34x34xf32>
    %49 = arith.addf %48, %7 : vector<34x34xf32>
    %cst_23 = arith.constant dense<0xFF800000> : vector<34xf32>
    %50 = vector.multi_reduction <maximumf>, %49, %cst_23 [1] : vector<34x34xf32> to vector<34xf32>
    %51 = vector.shape_cast %50 : vector<34xf32> to vector<34x1xf32>
    %52 = vector.broadcast %51 : vector<34x1xf32> to vector<34x34xf32>
    %53 = arith.subf %49, %52 : vector<34x34xf32>
    %54 = math.exp %53 : vector<34x34xf32>
    %cst_24 = arith.constant dense<0.000000e+00> : vector<34xf32>
    %55 = vector.multi_reduction <add>, %54, %cst_24 [1] : vector<34x34xf32> to vector<34xf32>
    %56 = vector.shape_cast %55 : vector<34xf32> to vector<34x1xf32>
    %57 = vector.broadcast %56 : vector<34x1xf32> to vector<34x34xf32>
    %58 = arith.divf %54, %57 : vector<34x34xf32>
    %59 = arith.truncf %58 : vector<34x34xf32> to vector<34x34xbf16>
    %60 = vector.extract_strided_slice %43 {offsets = [0, 0], sizes = [34, 8], strides = [1, 1]} : vector<34x32xf32> to vector<34x8xf32>
    %61 = arith.truncf %60 : vector<34x8xf32> to vector<34x8xbf16>
    %cst_25 = arith.constant dense<0.000000e+00> : vector<34x8xf32>
    %62 = tpu.matmul %59, %61, %cst_25 {dimension_numbers = #tpu.dot_dimension_numbers<[1], [0], [0], [1], [0, 0, 1, 1], [], []>} : vector<34x34xbf16>, vector<34x8xbf16>, vector<34x8xf32> -> vector<34x8xf32>
    %63 = vector.extract_strided_slice %41 {offsets = [0, 8], sizes = [34, 8], strides = [1, 1]} : vector<34x32xf32> to vector<34x8xf32>
    %64 = arith.truncf %63 : vector<34x8xf32> to vector<34x8xbf16>
    %65 = vector.extract_strided_slice %42 {offsets = [0, 8], sizes = [34, 8], strides = [1, 1]} : vector<34x32xf32> to vector<34x8xf32>
    %66 = arith.truncf %65 : vector<34x8xf32> to vector<34x8xbf16>
    %cst_26 = arith.constant dense<0.000000e+00> : vector<34x34xf32>
    %67 = tpu.matmul %64, %66, %cst_26 {dimension_numbers = #tpu.dot_dimension_numbers<[1], [1], [0], [0], [0, 0, 1, 0], [], []>} : vector<34x8xbf16>, vector<34x8xbf16>, vector<34x34xf32> -> vector<34x34xf32>
    %68 = arith.addf %67, %7 : vector<34x34xf32>
    %cst_27 = arith.constant dense<0xFF800000> : vector<34xf32>
    %69 = vector.multi_reduction <maximumf>, %68, %cst_27 [1] : vector<34x34xf32> to vector<34xf32>
    %70 = vector.shape_cast %69 : vector<34xf32> to vector<34x1xf32>
    %71 = vector.broadcast %70 : vector<34x1xf32> to vector<34x34xf32>
    %72 = arith.subf %68, %71 : vector<34x34xf32>
    %73 = math.exp %72 : vector<34x34xf32>
    %cst_28 = arith.constant dense<0.000000e+00> : vector<34xf32>
    %74 = vector.multi_reduction <add>, %73, %cst_28 [1] : vector<34x34xf32> to vector<34xf32>
    %75 = vector.shape_cast %74 : vector<34xf32> to vector<34x1xf32>
    %76 = vector.broadcast %75 : vector<34x1xf32> to vector<34x34xf32>
    %77 = arith.divf %73, %76 : vector<34x34xf32>
    %78 = arith.truncf %77 : vector<34x34xf32> to vector<34x34xbf16>
    %79 = vector.extract_strided_slice %43 {offsets = [0, 8], sizes = [34, 8], strides = [1, 1]} : vector<34x32xf32> to vector<34x8xf32>
    %80 = arith.truncf %79 : vector<34x8xf32> to vector<34x8xbf16>
    %cst_29 = arith.constant dense<0.000000e+00> : vector<34x8xf32>
    %81 = tpu.matmul %78, %80, %cst_29 {dimension_numbers = #tpu.dot_dimension_numbers<[1], [0], [0], [1], [0, 0, 1, 1], [], []>} : vector<34x34xbf16>, vector<34x8xbf16>, vector<34x8xf32> -> vector<34x8xf32>
    %82 = vector.extract_strided_slice %41 {offsets = [0, 16], sizes = [34, 8], strides = [1, 1]} : vector<34x32xf32> to vector<34x8xf32>
    %83 = arith.truncf %82 : vector<34x8xf32> to vector<34x8xbf16>
    %84 = vector.extract_strided_slice %42 {offsets = [0, 16], sizes = [34, 8], strides = [1, 1]} : vector<34x32xf32> to vector<34x8xf32>
    %85 = arith.truncf %84 : vector<34x8xf32> to vector<34x8xbf16>
    %cst_30 = arith.constant dense<0.000000e+00> : vector<34x34xf32>
    %86 = tpu.matmul %83, %85, %cst_30 {dimension_numbers = #tpu.dot_dimension_numbers<[1], [1], [0], [0], [0, 0, 1, 0], [], []>} : vector<34x8xbf16>, vector<34x8xbf16>, vector<34x34xf32> -> vector<34x34xf32>
    %87 = arith.addf %86, %7 : vector<34x34xf32>
    %cst_31 = arith.constant dense<0xFF800000> : vector<34xf32>
    %88 = vector.multi_reduction <maximumf>, %87, %cst_31 [1] : vector<34x34xf32> to vector<34xf32>
    %89 = vector.shape_cast %88 : vector<34xf32> to vector<34x1xf32>
    %90 = vector.broadcast %89 : vector<34x1xf32> to vector<34x34xf32>
    %91 = arith.subf %87, %90 : vector<34x34xf32>
    %92 = math.exp %91 : vector<34x34xf32>
    %cst_32 = arith.constant dense<0.000000e+00> : vector<34xf32>
    %93 = vector.multi_reduction <add>, %92, %cst_32 [1] : vector<34x34xf32> to vector<34xf32>
    %94 = vector.shape_cast %93 : vector<34xf32> to vector<34x1xf32>
    %95 = vector.broadcast %94 : vector<34x1xf32> to vector<34x34xf32>
    %96 = arith.divf %92, %95 : vector<34x34xf32>
    %97 = arith.truncf %96 : vector<34x34xf32> to vector<34x34xbf16>
    %98 = vector.extract_strided_slice %43 {offsets = [0, 16], sizes = [34, 8], strides = [1, 1]} : vector<34x32xf32> to vector<34x8xf32>
    %99 = arith.truncf %98 : vector<34x8xf32> to vector<34x8xbf16>
    %cst_33 = arith.constant dense<0.000000e+00> : vector<34x8xf32>
    %100 = tpu.matmul %97, %99, %cst_33 {dimension_numbers = #tpu.dot_dimension_numbers<[1], [0], [0], [1], [0, 0, 1, 1], [], []>} : vector<34x34xbf16>, vector<34x8xbf16>, vector<34x8xf32> -> vector<34x8xf32>
    %101 = vector.extract_strided_slice %41 {offsets = [0, 24], sizes = [34, 8], strides = [1, 1]} : vector<34x32xf32> to vector<34x8xf32>
    %102 = arith.truncf %101 : vector<34x8xf32> to vector<34x8xbf16>
    %103 = vector.extract_strided_slice %42 {offsets = [0, 24], sizes = [34, 8], strides = [1, 1]} : vector<34x32xf32> to vector<34x8xf32>
    %104 = arith.truncf %103 : vector<34x8xf32> to vector<34x8xbf16>
    %cst_34 = arith.constant dense<0.000000e+00> : vector<34x34xf32>
    %105 = tpu.matmul %102, %104, %cst_34 {dimension_numbers = #tpu.dot_dimension_numbers<[1], [1], [0], [0], [0, 0, 1, 0], [], []>} : vector<34x8xbf16>, vector<34x8xbf16>, vector<34x34xf32> -> vector<34x34xf32>
    %106 = arith.addf %105, %7 : vector<34x34xf32>
    %cst_35 = arith.constant dense<0xFF800000> : vector<34xf32>
    %107 = vector.multi_reduction <maximumf>, %106, %cst_35 [1] : vector<34x34xf32> to vector<34xf32>
    %108 = vector.shape_cast %107 : vector<34xf32> to vector<34x1xf32>
    %109 = vector.broadcast %108 : vector<34x1xf32> to vector<34x34xf32>
    %110 = arith.subf %106, %109 : vector<34x34xf32>
    %111 = math.exp %110 : vector<34x34xf32>
    %cst_36 = arith.constant dense<0.000000e+00> : vector<34xf32>
    %112 = vector.multi_reduction <add>, %111, %cst_36 [1] : vector<34x34xf32> to vector<34xf32>
    %113 = vector.shape_cast %112 : vector<34xf32> to vector<34x1xf32>
    %114 = vector.broadcast %113 : vector<34x1xf32> to vector<34x34xf32>
    %115 = arith.divf %111, %114 : vector<34x34xf32>
    %116 = arith.truncf %115 : vector<34x34xf32> to vector<34x34xbf16>
    %117 = vector.extract_strided_slice %43 {offsets = [0, 24], sizes = [34, 8], strides = [1, 1]} : vector<34x32xf32> to vector<34x8xf32>
    %118 = arith.truncf %117 : vector<34x8xf32> to vector<34x8xbf16>
    %cst_37 = arith.constant dense<0.000000e+00> : vector<34x8xf32>
    %119 = tpu.matmul %116, %118, %cst_37 {dimension_numbers = #tpu.dot_dimension_numbers<[1], [0], [0], [1], [0, 0, 1, 1], [], []>} : vector<34x34xbf16>, vector<34x8xbf16>, vector<34x8xf32> -> vector<34x8xf32>
    %120 = tpu.concatenate %62, %81, %100, %119 in 1 : vector<34x8xf32>, vector<34x8xf32>, vector<34x8xf32>, vector<34x8xf32> -> vector<34x32xf32>
    %121 = arith.truncf %120 : vector<34x32xf32> to vector<34x32xbf16>
    %c0_38 = arith.constant 0 : index
    %c0_39 = arith.constant 0 : index
    %122 = vector.load %arg9[%c0_38, %c0_39] : memref<32x32xf32, #tpu.memory_space<vmem>>, vector<32x32xf32>
    %123 = arith.truncf %122 : vector<32x32xf32> to vector<32x32xbf16>
    %cst_40 = arith.constant dense<0.000000e+00> : vector<34x32xf32>
    %124 = tpu.matmul %121, %123, %cst_40 {dimension_numbers = #tpu.dot_dimension_numbers<[1], [0], [0], [1], [0, 0, 1, 1], [], []>} : vector<34x32xbf16>, vector<32x32xbf16>, vector<34x32xf32> -> vector<34x32xf32>
    %c0_41 = arith.constant 0 : index
    %c0_42 = arith.constant 0 : index
    %125 = vector.load %arg10[%c0_41, %c0_42] : memref<1x32xf32, #tpu.memory_space<vmem>>, vector<1x32xf32>
    %126 = vector.broadcast %125 : vector<1x32xf32> to vector<34x32xf32>
    %127 = arith.addf %124, %126 : vector<34x32xf32>
    %128 = arith.addf %6, %127 : vector<34x32xf32>
    %c0_43 = arith.constant 0 : index
    %c0_44 = arith.constant 0 : index
    %129 = vector.load %arg11[%c0_43, %c0_44] : memref<1x32xf32, #tpu.memory_space<vmem>>, vector<1x32xf32>
    %c0_45 = arith.constant 0 : index
    %c0_46 = arith.constant 0 : index
    %130 = vector.load %arg12[%c0_45, %c0_46] : memref<1x32xf32, #tpu.memory_space<vmem>>, vector<1x32xf32>
    %cst_47 = arith.constant dense<0.000000e+00> : vector<34xf32>
    %131 = vector.multi_reduction <add>, %128, %cst_47 [1] : vector<34x32xf32> to vector<34xf32>
    %132 = vector.shape_cast %131 : vector<34xf32> to vector<34x1xf32>
    %cst_48 = arith.constant 3.200000e+01 : f32
    %133 = vector.broadcast %cst_48 : f32 to vector<34x1xf32>
    %134 = arith.divf %132, %133 : vector<34x1xf32>
    %135 = vector.broadcast %134 : vector<34x1xf32> to vector<34x32xf32>
    %136 = arith.subf %128, %135 : vector<34x32xf32>
    %137 = arith.mulf %136, %136 : vector<34x32xf32>
    %cst_49 = arith.constant dense<0.000000e+00> : vector<34xf32>
    %138 = vector.multi_reduction <add>, %137, %cst_49 [1] : vector<34x32xf32> to vector<34xf32>
    %139 = vector.shape_cast %138 : vector<34xf32> to vector<34x1xf32>
    %cst_50 = arith.constant 3.200000e+01 : f32
    %140 = vector.broadcast %cst_50 : f32 to vector<34x1xf32>
    %141 = arith.divf %139, %140 : vector<34x1xf32>
    %142 = vector.broadcast %134 : vector<34x1xf32> to vector<34x32xf32>
    %143 = arith.subf %128, %142 : vector<34x32xf32>
    %cst_51 = arith.constant 9.99999996E-13 : f32
    %144 = vector.broadcast %cst_51 : f32 to vector<34x1xf32>
    %145 = arith.addf %141, %144 : vector<34x1xf32>
    %146 = math.rsqrt %145 : vector<34x1xf32>
    %147 = vector.broadcast %146 : vector<34x1xf32> to vector<34x32xf32>
    %148 = arith.mulf %143, %147 : vector<34x32xf32>
    %149 = vector.broadcast %129 : vector<1x32xf32> to vector<34x32xf32>
    %150 = arith.mulf %148, %149 : vector<34x32xf32>
    %151 = vector.broadcast %130 : vector<1x32xf32> to vector<34x32xf32>
    %152 = arith.addf %150, %151 : vector<34x32xf32>
    %153 = arith.truncf %152 : vector<34x32xf32> to vector<34x32xbf16>
    %c0_52 = arith.constant 0 : index
    %c0_53 = arith.constant 0 : index
    %154 = vector.load %arg13[%c0_52, %c0_53] : memref<32x128xf32, #tpu.memory_space<vmem>>, vector<32x128xf32>
    %155 = arith.truncf %154 : vector<32x128xf32> to vector<32x128xbf16>
    %cst_54 = arith.constant dense<0.000000e+00> : vector<34x128xf32>
    %156 = tpu.matmul %153, %155, %cst_54 {dimension_numbers = #tpu.dot_dimension_numbers<[1], [0], [0], [1], [0, 0, 1, 1], [], []>} : vector<34x32xbf16>, vector<32x128xbf16>, vector<34x128xf32> -> vector<34x128xf32>
    %c0_55 = arith.constant 0 : index
    %c0_56 = arith.constant 0 : index
    %157 = vector.load %arg14[%c0_55, %c0_56] : memref<1x128xf32, #tpu.memory_space<vmem>>, vector<1x128xf32>
    %158 = vector.broadcast %157 : vector<1x128xf32> to vector<34x128xf32>
    %159 = arith.addf %156, %158 : vector<34x128xf32>
    %160 = arith.mulf %159, %159 : vector<34x128xf32>
    %161 = arith.mulf %159, %160 : vector<34x128xf32>
    %cst_57 = arith.constant 4.471500e-02 : f32
    %162 = vector.broadcast %cst_57 : f32 to vector<34x128xf32>
    %163 = arith.mulf %162, %161 : vector<34x128xf32>
    %164 = arith.addf %159, %163 : vector<34x128xf32>
    %cst_58 = arith.constant 0.797884583 : f32
    %165 = vector.broadcast %cst_58 : f32 to vector<34x128xf32>
    %166 = arith.mulf %165, %164 : vector<34x128xf32>
    %167 = math.tanh %166 : vector<34x128xf32>
    %cst_59 = arith.constant 1.000000e+00 : f32
    %168 = vector.broadcast %cst_59 : f32 to vector<34x128xf32>
    %169 = arith.addf %168, %167 : vector<34x128xf32>
    %cst_60 = arith.constant 5.000000e-01 : f32
    %170 = vector.broadcast %cst_60 : f32 to vector<34x128xf32>
    %171 = arith.mulf %170, %169 : vector<34x128xf32>
    %172 = arith.mulf %159, %171 : vector<34x128xf32>
    %173 = arith.truncf %172 : vector<34x128xf32> to vector<34x128xbf16>
    %c0_61 = arith.constant 0 : index
    %c0_62 = arith.constant 0 : index
    %174 = vector.load %arg15[%c0_61, %c0_62] : memref<128x32xf32, #tpu.memory_space<vmem>>, vector<128x32xf32>
    %175 = arith.truncf %174 : vector<128x32xf32> to vector<128x32xbf16>
    %cst_63 = arith.constant dense<0.000000e+00> : vector<34x32xf32>
    %176 = tpu.matmul %173, %175, %cst_63 {dimension_numbers = #tpu.dot_dimension_numbers<[1], [0], [0], [1], [0, 0, 1, 1], [], []>} : vector<34x128xbf16>, vector<128x32xbf16>, vector<34x32xf32> -> vector<34x32xf32>
    %c0_64 = arith.constant 0 : index
    %c0_65 = arith.constant 0 : index
    %177 = vector.load %arg16[%c0_64, %c0_65] : memref<1x32xf32, #tpu.memory_space<vmem>>, vector<1x32xf32>
    %178 = vector.broadcast %177 : vector<1x32xf32> to vector<34x32xf32>
    %179 = arith.addf %176, %178 : vector<34x32xf32>
    %180 = arith.addf %128, %179 : vector<34x32xf32>
    %c0_66 = arith.constant 0 : index
    %c0_67 = arith.constant 0 : index
    %181 = vector.load %arg17[%c0_66, %c0_67] : memref<1x32xf32, #tpu.memory_space<vmem>>, vector<1x32xf32>
    %c0_68 = arith.constant 0 : index
    %c0_69 = arith.constant 0 : index
    %182 = vector.load %arg18[%c0_68, %c0_69] : memref<1x32xf32, #tpu.memory_space<vmem>>, vector<1x32xf32>
    %cst_70 = arith.constant dense<0.000000e+00> : vector<34xf32>
    %183 = vector.multi_reduction <add>, %180, %cst_70 [1] : vector<34x32xf32> to vector<34xf32>
    %184 = vector.shape_cast %183 : vector<34xf32> to vector<34x1xf32>
    %cst_71 = arith.constant 3.200000e+01 : f32
    %185 = vector.broadcast %cst_71 : f32 to vector<34x1xf32>
    %186 = arith.divf %184, %185 : vector<34x1xf32>
    %187 = vector.broadcast %186 : vector<34x1xf32> to vector<34x32xf32>
    %188 = arith.subf %180, %187 : vector<34x32xf32>
    %189 = arith.mulf %188, %188 : vector<34x32xf32>
    %cst_72 = arith.constant dense<0.000000e+00> : vector<34xf32>
    %190 = vector.multi_reduction <add>, %189, %cst_72 [1] : vector<34x32xf32> to vector<34xf32>
    %191 = vector.shape_cast %190 : vector<34xf32> to vector<34x1xf32>
    %cst_73 = arith.constant 3.200000e+01 : f32
    %192 = vector.broadcast %cst_73 : f32 to vector<34x1xf32>
    %193 = arith.divf %191, %192 : vector<34x1xf32>
    %194 = vector.broadcast %186 : vector<34x1xf32> to vector<34x32xf32>
    %195 = arith.subf %180, %194 : vector<34x32xf32>
    %cst_74 = arith.constant 9.99999996E-13 : f32
    %196 = vector.broadcast %cst_74 : f32 to vector<34x1xf32>
    %197 = arith.addf %193, %196 : vector<34x1xf32>
    %198 = math.rsqrt %197 : vector<34x1xf32>
    %199 = vector.broadcast %198 : vector<34x1xf32> to vector<34x32xf32>
    %200 = arith.mulf %195, %199 : vector<34x32xf32>
    %201 = vector.broadcast %181 : vector<1x32xf32> to vector<34x32xf32>
    %202 = arith.mulf %200, %201 : vector<34x32xf32>
    %203 = vector.broadcast %182 : vector<1x32xf32> to vector<34x32xf32>
    %204 = arith.addf %202, %203 : vector<34x32xf32>
    %205 = arith.truncf %204 : vector<34x32xf32> to vector<34x32xbf16>
    %c0_75 = arith.constant 0 : index
    %c0_76 = arith.constant 0 : index
    %206 = vector.load %arg19[%c0_75, %c0_76] : memref<32x96xf32, #tpu.memory_space<vmem>>, vector<32x96xf32>
    %207 = arith.truncf %206 : vector<32x96xf32> to vector<32x96xbf16>
    %cst_77 = arith.constant dense<0.000000e+00> : vector<34x96xf32>
    %208 = tpu.matmul %205, %207, %cst_77 {dimension_numbers = #tpu.dot_dimension_numbers<[1], [0], [0], [1], [0, 0, 1, 1], [], []>} : vector<34x32xbf16>, vector<32x96xbf16>, vector<34x96xf32> -> vector<34x96xf32>
    %c0_78 = arith.constant 0 : index
    %c0_79 = arith.constant 0 : index
    %209 = vector.load %arg20[%c0_78, %c0_79] : memref<1x96xf32, #tpu.memory_space<vmem>>, vector<1x96xf32>
    %210 = vector.broadcast %209 : vector<1x96xf32> to vector<34x96xf32>
    %211 = arith.addf %208, %210 : vector<34x96xf32>
    %212 = vector.extract_strided_slice %211 {offsets = [0, 0], sizes = [34, 32], strides = [1, 1]} : vector<34x96xf32> to vector<34x32xf32>
    %cst_80 = arith.constant 0.353553385 : f32
    %213 = vector.broadcast %cst_80 : f32 to vector<34x32xf32>
    %214 = arith.mulf %212, %213 : vector<34x32xf32>
    %215 = vector.extract_strided_slice %211 {offsets = [0, 32], sizes = [34, 32], strides = [1, 1]} : vector<34x96xf32> to vector<34x32xf32>
    %216 = vector.extract_strided_slice %211 {offsets = [0, 64], sizes = [34, 32], strides = [1, 1]} : vector<34x96xf32> to vector<34x32xf32>
    %217 = vector.extract_strided_slice %214 {offsets = [0, 0], sizes = [34, 8], strides = [1, 1]} : vector<34x32xf32> to vector<34x8xf32>
    %218 = arith.truncf %217 : vector<34x8xf32> to vector<34x8xbf16>
    %219 = vector.extract_strided_slice %215 {offsets = [0, 0], sizes = [34, 8], strides = [1, 1]} : vector<34x32xf32> to vector<34x8xf32>
    %220 = arith.truncf %219 : vector<34x8xf32> to vector<34x8xbf16>
    %cst_81 = arith.constant dense<0.000000e+00> : vector<34x34xf32>
    %221 = tpu.matmul %218, %220, %cst_81 {dimension_numbers = #tpu.dot_dimension_numbers<[1], [1], [0], [0], [0, 0, 1, 0], [], []>} : vector<34x8xbf16>, vector<34x8xbf16>, vector<34x34xf32> -> vector<34x34xf32>
    %222 = arith.addf %221, %7 : vector<34x34xf32>
    %cst_82 = arith.constant dense<0xFF800000> : vector<34xf32>
    %223 = vector.multi_reduction <maximumf>, %222, %cst_82 [1] : vector<34x34xf32> to vector<34xf32>
    %224 = vector.shape_cast %223 : vector<34xf32> to vector<34x1xf32>
    %225 = vector.broadcast %224 : vector<34x1xf32> to vector<34x34xf32>
    %226 = arith.subf %222, %225 : vector<34x34xf32>
    %227 = math.exp %226 : vector<34x34xf32>
    %cst_83 = arith.constant dense<0.000000e+00> : vector<34xf32>
    %228 = vector.multi_reduction <add>, %227, %cst_83 [1] : vector<34x34xf32> to vector<34xf32>
    %229 = vector.shape_cast %228 : vector<34xf32> to vector<34x1xf32>
    %230 = vector.broadcast %229 : vector<34x1xf32> to vector<34x34xf32>
    %231 = arith.divf %227, %230 : vector<34x34xf32>
    %232 = arith.truncf %231 : vector<34x34xf32> to vector<34x34xbf16>
    %233 = vector.extract_strided_slice %216 {offsets = [0, 0], sizes = [34, 8], strides = [1, 1]} : vector<34x32xf32> to vector<34x8xf32>
    %234 = arith.truncf %233 : vector<34x8xf32> to vector<34x8xbf16>
    %cst_84 = arith.constant dense<0.000000e+00> : vector<34x8xf32>
    %235 = tpu.matmul %232, %234, %cst_84 {dimension_numbers = #tpu.dot_dimension_numbers<[1], [0], [0], [1], [0, 0, 1, 1], [], []>} : vector<34x34xbf16>, vector<34x8xbf16>, vector<34x8xf32> -> vector<34x8xf32>
    %236 = vector.extract_strided_slice %214 {offsets = [0, 8], sizes = [34, 8], strides = [1, 1]} : vector<34x32xf32> to vector<34x8xf32>
    %237 = arith.truncf %236 : vector<34x8xf32> to vector<34x8xbf16>
    %238 = vector.extract_strided_slice %215 {offsets = [0, 8], sizes = [34, 8], strides = [1, 1]} : vector<34x32xf32> to vector<34x8xf32>
    %239 = arith.truncf %238 : vector<34x8xf32> to vector<34x8xbf16>
    %cst_85 = arith.constant dense<0.000000e+00> : vector<34x34xf32>
    %240 = tpu.matmul %237, %239, %cst_85 {dimension_numbers = #tpu.dot_dimension_numbers<[1], [1], [0], [0], [0, 0, 1, 0], [], []>} : vector<34x8xbf16>, vector<34x8xbf16>, vector<34x34xf32> -> vector<34x34xf32>
    %241 = arith.addf %240, %7 : vector<34x34xf32>
    %cst_86 = arith.constant dense<0xFF800000> : vector<34xf32>
    %242 = vector.multi_reduction <maximumf>, %241, %cst_86 [1] : vector<34x34xf32> to vector<34xf32>
    %243 = vector.shape_cast %242 : vector<34xf32> to vector<34x1xf32>
    %244 = vector.broadcast %243 : vector<34x1xf32> to vector<34x34xf32>
    %245 = arith.subf %241, %244 : vector<34x34xf32>
    %246 = math.exp %245 : vector<34x34xf32>
    %cst_87 = arith.constant dense<0.000000e+00> : vector<34xf32>
    %247 = vector.multi_reduction <add>, %246, %cst_87 [1] : vector<34x34xf32> to vector<34xf32>
    %248 = vector.shape_cast %247 : vector<34xf32> to vector<34x1xf32>
    %249 = vector.broadcast %248 : vector<34x1xf32> to vector<34x34xf32>
    %250 = arith.divf %246, %249 : vector<34x34xf32>
    %251 = arith.truncf %250 : vector<34x34xf32> to vector<34x34xbf16>
    %252 = vector.extract_strided_slice %216 {offsets = [0, 8], sizes = [34, 8], strides = [1, 1]} : vector<34x32xf32> to vector<34x8xf32>
    %253 = arith.truncf %252 : vector<34x8xf32> to vector<34x8xbf16>
    %cst_88 = arith.constant dense<0.000000e+00> : vector<34x8xf32>
    %254 = tpu.matmul %251, %253, %cst_88 {dimension_numbers = #tpu.dot_dimension_numbers<[1], [0], [0], [1], [0, 0, 1, 1], [], []>} : vector<34x34xbf16>, vector<34x8xbf16>, vector<34x8xf32> -> vector<34x8xf32>
    %255 = vector.extract_strided_slice %214 {offsets = [0, 16], sizes = [34, 8], strides = [1, 1]} : vector<34x32xf32> to vector<34x8xf32>
    %256 = arith.truncf %255 : vector<34x8xf32> to vector<34x8xbf16>
    %257 = vector.extract_strided_slice %215 {offsets = [0, 16], sizes = [34, 8], strides = [1, 1]} : vector<34x32xf32> to vector<34x8xf32>
    %258 = arith.truncf %257 : vector<34x8xf32> to vector<34x8xbf16>
    %cst_89 = arith.constant dense<0.000000e+00> : vector<34x34xf32>
    %259 = tpu.matmul %256, %258, %cst_89 {dimension_numbers = #tpu.dot_dimension_numbers<[1], [1], [0], [0], [0, 0, 1, 0], [], []>} : vector<34x8xbf16>, vector<34x8xbf16>, vector<34x34xf32> -> vector<34x34xf32>
    %260 = arith.addf %259, %7 : vector<34x34xf32>
    %cst_90 = arith.constant dense<0xFF800000> : vector<34xf32>
    %261 = vector.multi_reduction <maximumf>, %260, %cst_90 [1] : vector<34x34xf32> to vector<34xf32>
    %262 = vector.shape_cast %261 : vector<34xf32> to vector<34x1xf32>
    %263 = vector.broadcast %262 : vector<34x1xf32> to vector<34x34xf32>
    %264 = arith.subf %260, %263 : vector<34x34xf32>
    %265 = math.exp %264 : vector<34x34xf32>
    %cst_91 = arith.constant dense<0.000000e+00> : vector<34xf32>
    %266 = vector.multi_reduction <add>, %265, %cst_91 [1] : vector<34x34xf32> to vector<34xf32>
    %267 = vector.shape_cast %266 : vector<34xf32> to vector<34x1xf32>
    %268 = vector.broadcast %267 : vector<34x1xf32> to vector<34x34xf32>
    %269 = arith.divf %265, %268 : vector<34x34xf32>
    %270 = arith.truncf %269 : vector<34x34xf32> to vector<34x34xbf16>
    %271 = vector.extract_strided_slice %216 {offsets = [0, 16], sizes = [34, 8], strides = [1, 1]} : vector<34x32xf32> to vector<34x8xf32>
    %272 = arith.truncf %271 : vector<34x8xf32> to vector<34x8xbf16>
    %cst_92 = arith.constant dense<0.000000e+00> : vector<34x8xf32>
    %273 = tpu.matmul %270, %272, %cst_92 {dimension_numbers = #tpu.dot_dimension_numbers<[1], [0], [0], [1], [0, 0, 1, 1], [], []>} : vector<34x34xbf16>, vector<34x8xbf16>, vector<34x8xf32> -> vector<34x8xf32>
    %274 = vector.extract_strided_slice %214 {offsets = [0, 24], sizes = [34, 8], strides = [1, 1]} : vector<34x32xf32> to vector<34x8xf32>
    %275 = arith.truncf %274 : vector<34x8xf32> to vector<34x8xbf16>
    %276 = vector.extract_strided_slice %215 {offsets = [0, 24], sizes = [34, 8], strides = [1, 1]} : vector<34x32xf32> to vector<34x8xf32>
    %277 = arith.truncf %276 : vector<34x8xf32> to vector<34x8xbf16>
    %cst_93 = arith.constant dense<0.000000e+00> : vector<34x34xf32>
    %278 = tpu.matmul %275, %277, %cst_93 {dimension_numbers = #tpu.dot_dimension_numbers<[1], [1], [0], [0], [0, 0, 1, 0], [], []>} : vector<34x8xbf16>, vector<34x8xbf16>, vector<34x34xf32> -> vector<34x34xf32>
    %279 = arith.addf %278, %7 : vector<34x34xf32>
    %cst_94 = arith.constant dense<0xFF800000> : vector<34xf32>
    %280 = vector.multi_reduction <maximumf>, %279, %cst_94 [1] : vector<34x34xf32> to vector<34xf32>
    %281 = vector.shape_cast %280 : vector<34xf32> to vector<34x1xf32>
    %282 = vector.broadcast %281 : vector<34x1xf32> to vector<34x34xf32>
    %283 = arith.subf %279, %282 : vector<34x34xf32>
    %284 = math.exp %283 : vector<34x34xf32>
    %cst_95 = arith.constant dense<0.000000e+00> : vector<34xf32>
    %285 = vector.multi_reduction <add>, %284, %cst_95 [1] : vector<34x34xf32> to vector<34xf32>
    %286 = vector.shape_cast %285 : vector<34xf32> to vector<34x1xf32>
    %287 = vector.broadcast %286 : vector<34x1xf32> to vector<34x34xf32>
    %288 = arith.divf %284, %287 : vector<34x34xf32>
    %289 = arith.truncf %288 : vector<34x34xf32> to vector<34x34xbf16>
    %290 = vector.extract_strided_slice %216 {offsets = [0, 24], sizes = [34, 8], strides = [1, 1]} : vector<34x32xf32> to vector<34x8xf32>
    %291 = arith.truncf %290 : vector<34x8xf32> to vector<34x8xbf16>
    %cst_96 = arith.constant dense<0.000000e+00> : vector<34x8xf32>
    %292 = tpu.matmul %289, %291, %cst_96 {dimension_numbers = #tpu.dot_dimension_numbers<[1], [0], [0], [1], [0, 0, 1, 1], [], []>} : vector<34x34xbf16>, vector<34x8xbf16>, vector<34x8xf32> -> vector<34x8xf32>
    %293 = tpu.concatenate %235, %254, %273, %292 in 1 : vector<34x8xf32>, vector<34x8xf32>, vector<34x8xf32>, vector<34x8xf32> -> vector<34x32xf32>
    %294 = arith.truncf %293 : vector<34x32xf32> to vector<34x32xbf16>
    %c0_97 = arith.constant 0 : index
    %c0_98 = arith.constant 0 : index
    %295 = vector.load %arg21[%c0_97, %c0_98] : memref<32x32xf32, #tpu.memory_space<vmem>>, vector<32x32xf32>
    %296 = arith.truncf %295 : vector<32x32xf32> to vector<32x32xbf16>
    %cst_99 = arith.constant dense<0.000000e+00> : vector<34x32xf32>
    %297 = tpu.matmul %294, %296, %cst_99 {dimension_numbers = #tpu.dot_dimension_numbers<[1], [0], [0], [1], [0, 0, 1, 1], [], []>} : vector<34x32xbf16>, vector<32x32xbf16>, vector<34x32xf32> -> vector<34x32xf32>
    %c0_100 = arith.constant 0 : index
    %c0_101 = arith.constant 0 : index
    %298 = vector.load %arg22[%c0_100, %c0_101] : memref<1x32xf32, #tpu.memory_space<vmem>>, vector<1x32xf32>
    %299 = vector.broadcast %298 : vector<1x32xf32> to vector<34x32xf32>
    %300 = arith.addf %297, %299 : vector<34x32xf32>
    %301 = arith.addf %180, %300 : vector<34x32xf32>
    %c0_102 = arith.constant 0 : index
    %c0_103 = arith.constant 0 : index
    %302 = vector.load %arg23[%c0_102, %c0_103] : memref<1x32xf32, #tpu.memory_space<vmem>>, vector<1x32xf32>
    %c0_104 = arith.constant 0 : index
    %c0_105 = arith.constant 0 : index
    %303 = vector.load %arg24[%c0_104, %c0_105] : memref<1x32xf32, #tpu.memory_space<vmem>>, vector<1x32xf32>
    %cst_106 = arith.constant dense<0.000000e+00> : vector<34xf32>
    %304 = vector.multi_reduction <add>, %301, %cst_106 [1] : vector<34x32xf32> to vector<34xf32>
    %305 = vector.shape_cast %304 : vector<34xf32> to vector<34x1xf32>
    %cst_107 = arith.constant 3.200000e+01 : f32
    %306 = vector.broadcast %cst_107 : f32 to vector<34x1xf32>
    %307 = arith.divf %305, %306 : vector<34x1xf32>
    %308 = vector.broadcast %307 : vector<34x1xf32> to vector<34x32xf32>
    %309 = arith.subf %301, %308 : vector<34x32xf32>
    %310 = arith.mulf %309, %309 : vector<34x32xf32>
    %cst_108 = arith.constant dense<0.000000e+00> : vector<34xf32>
    %311 = vector.multi_reduction <add>, %310, %cst_108 [1] : vector<34x32xf32> to vector<34xf32>
    %312 = vector.shape_cast %311 : vector<34xf32> to vector<34x1xf32>
    %cst_109 = arith.constant 3.200000e+01 : f32
    %313 = vector.broadcast %cst_109 : f32 to vector<34x1xf32>
    %314 = arith.divf %312, %313 : vector<34x1xf32>
    %315 = vector.broadcast %307 : vector<34x1xf32> to vector<34x32xf32>
    %316 = arith.subf %301, %315 : vector<34x32xf32>
    %cst_110 = arith.constant 9.99999996E-13 : f32
    %317 = vector.broadcast %cst_110 : f32 to vector<34x1xf32>
    %318 = arith.addf %314, %317 : vector<34x1xf32>
    %319 = math.rsqrt %318 : vector<34x1xf32>
    %320 = vector.broadcast %319 : vector<34x1xf32> to vector<34x32xf32>
    %321 = arith.mulf %316, %320 : vector<34x32xf32>
    %322 = vector.broadcast %302 : vector<1x32xf32> to vector<34x32xf32>
    %323 = arith.mulf %321, %322 : vector<34x32xf32>
    %324 = vector.broadcast %303 : vector<1x32xf32> to vector<34x32xf32>
    %325 = arith.addf %323, %324 : vector<34x32xf32>
    %326 = arith.truncf %325 : vector<34x32xf32> to vector<34x32xbf16>
    %c0_111 = arith.constant 0 : index
    %c0_112 = arith.constant 0 : index
    %327 = vector.load %arg25[%c0_111, %c0_112] : memref<32x128xf32, #tpu.memory_space<vmem>>, vector<32x128xf32>
    %328 = arith.truncf %327 : vector<32x128xf32> to vector<32x128xbf16>
    %cst_113 = arith.constant dense<0.000000e+00> : vector<34x128xf32>
    %329 = tpu.matmul %326, %328, %cst_113 {dimension_numbers = #tpu.dot_dimension_numbers<[1], [0], [0], [1], [0, 0, 1, 1], [], []>} : vector<34x32xbf16>, vector<32x128xbf16>, vector<34x128xf32> -> vector<34x128xf32>
    %c0_114 = arith.constant 0 : index
    %c0_115 = arith.constant 0 : index
    %330 = vector.load %arg26[%c0_114, %c0_115] : memref<1x128xf32, #tpu.memory_space<vmem>>, vector<1x128xf32>
    %331 = vector.broadcast %330 : vector<1x128xf32> to vector<34x128xf32>
    %332 = arith.addf %329, %331 : vector<34x128xf32>
    %333 = arith.mulf %332, %332 : vector<34x128xf32>
    %334 = arith.mulf %332, %333 : vector<34x128xf32>
    %cst_116 = arith.constant 4.471500e-02 : f32
    %335 = vector.broadcast %cst_116 : f32 to vector<34x128xf32>
    %336 = arith.mulf %335, %334 : vector<34x128xf32>
    %337 = arith.addf %332, %336 : vector<34x128xf32>
    %cst_117 = arith.constant 0.797884583 : f32
    %338 = vector.broadcast %cst_117 : f32 to vector<34x128xf32>
    %339 = arith.mulf %338, %337 : vector<34x128xf32>
    %340 = math.tanh %339 : vector<34x128xf32>
    %cst_118 = arith.constant 1.000000e+00 : f32
    %341 = vector.broadcast %cst_118 : f32 to vector<34x128xf32>
    %342 = arith.addf %341, %340 : vector<34x128xf32>
    %cst_119 = arith.constant 5.000000e-01 : f32
    %343 = vector.broadcast %cst_119 : f32 to vector<34x128xf32>
    %344 = arith.mulf %343, %342 : vector<34x128xf32>
    %345 = arith.mulf %332, %344 : vector<34x128xf32>
    %346 = arith.truncf %345 : vector<34x128xf32> to vector<34x128xbf16>
    %c0_120 = arith.constant 0 : index
    %c0_121 = arith.constant 0 : index
    %347 = vector.load %arg27[%c0_120, %c0_121] : memref<128x32xf32, #tpu.memory_space<vmem>>, vector<128x32xf32>
    %348 = arith.truncf %347 : vector<128x32xf32> to vector<128x32xbf16>
    %cst_122 = arith.constant dense<0.000000e+00> : vector<34x32xf32>
    %349 = tpu.matmul %346, %348, %cst_122 {dimension_numbers = #tpu.dot_dimension_numbers<[1], [0], [0], [1], [0, 0, 1, 1], [], []>} : vector<34x128xbf16>, vector<128x32xbf16>, vector<34x32xf32> -> vector<34x32xf32>
    %c0_123 = arith.constant 0 : index
    %c0_124 = arith.constant 0 : index
    %350 = vector.load %arg28[%c0_123, %c0_124] : memref<1x32xf32, #tpu.memory_space<vmem>>, vector<1x32xf32>
    %351 = vector.broadcast %350 : vector<1x32xf32> to vector<34x32xf32>
    %352 = arith.addf %349, %351 : vector<34x32xf32>
    %353 = arith.addf %301, %352 : vector<34x32xf32>
    %c0_125 = arith.constant 0 : index
    %c0_126 = arith.constant 0 : index
    %354 = vector.load %arg29[%c0_125, %c0_126] : memref<1x32xf32, #tpu.memory_space<vmem>>, vector<1x32xf32>
    %c0_127 = arith.constant 0 : index
    %c0_128 = arith.constant 0 : index
    %355 = vector.load %arg30[%c0_127, %c0_128] : memref<1x32xf32, #tpu.memory_space<vmem>>, vector<1x32xf32>
    %cst_129 = arith.constant dense<0.000000e+00> : vector<34xf32>
    %356 = vector.multi_reduction <add>, %353, %cst_129 [1] : vector<34x32xf32> to vector<34xf32>
    %357 = vector.shape_cast %356 : vector<34xf32> to vector<34x1xf32>
    %cst_130 = arith.constant 3.200000e+01 : f32
    %358 = vector.broadcast %cst_130 : f32 to vector<34x1xf32>
    %359 = arith.divf %357, %358 : vector<34x1xf32>
    %360 = vector.broadcast %359 : vector<34x1xf32> to vector<34x32xf32>
    %361 = arith.subf %353, %360 : vector<34x32xf32>
    %362 = arith.mulf %361, %361 : vector<34x32xf32>
    %cst_131 = arith.constant dense<0.000000e+00> : vector<34xf32>
    %363 = vector.multi_reduction <add>, %362, %cst_131 [1] : vector<34x32xf32> to vector<34xf32>
    %364 = vector.shape_cast %363 : vector<34xf32> to vector<34x1xf32>
    %cst_132 = arith.constant 3.200000e+01 : f32
    %365 = vector.broadcast %cst_132 : f32 to vector<34x1xf32>
    %366 = arith.divf %364, %365 : vector<34x1xf32>
    %367 = vector.broadcast %359 : vector<34x1xf32> to vector<34x32xf32>
    %368 = arith.subf %353, %367 : vector<34x32xf32>
    %cst_133 = arith.constant 9.99999996E-13 : f32
    %369 = vector.broadcast %cst_133 : f32 to vector<34x1xf32>
    %370 = arith.addf %366, %369 : vector<34x1xf32>
    %371 = math.rsqrt %370 : vector<34x1xf32>
    %372 = vector.broadcast %371 : vector<34x1xf32> to vector<34x32xf32>
    %373 = arith.mulf %368, %372 : vector<34x32xf32>
    %374 = vector.broadcast %354 : vector<1x32xf32> to vector<34x32xf32>
    %375 = arith.mulf %373, %374 : vector<34x32xf32>
    %376 = vector.broadcast %355 : vector<1x32xf32> to vector<34x32xf32>
    %377 = arith.addf %375, %376 : vector<34x32xf32>
    %378 = arith.truncf %377 : vector<34x32xf32> to vector<34x32xbf16>
    %c0_134 = arith.constant 0 : index
    %c0_135 = arith.constant 0 : index
    %379 = vector.load %arg31[%c0_134, %c0_135] : memref<32x128xf32, #tpu.memory_space<vmem>>, vector<32x128xf32>
    %380 = arith.truncf %379 : vector<32x128xf32> to vector<32x128xbf16>
    %cst_136 = arith.constant dense<0.000000e+00> : vector<34x128xf32>
    %381 = tpu.matmul %378, %380, %cst_136 {dimension_numbers = #tpu.dot_dimension_numbers<[1], [0], [0], [1], [0, 0, 1, 1], [], []>} : vector<34x32xbf16>, vector<32x128xbf16>, vector<34x128xf32> -> vector<34x128xf32>
    %c0_137 = arith.constant 0 : index
    %c0_138 = arith.constant 0 : index
    %382 = vector.load %arg32[%c0_137, %c0_138] : memref<1x128xf32, #tpu.memory_space<vmem>>, vector<1x128xf32>
    %383 = vector.broadcast %382 : vector<1x128xf32> to vector<34x128xf32>
    %384 = arith.addf %381, %383 : vector<34x128xf32>
    %cst_139 = arith.constant dense<0xFF800000> : vector<34xf32>
    %385 = vector.multi_reduction <maximumf>, %384, %cst_139 [1] : vector<34x128xf32> to vector<34xf32>
    %386 = vector.shape_cast %385 : vector<34xf32> to vector<34x1xf32>
    %387 = vector.broadcast %386 : vector<34x1xf32> to vector<34x128xf32>
    %388 = arith.subf %384, %387 : vector<34x128xf32>
    %389 = math.exp %388 : vector<34x128xf32>
    %cst_140 = arith.constant dense<0.000000e+00> : vector<34xf32>
    %390 = vector.multi_reduction <add>, %389, %cst_140 [1] : vector<34x128xf32> to vector<34xf32>
    %391 = vector.shape_cast %390 : vector<34xf32> to vector<34x1xf32>
    %392 = vector.broadcast %391 : vector<34x1xf32> to vector<34x128xf32>
    %393 = arith.divf %389, %392 : vector<34x128xf32>
    %c0_141 = arith.constant 0 : index
    %c0_142 = arith.constant 0 : index
    %394 = vector.load %arg33[%c0_141, %c0_142] : memref<34x128xf32, #tpu.memory_space<vmem>>, vector<34x128xf32>
    tpu.vector_store %arg33[%c0_141, %c0_142], %393 {strides = array<i32>} : memref<34x128xf32, #tpu.memory_space<vmem>>, vector<34x128xf32>,
    return
  }
  func.func @transform_0(%arg0: i32) -> (i32, i32) {
    %c0_i32 = arith.constant 0 : i32
    %c0_i32_0 = arith.constant 0 : i32
    %c0_i32_1 = arith.constant 0 : i32
    return %c0_i32, %c0_i32_0 : i32, i32
  }
  func.func @transform_1(%arg0: i32) -> (i32, i32) {
    %c0_i32 = arith.constant 0 : i32
    %c0_i32_0 = arith.constant 0 : i32
    %c0_i32_1 = arith.constant 0 : i32
    return %c0_i32, %c0_i32_0 : i32, i32
  }
  func.func @transform_2(%arg0: i32) -> (i32, i32) {
    %c0_i32 = arith.constant 0 : i32
    %c0_i32_0 = arith.constant 0 : i32
    %c0_i32_1 = arith.constant 0 : i32
    return %c0_i32, %c0_i32_0 : i32, i32
  }
  func.func @transform_3(%arg0: i32) -> (i32, i32) {
    %c0_i32 = arith.constant 0 : i32
    %c0_i32_0 = arith.constant 0 : i32
    %c0_i32_1 = arith.constant 0 : i32
    return %c0_i32, %c0_i32_0 : i32, i32
  }
  func.func @transform_4(%arg0: i32) -> (i32, i32) {
    %c0_i32 = arith.constant 0 : i32
    %c0_i32_0 = arith.constant 0 : i32
    %c0_i32_1 = arith.constant 0 : i32
    return %c0_i32, %c0_i32_0 : i32, i32
  }
  func.func @transform_5(%arg0: i32) -> (i32, i32) {
    %c0_i32 = arith.constant 0 : i32
    %c0_i32_0 = arith.constant 0 : i32
    %c0_i32_1 = arith.constant 0 : i32
    return %c0_i32, %c0_i32_0 : i32, i32
  }
  func.func @transform_6(%arg0: i32) -> (i32, i32) {
    %c0_i32 = arith.constant 0 : i32
    %c0_i32_0 = arith.constant 0 : i32
    %c0_i32_1 = arith.constant 0 : i32
    return %c0_i32, %c0_i32_0 : i32, i32
  }
  func.func @transform_7(%arg0: i32) -> (i32, i32) {
    %c0_i32 = arith.constant 0 : i32
    %c0_i32_0 = arith.constant 0 : i32
    %c0_i32_1 = arith.constant 0 : i32
    return %c0_i32, %c0_i32_0 : i32, i32
  }
  func.func @transform_8(%arg0: i32) -> (i32, i32) {
    %c0_i32 = arith.constant 0 : i32
    %c0_i32_0 = arith.constant 0 : i32
    %c0_i32_1 = arith.constant 0 : i32
    return %c0_i32, %c0_i32_0 : i32, i32
  }
  func.func @transform_9(%arg0: i32) -> (i32, i32) {
    %c0_i32 = arith.constant 0 : i32
    %c0_i32_0 = arith.constant 0 : i32
    %c0_i32_1 = arith.constant 0 : i32
    return %c0_i32, %c0_i32_0 : i32, i32
  }
  func.func @transform_10(%arg0: i32) -> (i32, i32) {
    %c0_i32 = arith.constant 0 : i32
    %c0_i32_0 = arith.constant 0 : i32
    %c0_i32_1 = arith.constant 0 : i32
    return %c0_i32, %c0_i32_0 : i32, i32
  }
  func.func @transform_11(%arg0: i32) -> (i32, i32) {
    %c0_i32 = arith.constant 0 : i32
    %c0_i32_0 = arith.constant 0 : i32
    %c0_i32_1 = arith.constant 0 : i32
    return %c0_i32, %c0_i32_0 : i32, i32
  }
  func.func @transform_12(%arg0: i32) -> (i32, i32) {
    %c0_i32 = arith.constant 0 : i32
    %c0_i32_0 = arith.constant 0 : i32
    %c0_i32_1 = arith.constant 0 : i32
    return %c0_i32, %c0_i32_0 : i32, i32
  }
  func.func @transform_13(%arg0: i32) -> (i32, i32) {
    %c0_i32 = arith.constant 0 : i32
    %c0_i32_0 = arith.constant 0 : i32
    %c0_i32_1 = arith.constant 0 : i32
    return %c0_i32, %c0_i32_0 : i32, i32
  }
  func.func @transform_14(%arg0: i32) -> (i32, i32) {
    %c0_i32 = arith.constant 0 : i32
    %c0_i32_0 = arith.constant 0 : i32
    %c0_i32_1 = arith.constant 0 : i32
    return %c0_i32, %c0_i32_0 : i32, i32
  }
  func.func @transform_15(%arg0: i32) -> (i32, i32) {
    %c0_i32 = arith.constant 0 : i32
    %c0_i32_0 = arith.constant 0 : i32
    %c0_i32_1 = arith.constant 0 : i32
    return %c0_i32, %c0_i32_0 : i32, i32
  }
  func.func @transform_16(%arg0: i32) -> (i32, i32) {
    %c0_i32 = arith.constant 0 : i32
    %c0_i32_0 = arith.constant 0 : i32
    %c0_i32_1 = arith.constant 0 : i32
    return %c0_i32, %c0_i32_0 : i32, i32
  }
  func.func @transform_17(%arg0: i32) -> (i32, i32) {
    %c0_i32 = arith.constant 0 : i32
    %c0_i32_0 = arith.constant 0 : i32
    %c0_i32_1 = arith.constant 0 : i32
    return %c0_i32, %c0_i32_0 : i32, i32
  }
  func.func @transform_18(%arg0: i32) -> (i32, i32) {
    %c0_i32 = arith.constant 0 : i32
    %c0_i32_0 = arith.constant 0 : i32
    %c0_i32_1 = arith.constant 0 : i32
    return %c0_i32, %c0_i32_0 : i32, i32
  }
  func.func @transform_19(%arg0: i32) -> (i32, i32) {
    %c0_i32 = arith.constant 0 : i32
    %c0_i32_0 = arith.constant 0 : i32
    %c0_i32_1 = arith.constant 0 : i32
    return %c0_i32, %c0_i32_0 : i32, i32
  }
  func.func @transform_20(%arg0: i32) -> (i32, i32) {
    %c0_i32 = arith.constant 0 : i32
    %c0_i32_0 = arith.constant 0 : i32
    %c0_i32_1 = arith.constant 0 : i32
    return %c0_i32, %c0_i32_0 : i32, i32
  }
  func.func @transform_21(%arg0: i32) -> (i32, i32) {
    %c0_i32 = arith.constant 0 : i32
    %c0_i32_0 = arith.constant 0 : i32
    %c0_i32_1 = arith.constant 0 : i32
    return %c0_i32, %c0_i32_0 : i32, i32
  }
  func.func @transform_22(%arg0: i32) -> (i32, i32) {
    %c0_i32 = arith.constant 0 : i32
    %c0_i32_0 = arith.constant 0 : i32
    %c0_i32_1 = arith.constant 0 : i32
    return %c0_i32, %c0_i32_0 : i32, i32
  }
  func.func @transform_23(%arg0: i32) -> (i32, i32) {
    %c0_i32 = arith.constant 0 : i32
    %c0_i32_0 = arith.constant 0 : i32
    %c0_i32_1 = arith.constant 0 : i32
    return %c0_i32, %c0_i32_0 : i32, i32
  }
  func.func @transform_24(%arg0: i32) -> (i32, i32) {
    %c0_i32 = arith.constant 0 : i32
    %c0_i32_0 = arith.constant 0 : i32
    %c0_i32_1 = arith.constant 0 : i32
    return %c0_i32, %c0_i32_0 : i32, i32
  }
  func.func @transform_25(%arg0: i32) -> (i32, i32) {
    %c0_i32 = arith.constant 0 : i32
    %c0_i32_0 = arith.constant 0 : i32
    %c0_i32_1 = arith.constant 0 : i32
    return %c0_i32, %c0_i32_0 : i32, i32
  }
  func.func @transform_26(%arg0: i32) -> (i32, i32) {
    %c0_i32 = arith.constant 0 : i32
    %c0_i32_0 = arith.constant 0 : i32
    %c0_i32_1 = arith.constant 0 : i32
    return %c0_i32, %c0_i32_0 : i32, i32
  }
  func.func @transform_27(%arg0: i32) -> (i32, i32) {
    %c0_i32 = arith.constant 0 : i32
    %c0_i32_0 = arith.constant 0 : i32
    %c0_i32_1 = arith.constant 0 : i32
    return %c0_i32, %c0_i32_0 : i32, i32
  }
  func.func @transform_28(%arg0: i32) -> (i32, i32) {
    %c0_i32 = arith.constant 0 : i32
    %c0_i32_0 = arith.constant 0 : i32
    %c0_i32_1 = arith.constant 0 : i32
    return %c0_i32, %c0_i32_0 : i32, i32
  }
  func.func @transform_29(%arg0: i32) -> (i32, i32) {
    %c0_i32 = arith.constant 0 : i32
    %c0_i32_0 = arith.constant 0 : i32
    %c0_i32_1 = arith.constant 0 : i32
    return %c0_i32, %c0_i32_0 : i32, i32
  }
  func.func @transform_30(%arg0: i32) -> (i32, i32) {
    %c0_i32 = arith.constant 0 : i32
    %c0_i32_0 = arith.constant 0 : i32
    %c0_i32_1 = arith.constant 0 : i32
    return %c0_i32, %c0_i32_0 : i32, i32
  }
  func.func @transform_31(%arg0: i32) -> (i32, i32) {
    %c0_i32 = arith.constant 0 : i32
    %c0_i32_0 = arith.constant 0 : i32
    %c0_i32_1 = arith.constant 0 : i32
    return %c0_i32, %c0_i32_0 : i32, i32
  }
  func.func @transform_32(%arg0: i32) -> (i32, i32) {
    %c0_i32 = arith.constant 0 : i32
    %c0_i32_0 = arith.constant 0 : i32
    %c0_i32_1 = arith.constant 0 : i32
    return %c0_i32, %c0_i32_0 : i32, i32
  }
}

</mosaic_0001>

<llo_original>
// kernel: vit_logits_forward.1
$region0: #{vit_logits_forward.1}
  #allocation0 [shape = 'u32[]', space=smem, size = 0x4, offset = 0x4, fixed_abs, tag = 'smem constant byte address 0x4 - core index']
  #allocation1 [shape = 'u32[72,128]{1,0:T(1,128)}', space=vmem, size = 0x9000, scoped, tag = 'internal scratch']
  %s0 = inlined_call_operand.smem [shape: u32[33], index: -1, kind: input, shape index: {}]
  %s1 = sld [smem:[%s0]]
  %s2 = scalar_lea.smem %s0, 1
  %s3 = sld [smem:[%s2]]
  %s4 = scalar_lea.smem %s0, 2
  %s5 = sld [smem:[%s4]]
  %s6 = scalar_lea.smem %s0, 3
  %s7 = sld [smem:[%s6]]
  %s8 = scalar_lea.smem %s0, 4
  %s9 = sld [smem:[%s8]]
  %s10 = scalar_lea.smem %s0, 5
  %s11 = sld [smem:[%s10]]
  %s12 = scalar_lea.smem %s0, 6
  %s13 = sld [smem:[%s12]]
  %s14 = scalar_lea.smem %s0, 7
  %s15 = sld [smem:[%s14]]
  %s16 = scalar_lea.smem %s0, 8
  %s17 = sld [smem:[%s16]]
  %s18 = scalar_lea.smem %s0, 9
  %s19 = sld [smem:[%s18]]
  %s20 = scalar_lea.smem %s0, 10
  %s21 = sld [smem:[%s20]]
  %s22 = scalar_lea.smem %s0, 11
  %s23 = sld [smem:[%s22]]
  %s24 = scalar_lea.smem %s0, 12
  %s25 = sld [smem:[%s24]]
  %s26 = scalar_lea.smem %s0, 13
  %s27 = sld [smem:[%s26]]
  %s28 = scalar_lea.smem %s0, 14
  %s29 = sld [smem:[%s28]]
  %s30 = scalar_lea.smem %s0, 15
  %s31 = sld [smem:[%s30]]
  %s32 = scalar_lea.smem %s0, 16
  %s33 = sld [smem:[%s32]]
  %s34 = scalar_lea.smem %s0, 17
  %s35 = sld [smem:[%s34]]
  %s36 = scalar_lea.smem %s0, 18
  %s37 = sld [smem:[%s36]]
  %s38 = scalar_lea.smem %s0, 19
  %s39 = sld [smem:[%s38]]
  %s40 = scalar_lea.smem %s0, 20
  %s41 = sld [smem:[%s40]]
  %s42 = scalar_lea.smem %s0, 21
  %s43 = sld [smem:[%s42]]
  %s44 = scalar_lea.smem %s0, 22
  %s45 = sld [smem:[%s44]]
  %s46 = scalar_lea.smem %s0, 23
  %s47 = sld [smem:[%s46]]
  %s48 = scalar_lea.smem %s0, 24
  %s49 = sld [smem:[%s48]]
  %s50 = scalar_lea.smem %s0, 25
  %s51 = sld [smem:[%s50]]
  %s52 = scalar_lea.smem %s0, 26
  %s53 = sld [smem:[%s52]]
  %s54 = scalar_lea.smem %s0, 27
  %s55 = sld [smem:[%s54]]
  %s56 = scalar_lea.smem %s0, 28
  %s57 = sld [smem:[%s56]]
  %s58 = scalar_lea.smem %s0, 29
  %s59 = sld [smem:[%s58]]
  %s60 = scalar_lea.smem %s0, 30
  %s61 = sld [smem:[%s60]]
  %s62 = scalar_lea.smem %s0, 31
  %s63 = sld [smem:[%s62]]
  %s64 = scalar_lea.smem %s0, 32
  %s65 = sld [smem:[%s64]]
  %s66 = sld [smem:[#allocation0]]
  $region138: #{vit_logits_forward.1} parent=0
    _
  %s68 = ssub.s32 1, %s66
  %s69 = scalar_select 0, %s68, %s66
  // Predicated region
  $region2: #{vit_logits_forward.1} parent=0 // pred_check
    _
  $region3: #{vit_logits_forward.1} parent=0 // pred_check_branch
    %71 = sbr.rel (0) target = $region5
  $region4: #{vit_logits_forward.1} parent=0 // pred_region
    _
  $region5: #{vit_logits_forward.1} parent=0 // pred_fallthru
    _
  // Predicated region
  $region6: #{vit_logits_forward.1} parent=0 // pred_check
    _
  $region7: #{vit_logits_forward.1} parent=0 // pred_check_branch
    %73 = sbr.rel (0) target = $region9
  $region8: #{vit_logits_forward.1} parent=0 // pred_region
    _
  $region9: #{vit_logits_forward.1} parent=0 // pred_fallthru
    _
  // Predicated region
  $region10: #{vit_logits_forward.1} parent=0 // pred_check
    _
  $region11: #{vit_logits_forward.1} parent=0 // pred_check_branch
    %75 = sbr.rel (0) target = $region13
  $region12: #{vit_logits_forward.1} parent=0 // pred_region
    _
  $region13: #{vit_logits_forward.1} parent=0 // pred_fallthru
    _
  // Predicated region
  $region14: #{vit_logits_forward.1} parent=0 // pred_check
    _
  $region15: #{vit_logits_forward.1} parent=0 // pred_check_branch
    %77 = sbr.rel (0) target = $region17
  $region16: #{vit_logits_forward.1} parent=0 // pred_region
    _
  $region17: #{vit_logits_forward.1} parent=0 // pred_fallthru
    _
  // Predicated region
  $region18: #{vit_logits_forward.1} parent=0 // pred_check
    _
  $region19: #{vit_logits_forward.1} parent=0 // pred_check_branch
    %79 = sbr.rel (0) target = $region21
  $region20: #{vit_logits_forward.1} parent=0 // pred_region
    _
  $region21: #{vit_logits_forward.1} parent=0 // pred_fallthru
    _
  // Predicated region
  $region22: #{vit_logits_forward.1} parent=0 // pred_check
    _
  $region23: #{vit_logits_forward.1} parent=0 // pred_check_branch
    %81 = sbr.rel (0) target = $region25
  $region24: #{vit_logits_forward.1} parent=0 // pred_region
    _
  $region25: #{vit_logits_forward.1} parent=0 // pred_fallthru
    _
  // Predicated region
  $region26: #{vit_logits_forward.1} parent=0 // pred_check
    _
  $region27: #{vit_logits_forward.1} parent=0 // pred_check_branch
    %83 = sbr.rel (0) target = $region29
  $region28: #{vit_logits_forward.1} parent=0 // pred_region
    _
  $region29: #{vit_logits_forward.1} parent=0 // pred_fallthru
    _
  // Predicated region
  $region30: #{vit_logits_forward.1} parent=0 // pred_check
    _
  $region31: #{vit_logits_forward.1} parent=0 // pred_check_branch
    %85 = sbr.rel (0) target = $region33
  $region32: #{vit_logits_forward.1} parent=0 // pred_region
    _
  $region33: #{vit_logits_forward.1} parent=0 // pred_fallthru
    _
  // Predicated region
  $region34: #{vit_logits_forward.1} parent=0 // pred_check
    _
  $region35: #{vit_logits_forward.1} parent=0 // pred_check_branch
    %87 = sbr.rel (0) target = $region37
  $region36: #{vit_logits_forward.1} parent=0 // pred_region
    _
  $region37: #{vit_logits_forward.1} parent=0 // pred_fallthru
    _
  // Predicated region
  $region38: #{vit_logits_forward.1} parent=0 // pred_check
    _
  $region39: #{vit_logits_forward.1} parent=0 // pred_check_branch
    %89 = sbr.rel (0) target = $region41
  $region40: #{vit_logits_forward.1} parent=0 // pred_region
    _
  $region41: #{vit_logits_forward.1} parent=0 // pred_fallthru
    _
  // Predicated region
  $region42: #{vit_logits_forward.1} parent=0 // pred_check
    _
  $region43: #{vit_logits_forward.1} parent=0 // pred_check_branch
    %91 = sbr.rel (0) target = $region45
  $region44: #{vit_logits_forward.1} parent=0 // pred_region
    _
  $region45: #{vit_logits_forward.1} parent=0 // pred_fallthru
    _
  // Predicated region
  $region46: #{vit_logits_forward.1} parent=0 // pred_check
    _
  $region47: #{vit_logits_forward.1} parent=0 // pred_check_branch
    %93 = sbr.rel (0) target = $region49
  $region48: #{vit_logits_forward.1} parent=0 // pred_region
    _
  $region49: #{vit_logits_forward.1} parent=0 // pred_fallthru
    _
  // Predicated region
  $region50: #{vit_logits_forward.1} parent=0 // pred_check
    _
  $region51: #{vit_logits_forward.1} parent=0 // pred_check_branch
    %95 = sbr.rel (0) target = $region53
  $region52: #{vit_logits_forward.1} parent=0 // pred_region
    _
  $region53: #{vit_logits_forward.1} parent=0 // pred_fallthru
    _
  // Predicated region
  $region54: #{vit_logits_forward.1} parent=0 // pred_check
    _
  $region55: #{vit_logits_forward.1} parent=0 // pred_check_branch
    %97 = sbr.rel (0) target = $region57
  $region56: #{vit_logits_forward.1} parent=0 // pred_region
    _
  $region57: #{vit_logits_forward.1} parent=0 // pred_fallthru
    _
  // Predicated region
  $region58: #{vit_logits_forward.1} parent=0 // pred_check
    _
  $region59: #{vit_logits_forward.1} parent=0 // pred_check_branch
    %99 = sbr.rel (0) target = $region61
  $region60: #{vit_logits_forward.1} parent=0 // pred_region
    _
  $region61: #{vit_logits_forward.1} parent=0 // pred_fallthru
    _
  // Predicated region
  $region62: #{vit_logits_forward.1} parent=0 // pred_check
    _
  $region63: #{vit_logits_forward.1} parent=0 // pred_check_branch
    %101 = sbr.rel (0) target = $region65
  $region64: #{vit_logits_forward.1} parent=0 // pred_region
    _
  $region65: #{vit_logits_forward.1} parent=0 // pred_fallthru
    _
  // Predicated region
  $region66: #{vit_logits_forward.1} parent=0 // pred_check
    _
  $region67: #{vit_logits_forward.1} parent=0 // pred_check_branch
    %103 = sbr.rel (0) target = $region69
  $region68: #{vit_logits_forward.1} parent=0 // pred_region
    _
  $region69: #{vit_logits_forward.1} parent=0 // pred_fallthru
    _
  // Predicated region
  $region70: #{vit_logits_forward.1} parent=0 // pred_check
    _
  $region71: #{vit_logits_forward.1} parent=0 // pred_check_branch
    %105 = sbr.rel (0) target = $region73
  $region72: #{vit_logits_forward.1} parent=0 // pred_region
    _
  $region73: #{vit_logits_forward.1} parent=0 // pred_fallthru
    _
  // Predicated region
  $region74: #{vit_logits_forward.1} parent=0 // pred_check
    _
  $region75: #{vit_logits_forward.1} parent=0 // pred_check_branch
    %107 = sbr.rel (0) target = $region77
  $region76: #{vit_logits_forward.1} parent=0 // pred_region
    _
  $region77: #{vit_logits_forward.1} parent=0 // pred_fallthru
    _
  // Predicated region
  $region78: #{vit_logits_forward.1} parent=0 // pred_check
    _
  $region79: #{vit_logits_forward.1} parent=0 // pred_check_branch
    %109 = sbr.rel (0) target = $region81
  $region80: #{vit_logits_forward.1} parent=0 // pred_region
    _
  $region81: #{vit_logits_forward.1} parent=0 // pred_fallthru
    _
  // Predicated region
  $region82: #{vit_logits_forward.1} parent=0 // pred_check
    _
  $region83: #{vit_logits_forward.1} parent=0 // pred_check_branch
    %111 = sbr.rel (0) target = $region85
  $region84: #{vit_logits_forward.1} parent=0 // pred_region
    _
  $region85: #{vit_logits_forward.1} parent=0 // pred_fallthru
    _
  // Predicated region
  $region86: #{vit_logits_forward.1} parent=0 // pred_check
    _
  $region87: #{vit_logits_forward.1} parent=0 // pred_check_branch
    %113 = sbr.rel (0) target = $region89
  $region88: #{vit_logits_forward.1} parent=0 // pred_region
    _
  $region89: #{vit_logits_forward.1} parent=0 // pred_fallthru
    _
  // Predicated region
  $region90: #{vit_logits_forward.1} parent=0 // pred_check
    _
  $region91: #{vit_logits_forward.1} parent=0 // pred_check_branch
    %115 = sbr.rel (0) target = $region93
  $region92: #{vit_logits_forward.1} parent=0 // pred_region
    _
  $region93: #{vit_logits_forward.1} parent=0 // pred_fallthru
    _
  // Predicated region
  $region94: #{vit_logits_forward.1} parent=0 // pred_check
    _
  $region95: #{vit_logits_forward.1} parent=0 // pred_check_branch
    %117 = sbr.rel (0) target = $region97
  $region96: #{vit_logits_forward.1} parent=0 // pred_region
    _
  $region97: #{vit_logits_forward.1} parent=0 // pred_fallthru
    _
  // Predicated region
  $region98: #{vit_logits_forward.1} parent=0 // pred_check
    _
  $region99: #{vit_logits_forward.1} parent=0 // pred_check_branch
    %119 = sbr.rel (0) target = $region101
  $region100: #{vit_logits_forward.1} parent=0 // pred_region
    _
  $region101: #{vit_logits_forward.1} parent=0 // pred_fallthru
    _
  // Predicated region
  $region102: #{vit_logits_forward.1} parent=0 // pred_check
    _
  $region103: #{vit_logits_forward.1} parent=0 // pred_check_branch
    %121 = sbr.rel (0) target = $region105
  $region104: #{vit_logits_forward.1} parent=0 // pred_region
    _
  $region105: #{vit_logits_forward.1} parent=0 // pred_fallthru
    _
  // Predicated region
  $region106: #{vit_logits_forward.1} parent=0 // pred_check
    _
  $region107: #{vit_logits_forward.1} parent=0 // pred_check_branch
    %123 = sbr.rel (0) target = $region109
  $region108: #{vit_logits_forward.1} parent=0 // pred_region
    _
  $region109: #{vit_logits_forward.1} parent=0 // pred_fallthru
    _
  // Predicated region
  $region110: #{vit_logits_forward.1} parent=0 // pred_check
    _
  $region111: #{vit_logits_forward.1} parent=0 // pred_check_branch
    %125 = sbr.rel (0) target = $region113
  $region112: #{vit_logits_forward.1} parent=0 // pred_region
    _
  $region113: #{vit_logits_forward.1} parent=0 // pred_fallthru
    _
  // Predicated region
  $region114: #{vit_logits_forward.1} parent=0 // pred_check
    _
  $region115: #{vit_logits_forward.1} parent=0 // pred_check_branch
    %127 = sbr.rel (0) target = $region117
  $region116: #{vit_logits_forward.1} parent=0 // pred_region
    _
  $region117: #{vit_logits_forward.1} parent=0 // pred_fallthru
    _
  // Predicated region
  $region118: #{vit_logits_forward.1} parent=0 // pred_check
    _
  $region119: #{vit_logits_forward.1} parent=0 // pred_check_branch
    %129 = sbr.rel (0) target = $region121
  $region120: #{vit_logits_forward.1} parent=0 // pred_region
    _
  $region121: #{vit_logits_forward.1} parent=0 // pred_fallthru
    _
  // Predicated region
  $region122: #{vit_logits_forward.1} parent=0 // pred_check
    _
  $region123: #{vit_logits_forward.1} parent=0 // pred_check_branch
    %131 = sbr.rel (0) target = $region125
  $region124: #{vit_logits_forward.1} parent=0 // pred_region
    _
  $region125: #{vit_logits_forward.1} parent=0 // pred_fallthru
    _
  // Predicated region
  $region126: #{vit_logits_forward.1} parent=0 // pred_check
    _
  $region127: #{vit_logits_forward.1} parent=0 // pred_check_branch
    %133 = sbr.rel (0) target = $region129
  $region128: #{vit_logits_forward.1} parent=0 // pred_region
    _
  $region129: #{vit_logits_forward.1} parent=0 // pred_fallthru
    _
  %v135 = vld [vmem:[%s1] sm:$0xff]
  %v136 = vld [vmem:[%s1 + $0x8] sm:$0xff]
  %v137 = vld [vmem:[%s1 + $0x10] sm:$0xff]
  %v138 = vld [vmem:[%s1 + $0x18] sm:$0xff]
  %v139 = vld [vmem:[%s1 + $0x20] sm:$0x3]
  %v140 = vpack.c.bf16 %v136, %v135
  %v141 = vpack.c.bf16 %v138, %v137
  %v142 = vpack.c.bf16 %v139, %v139
  %v143 = vld [vmem:[%s7] sm:$0xff]
  %v144 = vld [vmem:[%s7 + $0x8] sm:$0xff]
  %v145 = vld [vmem:[%s7 + $0x10] sm:$0xff]
  %v146 = vld [vmem:[%s7 + $0x18] sm:$0xff]
  %v147 = vld [vmem:[%s7 + $0x20] sm:$0xff]
  %v148 = vld [vmem:[%s7 + $0x28] sm:$0xff]
  %v149 = vpack.c.bf16 %v144, %v143
  %v150 = vpack.c.bf16 %v146, %v145
  %v151 = vpack.c.bf16 %v148, %v147
  %v152 = vld [vmem:[%s3] sm:$0xff]
  %v153 = vld [vmem:[%s3 + $0x8] sm:$0xff]
  %v154 = vld [vmem:[%s3 + $0x10] sm:$0xff]
  %v155 = vld [vmem:[%s3 + $0x18] sm:$0xff]
  %v156 = vld [vmem:[%s3 + $0x20] sm:$0x3]
  %vm157 = vcmask 392192
  %v159 = vsel %vm157, %v140, 0
  %v162 = vsel %vm157, %v141, 0
  %v165 = vsel %vm157, %v142, 0
  %167 = vmatpush.bf16.msra.mxu0 0
  %168 = vmatpush.bf16.msra.mxu0 0
  %169 = vmatpush.bf16.msra.mxu0 0
  %170 = vmatpush.bf16.msra.mxu0 0
  %171 = vmatpush.bf16.msra.mxu0 0
  %172 = vmatpush.bf16.msra.mxu0 %v151
  %173 = vmatpush.bf16.msra.mxu0 %v150
  %174 = vmatpush.bf16.msra.mxu0 %v149
  %175 = vmatmul.bf16.gmra.mxu0 %v159
  %v176 = vpop.f32.mrf.mxu0
  %v177 = vadd.f32 %v152, %v176
  %v178 = vpop.f32.mrf.mxu0
  %v179 = vadd.f32 %v153, %v178
  %180 = vmatmul.bf16.gmra.mxu0 %v162
  %v181 = vpop.f32.mrf.mxu0
  %v182 = vadd.f32 %v154, %v181
  %v183 = vpop.f32.mrf.mxu0
  %v184 = vadd.f32 %v155, %v183
  %185 = vmatmul.bf16.gmra.mxu0 %v165
  %v186 = vpop.f32.mrf.mxu0
  %v187 = vadd.f32 %v156, %v186
  %v188 = vpop.f32.mrf.mxu0
  %189 = vdwg.mxu0
  %v190 = vld [vmem:[%s5] sm:$0xff]
  %v191 = vld [vmem:[%s5 + $0x8] sm:$0xff]
  %v192 = vld [vmem:[%s5 + $0x10] sm:$0xff]
  %v193 = vld [vmem:[%s5 + $0x18] sm:$0xff]
  %v194 = vld [vmem:[%s5 + $0x20] sm:$0x3]
  %v195 = vld [vmem:[%s9] sm:$0x1]
  %v196 = vld [vmem:[%s11] sm:$0x1]
  %vm197 = vcmask 261120
  %v198 = vsel %vm197, %v177, 0.0
  %199 = vadd.xlane.f32.xlu0 %v198
  %v200 = vpop.xlane.xlu0 %199
  %v201 = vsel %vm197, %v179, 0.0
  %202 = vadd.xlane.f32.xlu0 %v201
  %v203 = vpop.xlane.xlu0 %202
  %v204 = vsel %vm197, %v182, 0.0
  %205 = vadd.xlane.f32.xlu0 %v204
  %v206 = vpop.xlane.xlu0 %205
  %v207 = vsel %vm197, %v184, 0.0
  %208 = vadd.xlane.f32.xlu0 %v207
  %v209 = vpop.xlane.xlu0 %208
  %vm210 = vcmask 254976
  %v211 = vsel %vm210, %v187, 0.0
  %212 = vadd.xlane.f32.xlu0 %v211
  %v213 = vpop.xlane.xlu0 %212
  %v214 = vrcp.pop 32.0
  %v215 = vmul.f32 32.0, %v214
  %v216 = vsub.f32 1.0, %v215
  %v217 = vmul.f32 %v214, %v216
  %v218 = vadd.f32 %v214, %v217
  %vm219 = vweird.f32 %v214
  %v220 = vsel %vm219, %v214, %v218
  %v221 = vmul.f32 %v200, %v220
  %v222 = vmul.f32 %v203, %v220
  %v223 = vmul.f32 %v206, %v220
  %v224 = vmul.f32 %v209, %v220
  %v225 = vmul.f32 %v213, %v220
  %v226 = vsub.f32 %v177, %v221
  %v227 = vsub.f32 %v179, %v222
  %v228 = vsub.f32 %v182, %v223
  %v229 = vsub.f32 %v184, %v224
  %v230 = vsub.f32 %v187, %v225
  %v231 = vmul.f32 %v226, %v226
  %v232 = vmul.f32 %v227, %v227
  %v233 = vmul.f32 %v228, %v228
  %v234 = vmul.f32 %v229, %v229
  %v235 = vmul.f32 %v230, %v230
  %v236 = vsel %vm197, %v231, 0.0
  %237 = vadd.xlane.f32.xlu0 %v236
  %v238 = vpop.xlane.xlu0 %237
  %v239 = vsel %vm197, %v232, 0.0
  %240 = vadd.xlane.f32.xlu0 %v239
  %v241 = vpop.xlane.xlu0 %240
  %v242 = vsel %vm197, %v233, 0.0
  %243 = vadd.xlane.f32.xlu0 %v242
  %v244 = vpop.xlane.xlu0 %243
  %v245 = vsel %vm197, %v234, 0.0
  %246 = vadd.xlane.f32.xlu0 %v245
  %v247 = vpop.xlane.xlu0 %246
  %v248 = vsel %vm210, %v235, 0.0
  %249 = vadd.xlane.f32.xlu0 %v248
  %v250 = vpop.xlane.xlu0 %249
  %v251 = vmul.f32 %v238, %v220
  %v252 = vmul.f32 %v241, %v220
  %v253 = vmul.f32 %v244, %v220
  %v254 = vmul.f32 %v247, %v220
  %v255 = vmul.f32 %v250, %v220
  %v256 = vadd.f32 %v251, 1e-12
  %v257 = vadd.f32 %v252, 1e-12
  %v258 = vadd.f32 %v253, 1e-12
  %v259 = vadd.f32 %v254, 1e-12
  %v260 = vadd.f32 %v255, 1e-12
  %v261 = vrsqrt.pop %v256
  %v262 = vmul.f32 %v261, %v256
  %v263 = vmul.f32 %v262, %v261
  %v264 = vmul.f32 0.5, %v263
  %v265 = vsub.f32 1.5, %v264
  %v266 = vmul.f32 %v261, %v265
  %vm267 = vweird.f32 %v256
  %vm268 = vweird.f32 %v261
  %vm269 = vmor %vm267, %vm268
  %v270 = vsel %vm269, %v261, %v266
  %v271 = vrsqrt.pop %v257
  %v272 = vmul.f32 %v271, %v257
  %v273 = vmul.f32 %v272, %v271
  %v274 = vmul.f32 0.5, %v273
  %v275 = vsub.f32 1.5, %v274
  %v276 = vmul.f32 %v271, %v275
  %vm277 = vweird.f32 %v257
  %vm278 = vweird.f32 %v271
  %vm279 = vmor %vm277, %vm278
  %v280 = vsel %vm279, %v271, %v276
  %v281 = vrsqrt.pop %v258
  %v282 = vmul.f32 %v281, %v258
  %v283 = vmul.f32 %v282, %v281
  %v284 = vmul.f32 0.5, %v283
  %v285 = vsub.f32 1.5, %v284
  %v286 = vmul.f32 %v281, %v285
  %vm287 = vweird.f32 %v258
  %vm288 = vweird.f32 %v281
  %vm289 = vmor %vm287, %vm288
  %v290 = vsel %vm289, %v281, %v286
  %v291 = vrsqrt.pop %v259
  %v292 = vmul.f32 %v291, %v259
  %v293 = vmul.f32 %v292, %v291
  %v294 = vmul.f32 0.5, %v293
  %v295 = vsub.f32 1.5, %v294
  %v296 = vmul.f32 %v291, %v295
  %vm297 = vweird.f32 %v259
  %vm298 = vweird.f32 %v291
  %vm299 = vmor %vm297, %vm298
  %v300 = vsel %vm299, %v291, %v296
  %v301 = vrsqrt.pop %v260
  %v302 = vmul.f32 %v301, %v260
  %v303 = vmul.f32 %v302, %v301
  %v304 = vmul.f32 0.5, %v303
  %v305 = vsub.f32 1.5, %v304
  %v306 = vmul.f32 %v301, %v305
  %vm307 = vweird.f32 %v260
  %vm308 = vweird.f32 %v301
  %vm309 = vmor %vm307, %vm308
  %v310 = vsel %vm309, %v301, %v306
  %v311 = vmul.f32 %v226, %v270
  %v312 = vmul.f32 %v227, %v280
  %v313 = vmul.f32 %v228, %v290
  %v314 = vmul.f32 %v229, %v300
  %v315 = vmul.f32 %v230, %v310
  %v317 = vperm.slane %v195, 0
  %v319 = vmul.f32 %v311, %v317
  %v320 = vmul.f32 %v312, %v317
  %v321 = vmul.f32 %v313, %v317
  %v322 = vmul.f32 %v314, %v317
  %v323 = vmul.f32 %v315, %v317
  %v325 = vperm.slane %v196, 0
  %v327 = vadd.f32 %v319, %v325
  %v328 = vadd.f32 %v320, %v325
  %v329 = vadd.f32 %v321, %v325
  %v330 = vadd.f32 %v322, %v325
  %v331 = vadd.f32 %v323, %v325
  %v332 = vpack.c.bf16 %v328, %v327
  %v333 = vpack.c.bf16 %v330, %v329
  %v334 = vpack.c.bf16 %v331, %v331
  %v335 = vld [vmem:[%s13] sm:$0xff]
  %v336 = vld [vmem:[%s13 + $0x8] sm:$0xff]
  %v337 = vld [vmem:[%s13 + $0x10] sm:$0xff]
  %v338 = vld [vmem:[%s13 + $0x18] sm:$0xff]
  %v339 = vpack.c.bf16 %v336, %v335
  %v340 = vpack.c.bf16 %v338, %v337
  %v341 = vld [vmem:[%s15] sm:$0x1]
  %v343 = vperm.slane %v341, 0
  %v346 = vsel %vm197, %v332, 0
  %v349 = vsel %vm197, %v333, 0
  %v352 = vsel %vm197, %v334, 0
  %354 = vmatpush.bf16.msra.mxu0 0
  %355 = vmatpush.bf16.msra.mxu0 0
  %356 = vmatpush.bf16.msra.mxu0 0
  %357 = vmatpush.bf16.msra.mxu0 0
  %358 = vmatpush.bf16.msra.mxu0 0
  %359 = vmatpush.bf16.msra.mxu0 0
  %360 = vmatpush.bf16.msra.mxu0 %v340
  %361 = vmatpush.bf16.msra.mxu0 %v339
  %362 = vmatmul.bf16.gmra.mxu0 %v346
  %v363 = vpop.f32.mrf.mxu0
  %v364 = vadd.f32 %v343, %v363
  %v365 = vpop.f32.mrf.mxu0
  %v366 = vadd.f32 %v343, %v365
  %367 = vmatmul.bf16.gmra.mxu0 %v349
  %v368 = vpop.f32.mrf.mxu0
  %v369 = vadd.f32 %v343, %v368
  %v370 = vpop.f32.mrf.mxu0
  %v371 = vadd.f32 %v343, %v370
  %372 = vmatmul.bf16.gmra.mxu0 %v352
  %v373 = vpop.f32.mrf.mxu0
  %v374 = vadd.f32 %v343, %v373
  %v375 = vpop.f32.mrf.mxu0
  %376 = vdwg.mxu0
  %v377 = vmul.f32 %v364, 0.35355338
  %v378 = vmul.f32 %v366, 0.35355338
  %v379 = vmul.f32 %v369, 0.35355338
  %v380 = vmul.f32 %v371, 0.35355338
  %v381 = vmul.f32 %v374, 0.35355338
  %v382 = vpack.c.bf16 %v378, %v377
  %v383 = vpack.c.bf16 %v380, %v379
  %v384 = vpack.c.bf16 %v381, %v381
  %v385 = vpack.c.bf16 %v366, %v364
  %v386 = vpack.c.bf16 %v371, %v369
  %v387 = vpack.c.bf16 %v374, %v374
  %391 = vrot.lane.b32.xlu0 %v385, 96
  %v392 = vpop.permute.xlu0 %391
  %393 = vrot.lane.b32.xlu0 %v386, 96
  %v394 = vpop.permute.xlu0 %393
  %395 = vrot.lane.b32.xlu0 %v387, 96
  %v396 = vpop.permute.xlu0 %395
  %vm397 = vcmask 64512
  %v399 = vsel %vm397, %v382, 0
  %v402 = vsel %vm397, %v383, 0
  %v405 = vsel %vm397, %v384, 0
  %v408 = vsel %vm397, %v392, 0
  %v411 = vsel %vm397, %v394, 0
  %v414 = vsel %vm397, %v396, 0
  %416 = vmatpush.bf16.xpose.msra.mxu0 0
  %417 = vmatpush.bf16.xpose.msra.mxu0 0
  %418 = vmatpush.bf16.xpose.msra.mxu0 0
  %419 = vmatpush.bf16.xpose.msra.mxu0 0
  %420 = vmatpush.bf16.xpose.msra.mxu0 0
  %421 = vmatpush.bf16.xpose.msra.mxu0 %v414
  %422 = vmatpush.bf16.xpose.msra.mxu0 %v411
  %423 = vmatpush.bf16.xpose.msra.mxu0 %v408
  %424 = vmatmul.bf16.gmra.mxu0 %v399
  %v425 = vpop.f32.mrf.mxu0
  %v426 = vadd.f32 %v190, %v425
  %v427 = vpop.f32.mrf.mxu0
  %v428 = vadd.f32 %v191, %v427
  %429 = vmatmul.bf16.gmra.mxu0 %v402
  %v430 = vpop.f32.mrf.mxu0
  %v431 = vadd.f32 %v192, %v430
  %v432 = vpop.f32.mrf.mxu0
  %v433 = vadd.f32 %v193, %v432
  %434 = vmatmul.bf16.gmra.mxu0 %v405
  %v435 = vpop.f32.mrf.mxu0
  %v436 = vadd.f32 %v194, %v435
  %v437 = vpop.f32.mrf.mxu0
  %438 = vdwg.mxu0
  %vm439 = vcmask 277504
  %v440 = vsel %vm439, %v426, -inf
  %441 = vmax.xlane.f32.xlu0 %v440
  %v442 = vpop.xlane.xlu0 %441
  %v443 = vsel %vm439, %v428, -inf
  %444 = vmax.xlane.f32.xlu0 %v443
  %v445 = vpop.xlane.xlu0 %444
  %v446 = vsel %vm439, %v431, -inf
  %447 = vmax.xlane.f32.xlu0 %v446
  %v448 = vpop.xlane.xlu0 %447
  %v449 = vsel %vm439, %v433, -inf
  %450 = vmax.xlane.f32.xlu0 %v449
  %v451 = vpop.xlane.xlu0 %450
  %vm452 = vcmask 271360
  %v453 = vsel %vm452, %v436, -inf
  %454 = vmax.xlane.f32.xlu0 %v453
  %v455 = vpop.xlane.xlu0 %454
  %v456 = vsub.f32 %v426, %v442
  %v457 = vsub.f32 %v428, %v445
  %v458 = vsub.f32 %v431, %v448
  %v459 = vsub.f32 %v433, %v451
  %v460 = vsub.f32 %v436, %v455
  %v461 = vmul.f32 %v456, 1.442695
  %v462 = vpow.pop %v461
  %v463 = vmul.f32 %v457, 1.442695
  %v464 = vpow.pop %v463
  %v465 = vmul.f32 %v458, 1.442695
  %v466 = vpow.pop %v465
  %v467 = vmul.f32 %v459, 1.442695
  %v468 = vpow.pop %v467
  %v469 = vmul.f32 %v460, 1.442695
  %v470 = vpow.pop %v469
  %v471 = vsel %vm439, %v462, 0.0
  %472 = vadd.xlane.f32.xlu0 %v471
  %v473 = vpop.xlane.xlu0 %472
  %v474 = vsel %vm439, %v464, 0.0
  %475 = vadd.xlane.f32.xlu0 %v474
  %v476 = vpop.xlane.xlu0 %475
  %v477 = vsel %vm439, %v466, 0.0
  %478 = vadd.xlane.f32.xlu0 %v477
  %v479 = vpop.xlane.xlu0 %478
  %v480 = vsel %vm439, %v468, 0.0
  %481 = vadd.xlane.f32.xlu0 %v480
  %v482 = vpop.xlane.xlu0 %481
  %v483 = vsel %vm452, %v470, 0.0
  %484 = vadd.xlane.f32.xlu0 %v483
  %v485 = vpop.xlane.xlu0 %484
  %v486 = vrcp.pop %v473
  %v487 = vmul.f32 %v473, %v486
  %v488 = vsub.f32 1.0, %v487
  %v489 = vmul.f32 %v486, %v488
  %v490 = vadd.f32 %v486, %v489
  %vm491 = vweird.f32 %v473
  %vm492 = vweird.f32 %v486
  %vm493 = vmor %vm491, %vm492
  %v494 = vsel %vm493, %v486, %v490
  %v495 = vand.u32 2147483647, %v473
  %vm496 = vcmp.eq.f32.partialorder %v495, 8.507059e+37
  %v497 = vand.u32 %v473, 2147483648
  %v498 = vor.u32 1.1754944e-38, %v497
  %v499 = vsel %vm496, %v498, %v494
  %v500 = vmul.f32 %v462, %v499
  %v501 = vrcp.pop %v476
  %v502 = vmul.f32 %v476, %v501
  %v503 = vsub.f32 1.0, %v502
  %v504 = vmul.f32 %v501, %v503
  %v505 = vadd.f32 %v501, %v504
  %vm506 = vweird.f32 %v476
  %vm507 = vweird.f32 %v501
  %vm508 = vmor %vm506, %vm507
  %v509 = vsel %vm508, %v501, %v505
  %v510 = vand.u32 2147483647, %v476
  %vm511 = vcmp.eq.f32.partialorder %v510, 8.507059e+37
  %v512 = vand.u32 %v476, 2147483648
  %v513 = vor.u32 1.1754944e-38, %v512
  %v514 = vsel %vm511, %v513, %v509
  %v515 = vmul.f32 %v464, %v514
  %v516 = vrcp.pop %v479
  %v517 = vmul.f32 %v479, %v516
  %v518 = vsub.f32 1.0, %v517
  %v519 = vmul.f32 %v516, %v518
  %v520 = vadd.f32 %v516, %v519
  %vm521 = vweird.f32 %v479
  %vm522 = vweird.f32 %v516
  %vm523 = vmor %vm521, %vm522
  %v524 = vsel %vm523, %v516, %v520
  %v525 = vand.u32 2147483647, %v479
  %vm526 = vcmp.eq.f32.partialorder %v525, 8.507059e+37
  %v527 = vand.u32 %v479, 2147483648
  %v528 = vor.u32 1.1754944e-38, %v527
  %v529 = vsel %vm526, %v528, %v524
  %v530 = vmul.f32 %v466, %v529
  %v531 = vrcp.pop %v482
  %v532 = vmul.f32 %v482, %v531
  %v533 = vsub.f32 1.0, %v532
  %v534 = vmul.f32 %v531, %v533
  %v535 = vadd.f32 %v531, %v534
  %vm536 = vweird.f32 %v482
  %vm537 = vweird.f32 %v531
  %vm538 = vmor %vm536, %vm537
  %v539 = vsel %vm538, %v531, %v535
  %v540 = vand.u32 2147483647, %v482
  %vm541 = vcmp.eq.f32.partialorder %v540, 8.507059e+37
  %v542 = vand.u32 %v482, 2147483648
  %v543 = vor.u32 1.1754944e-38, %v542
  %v544 = vsel %vm541, %v543, %v539
  %v545 = vmul.f32 %v468, %v544
  %v546 = vrcp.pop %v485
  %v547 = vmul.f32 %v485, %v546
  %v548 = vsub.f32 1.0, %v547
  %v549 = vmul.f32 %v546, %v548
  %v550 = vadd.f32 %v546, %v549
  %vm551 = vweird.f32 %v485
  %vm552 = vweird.f32 %v546
  %vm553 = vmor %vm551, %vm552
  %v554 = vsel %vm553, %v546, %v550
  %v555 = vand.u32 2147483647, %v485
  %vm556 = vcmp.eq.f32.partialorder %v555, 8.507059e+37
  %v557 = vand.u32 %v485, 2147483648
  %v558 = vor.u32 1.1754944e-38, %v557
  %v559 = vsel %vm556, %v558, %v554
  %v560 = vmul.f32 %v470, %v559
  %v561 = vpack.c.bf16 %v515, %v500
  %v562 = vpack.c.bf16 %v545, %v530
  %v563 = vpack.c.bf16 %v560, %v560
  %564 = vrot.lane.b32.xlu0 %v385, 64
  %v565 = vpop.permute.xlu0 %564
  %566 = vrot.lane.b32.xlu0 %v386, 64
  %v567 = vpop.permute.xlu0 %566
  %568 = vrot.lane.b32.xlu0 %v387, 64
  %v569 = vpop.permute.xlu0 %568
  %v573 = vsel %vm439, %v561, 0
  %v576 = vsel %vm439, %v562, 0
  %v579 = vsel %vm439, %v563, 0
  %vm581 = vcmask 1040384
  %v583 = vsel %vm581, %v569, 0
  %585 = vmatpush.bf16.msra.mxu0 0
  %586 = vmatpush.bf16.msra.mxu0 0
  %587 = vmatpush.bf16.msra.mxu0 0
  %588 = vmatpush.bf16.msra.mxu0 0
  %589 = vmatpush.bf16.msra.mxu0 0
  %590 = vmatpush.bf16.msra.mxu0 %v583
  %591 = vmatpush.bf16.msra.mxu0 %v567
  %592 = vmatpush.bf16.msra.mxu0 %v565
  %593 = vmatmul.bf16.gmra.mxu0 %v573
  %v594 = vpop.f32.mrf.mxu0
  %v595 = vadd.f32 0.0, %v594
  %v596 = vpop.f32.mrf.mxu0
  %v597 = vadd.f32 0.0, %v596
  %598 = vmatmul.bf16.gmra.mxu0 %v576
  %v599 = vpop.f32.mrf.mxu0
  %v600 = vadd.f32 0.0, %v599
  %v601 = vpop.f32.mrf.mxu0
  %v602 = vadd.f32 0.0, %v601
  %603 = vmatmul.bf16.gmra.mxu0 %v579
  %v604 = vpop.f32.mrf.mxu0
  %v605 = vadd.f32 0.0, %v604
  %v606 = vpop.f32.mrf.mxu0
  %607 = vdwg.mxu0
  %611 = vrot.lane.b32.xlu0 %v382, 120
  %v612 = vpop.permute.xlu0 %611
  %613 = vrot.lane.b32.xlu0 %v383, 120
  %v614 = vpop.permute.xlu0 %613
  %615 = vrot.lane.b32.xlu0 %v384, 120
  %v616 = vpop.permute.xlu0 %615
  %617 = vrot.lane.b32.xlu0 %v385, 88
  %v618 = vpop.permute.xlu0 %617
  %619 = vrot.lane.b32.xlu0 %v386, 88
  %v620 = vpop.permute.xlu0 %619
  %621 = vrot.lane.b32.xlu0 %v387, 88
  %v622 = vpop.permute.xlu0 %621
  %v624 = vsel %vm397, %v612, 0
  %v627 = vsel %vm397, %v614, 0
  %v630 = vsel %vm397, %v616, 0
  %v633 = vsel %vm397, %v618, 0
  %v636 = vsel %vm397, %v620, 0
  %v639 = vsel %vm397, %v622, 0
  %641 = vmatpush.bf16.xpose.msra.mxu0 0
  %642 = vmatpush.bf16.xpose.msra.mxu0 0
  %643 = vmatpush.bf16.xpose.msra.mxu0 0
  %644 = vmatpush.bf16.xpose.msra.mxu0 0
  %645 = vmatpush.bf16.xpose.msra.mxu0 0
  %646 = vmatpush.bf16.xpose.msra.mxu0 %v639
  %647 = vmatpush.bf16.xpose.msra.mxu0 %v636
  %648 = vmatpush.bf16.xpose.msra.mxu0 %v633
  %649 = vmatmul.bf16.gmra.mxu0 %v624
  %v650 = vpop.f32.mrf.mxu0
  %v651 = vadd.f32 %v190, %v650
  %v652 = vpop.f32.mrf.mxu0
  %v653 = vadd.f32 %v191, %v652
  %654 = vmatmul.bf16.gmra.mxu0 %v627
  %v655 = vpop.f32.mrf.mxu0
  %v656 = vadd.f32 %v192, %v655
  %v657 = vpop.f32.mrf.mxu0
  %v658 = vadd.f32 %v193, %v657
  %659 = vmatmul.bf16.gmra.mxu0 %v630
  %v660 = vpop.f32.mrf.mxu0
  %v661 = vadd.f32 %v194, %v660
  %v662 = vpop.f32.mrf.mxu0
  %663 = vdwg.mxu0
  %v664 = vsel %vm439, %v651, -inf
  %665 = vmax.xlane.f32.xlu0 %v664
  %v666 = vpop.xlane.xlu0 %665
  %v667 = vsel %vm439, %v653, -inf
  %668 = vmax.xlane.f32.xlu0 %v667
  %v669 = vpop.xlane.xlu0 %668
  %v670 = vsel %vm439, %v656, -inf
  %671 = vmax.xlane.f32.xlu0 %v670
  %v672 = vpop.xlane.xlu0 %671
  %v673 = vsel %vm439, %v658, -inf
  %674 = vmax.xlane.f32.xlu0 %v673
  %v675 = vpop.xlane.xlu0 %674
  %v676 = vsel %vm452, %v661, -inf
  %677 = vmax.xlane.f32.xlu0 %v676
  %v678 = vpop.xlane.xlu0 %677
  %v679 = vsub.f32 %v651, %v666
  %v680 = vsub.f32 %v653, %v669
  %v681 = vsub.f32 %v656, %v672
  %v682 = vsub.f32 %v658, %v675
  %v683 = vsub.f32 %v661, %v678
  %v684 = vmul.f32 %v679, 1.442695
  %v685 = vpow.pop %v684
  %v686 = vmul.f32 %v680, 1.442695
  %v687 = vpow.pop %v686
  %v688 = vmul.f32 %v681, 1.442695
  %v689 = vpow.pop %v688
  %v690 = vmul.f32 %v682, 1.442695
  %v691 = vpow.pop %v690
  %v692 = vmul.f32 %v683, 1.442695
  %v693 = vpow.pop %v692
  %v694 = vsel %vm439, %v685, 0.0
  %695 = vadd.xlane.f32.xlu0 %v694
  %v696 = vpop.xlane.xlu0 %695
  %v697 = vsel %vm439, %v687, 0.0
  %698 = vadd.xlane.f32.xlu0 %v697
  %v699 = vpop.xlane.xlu0 %698
  %v700 = vsel %vm439, %v689, 0.0
  %701 = vadd.xlane.f32.xlu0 %v700
  %v702 = vpop.xlane.xlu0 %701
  %v703 = vsel %vm439, %v691, 0.0
  %704 = vadd.xlane.f32.xlu0 %v703
  %v705 = vpop.xlane.xlu0 %704
  %v706 = vsel %vm452, %v693, 0.0
  %707 = vadd.xlane.f32.xlu0 %v706
  %v708 = vpop.xlane.xlu0 %707
  %v709 = vrcp.pop %v696
  %v710 = vmul.f32 %v696, %v709
  %v711 = vsub.f32 1.0, %v710
  %v712 = vmul.f32 %v709, %v711
  %v713 = vadd.f32 %v709, %v712
  %vm714 = vweird.f32 %v696
  %vm715 = vweird.f32 %v709
  %vm716 = vmor %vm714, %vm715
  %v717 = vsel %vm716, %v709, %v713
  %v718 = vand.u32 2147483647, %v696
  %vm719 = vcmp.eq.f32.partialorder %v718, 8.507059e+37
  %v720 = vand.u32 %v696, 2147483648
  %v721 = vor.u32 1.1754944e-38, %v720
  %v722 = vsel %vm719, %v721, %v717
  %v723 = vmul.f32 %v685, %v722
  %v724 = vrcp.pop %v699
  %v725 = vmul.f32 %v699, %v724
  %v726 = vsub.f32 1.0, %v725
  %v727 = vmul.f32 %v724, %v726
  %v728 = vadd.f32 %v724, %v727
  %vm729 = vweird.f32 %v699
  %vm730 = vweird.f32 %v724
  %vm731 = vmor %vm729, %vm730
  %v732 = vsel %vm731, %v724, %v728
  %v733 = vand.u32 2147483647, %v699
  %vm734 = vcmp.eq.f32.partialorder %v733, 8.507059e+37
  %v735 = vand.u32 %v699, 2147483648
  %v736 = vor.u32 1.1754944e-38, %v735
  %v737 = vsel %vm734, %v736, %v732
  %v738 = vmul.f32 %v687, %v737
  %v739 = vrcp.pop %v702
  %v740 = vmul.f32 %v702, %v739
  %v741 = vsub.f32 1.0, %v740
  %v742 = vmul.f32 %v739, %v741
  %v743 = vadd.f32 %v739, %v742
  %vm744 = vweird.f32 %v702
  %vm745 = vweird.f32 %v739
  %vm746 = vmor %vm744, %vm745
  %v747 = vsel %vm746, %v739, %v743
  %v748 = vand.u32 2147483647, %v702
  %vm749 = vcmp.eq.f32.partialorder %v748, 8.507059e+37
  %v750 = vand.u32 %v702, 2147483648
  %v751 = vor.u32 1.1754944e-38, %v750
  %v752 = vsel %vm749, %v751, %v747
  %v753 = vmul.f32 %v689, %v752
  %v754 = vrcp.pop %v705
  %v755 = vmul.f32 %v705, %v754
  %v756 = vsub.f32 1.0, %v755
  %v757 = vmul.f32 %v754, %v756
  %v758 = vadd.f32 %v754, %v757
  %vm759 = vweird.f32 %v705
  %vm760 = vweird.f32 %v754
  %vm761 = vmor %vm759, %vm760
  %v762 = vsel %vm761, %v754, %v758
  %v763 = vand.u32 2147483647, %v705
  %vm764 = vcmp.eq.f32.partialorder %v763, 8.507059e+37
  %v765 = vand.u32 %v705, 2147483648
  %v766 = vor.u32 1.1754944e-38, %v765
  %v767 = vsel %vm764, %v766, %v762
  %v768 = vmul.f32 %v691, %v767
  %v769 = vrcp.pop %v708
  %v770 = vmul.f32 %v708, %v769
  %v771 = vsub.f32 1.0, %v770
  %v772 = vmul.f32 %v769, %v771
  %v773 = vadd.f32 %v769, %v772
  %vm774 = vweird.f32 %v708
  %vm775 = vweird.f32 %v769
  %vm776 = vmor %vm774, %vm775
  %v777 = vsel %vm776, %v769, %v773
  %v778 = vand.u32 2147483647, %v708
  %vm779 = vcmp.eq.f32.partialorder %v778, 8.507059e+37
  %v780 = vand.u32 %v708, 2147483648
  %v781 = vor.u32 1.1754944e-38, %v780
  %v782 = vsel %vm779, %v781, %v777
  %v783 = vmul.f32 %v693, %v782
  %v784 = vpack.c.bf16 %v738, %v723
  %v785 = vpack.c.bf16 %v768, %v753
  %v786 = vpack.c.bf16 %v783, %v783
  %787 = vrot.lane.b32.xlu0 %v385, 56
  %v788 = vpop.permute.xlu0 %787
  %789 = vrot.lane.b32.xlu0 %v386, 56
  %v790 = vpop.permute.xlu0 %789
  %791 = vrot.lane.b32.xlu0 %v387, 56
  %v792 = vpop.permute.xlu0 %791
  %v796 = vsel %vm439, %v784, 0
  %v799 = vsel %vm439, %v785, 0
  %v802 = vsel %vm439, %v786, 0
  %v805 = vsel %vm581, %v792, 0
  %807 = vmatpush.bf16.msra.mxu0 0
  %808 = vmatpush.bf16.msra.mxu0 0
  %809 = vmatpush.bf16.msra.mxu0 0
  %810 = vmatpush.bf16.msra.mxu0 0
  %811 = vmatpush.bf16.msra.mxu0 0
  %812 = vmatpush.bf16.msra.mxu0 %v805
  %813 = vmatpush.bf16.msra.mxu0 %v790
  %814 = vmatpush.bf16.msra.mxu0 %v788
  %815 = vmatmul.bf16.gmra.mxu0 %v796
  %v816 = vpop.f32.mrf.mxu0
  %v817 = vadd.f32 0.0, %v816
  %v818 = vpop.f32.mrf.mxu0
  %v819 = vadd.f32 0.0, %v818
  %820 = vmatmul.bf16.gmra.mxu0 %v799
  %v821 = vpop.f32.mrf.mxu0
  %v822 = vadd.f32 0.0, %v821
  %v823 = vpop.f32.mrf.mxu0
  %v824 = vadd.f32 0.0, %v823
  %825 = vmatmul.bf16.gmra.mxu0 %v802
  %v826 = vpop.f32.mrf.mxu0
  %v827 = vadd.f32 0.0, %v826
  %v828 = vpop.f32.mrf.mxu0
  %829 = vdwg.mxu0
  %830 = vrot.lane.b32.xlu0 %v382, 112
  %v831 = vpop.permute.xlu0 %830
  %832 = vrot.lane.b32.xlu0 %v383, 112
  %v833 = vpop.permute.xlu0 %832
  %834 = vrot.lane.b32.xlu0 %v384, 112
  %v835 = vpop.permute.xlu0 %834
  %836 = vrot.lane.b32.xlu0 %v385, 80
  %v837 = vpop.permute.xlu0 %836
  %838 = vrot.lane.b32.xlu0 %v386, 80
  %v839 = vpop.permute.xlu0 %838
  %840 = vrot.lane.b32.xlu0 %v387, 80
  %v841 = vpop.permute.xlu0 %840
  %v843 = vsel %vm397, %v831, 0
  %v846 = vsel %vm397, %v833, 0
  %v849 = vsel %vm397, %v835, 0
  %v852 = vsel %vm397, %v837, 0
  %v855 = vsel %vm397, %v839, 0
  %v858 = vsel %vm397, %v841, 0
  %860 = vmatpush.bf16.xpose.msra.mxu0 0
  %861 = vmatpush.bf16.xpose.msra.mxu0 0
  %862 = vmatpush.bf16.xpose.msra.mxu0 0
  %863 = vmatpush.bf16.xpose.msra.mxu0 0
  %864 = vmatpush.bf16.xpose.msra.mxu0 0
  %865 = vmatpush.bf16.xpose.msra.mxu0 %v858
  %866 = vmatpush.bf16.xpose.msra.mxu0 %v855
  %867 = vmatpush.bf16.xpose.msra.mxu0 %v852
  %868 = vmatmul.bf16.gmra.mxu0 %v843
  %v869 = vpop.f32.mrf.mxu0
  %v870 = vadd.f32 %v190, %v869
  %v871 = vpop.f32.mrf.mxu0
  %v872 = vadd.f32 %v191, %v871
  %873 = vmatmul.bf16.gmra.mxu0 %v846
  %v874 = vpop.f32.mrf.mxu0
  %v875 = vadd.f32 %v192, %v874
  %v876 = vpop.f32.mrf.mxu0
  %v877 = vadd.f32 %v193, %v876
  %878 = vmatmul.bf16.gmra.mxu0 %v849
  %v879 = vpop.f32.mrf.mxu0
  %v880 = vadd.f32 %v194, %v879
  %v881 = vpop.f32.mrf.mxu0
  %882 = vdwg.mxu0
  %v883 = vsel %vm439, %v870, -inf
  %884 = vmax.xlane.f32.xlu0 %v883
  %v885 = vpop.xlane.xlu0 %884
  %v886 = vsel %vm439, %v872, -inf
  %887 = vmax.xlane.f32.xlu0 %v886
  %v888 = vpop.xlane.xlu0 %887
  %v889 = vsel %vm439, %v875, -inf
  %890 = vmax.xlane.f32.xlu0 %v889
  %v891 = vpop.xlane.xlu0 %890
  %v892 = vsel %vm439, %v877, -inf
  %893 = vmax.xlane.f32.xlu0 %v892
  %v894 = vpop.xlane.xlu0 %893
  %v895 = vsel %vm452, %v880, -inf
  %896 = vmax.xlane.f32.xlu0 %v895
  %v897 = vpop.xlane.xlu0 %896
  %v898 = vsub.f32 %v870, %v885
  %v899 = vsub.f32 %v872, %v888
  %v900 = vsub.f32 %v875, %v891
  %v901 = vsub.f32 %v877, %v894
  %v902 = vsub.f32 %v880, %v897
  %v903 = vmul.f32 %v898, 1.442695
  %v904 = vpow.pop %v903
  %v905 = vmul.f32 %v899, 1.442695
  %v906 = vpow.pop %v905
  %v907 = vmul.f32 %v900, 1.442695
  %v908 = vpow.pop %v907
  %v909 = vmul.f32 %v901, 1.442695
  %v910 = vpow.pop %v909
  %v911 = vmul.f32 %v902, 1.442695
  %v912 = vpow.pop %v911
  %v913 = vsel %vm439, %v904, 0.0
  %914 = vadd.xlane.f32.xlu0 %v913
  %v915 = vpop.xlane.xlu0 %914
  %v916 = vsel %vm439, %v906, 0.0
  %917 = vadd.xlane.f32.xlu0 %v916
  %v918 = vpop.xlane.xlu0 %917
  %v919 = vsel %vm439, %v908, 0.0
  %920 = vadd.xlane.f32.xlu0 %v919
  %v921 = vpop.xlane.xlu0 %920
  %v922 = vsel %vm439, %v910, 0.0
  %923 = vadd.xlane.f32.xlu0 %v922
  %v924 = vpop.xlane.xlu0 %923
  %v925 = vsel %vm452, %v912, 0.0
  %926 = vadd.xlane.f32.xlu0 %v925
  %v927 = vpop.xlane.xlu0 %926
  %v928 = vrcp.pop %v915
  %v929 = vmul.f32 %v915, %v928
  %v930 = vsub.f32 1.0, %v929
  %v931 = vmul.f32 %v928, %v930
  %v932 = vadd.f32 %v928, %v931
  %vm933 = vweird.f32 %v915
  %vm934 = vweird.f32 %v928
  %vm935 = vmor %vm933, %vm934
  %v936 = vsel %vm935, %v928, %v932
  %v937 = vand.u32 2147483647, %v915
  %vm938 = vcmp.eq.f32.partialorder %v937, 8.507059e+37
  %v939 = vand.u32 %v915, 2147483648
  %v940 = vor.u32 1.1754944e-38, %v939
  %v941 = vsel %vm938, %v940, %v936
  %v942 = vmul.f32 %v904, %v941
  %v943 = vrcp.pop %v918
  %v944 = vmul.f32 %v918, %v943
  %v945 = vsub.f32 1.0, %v944
  %v946 = vmul.f32 %v943, %v945
  %v947 = vadd.f32 %v943, %v946
  %vm948 = vweird.f32 %v918
  %vm949 = vweird.f32 %v943
  %vm950 = vmor %vm948, %vm949
  %v951 = vsel %vm950, %v943, %v947
  %v952 = vand.u32 2147483647, %v918
  %vm953 = vcmp.eq.f32.partialorder %v952, 8.507059e+37
  %v954 = vand.u32 %v918, 2147483648
  %v955 = vor.u32 1.1754944e-38, %v954
  %v956 = vsel %vm953, %v955, %v951
  %v957 = vmul.f32 %v906, %v956
  %v958 = vrcp.pop %v921
  %v959 = vmul.f32 %v921, %v958
  %v960 = vsub.f32 1.0, %v959
  %v961 = vmul.f32 %v958, %v960
  %v962 = vadd.f32 %v958, %v961
  %vm963 = vweird.f32 %v921
  %vm964 = vweird.f32 %v958
  %vm965 = vmor %vm963, %vm964
  %v966 = vsel %vm965, %v958, %v962
  %v967 = vand.u32 2147483647, %v921
  %vm968 = vcmp.eq.f32.partialorder %v967, 8.507059e+37
  %v969 = vand.u32 %v921, 2147483648
  %v970 = vor.u32 1.1754944e-38, %v969
  %v971 = vsel %vm968, %v970, %v966
  %v972 = vmul.f32 %v908, %v971
  %v973 = vrcp.pop %v924
  %v974 = vmul.f32 %v924, %v973
  %v975 = vsub.f32 1.0, %v974
  %v976 = vmul.f32 %v973, %v975
  %v977 = vadd.f32 %v973, %v976
  %vm978 = vweird.f32 %v924
  %vm979 = vweird.f32 %v973
  %vm980 = vmor %vm978, %vm979
  %v981 = vsel %vm980, %v973, %v977
  %v982 = vand.u32 2147483647, %v924
  %vm983 = vcmp.eq.f32.partialorder %v982, 8.507059e+37
  %v984 = vand.u32 %v924, 2147483648
  %v985 = vor.u32 1.1754944e-38, %v984
  %v986 = vsel %vm983, %v985, %v981
  %v987 = vmul.f32 %v910, %v986
  %v988 = vrcp.pop %v927
  %v989 = vmul.f32 %v927, %v988
  %v990 = vsub.f32 1.0, %v989
  %v991 = vmul.f32 %v988, %v990
  %v992 = vadd.f32 %v988, %v991
  %vm993 = vweird.f32 %v927
  %vm994 = vweird.f32 %v988
  %vm995 = vmor %vm993, %vm994
  %v996 = vsel %vm995, %v988, %v992
  %v997 = vand.u32 2147483647, %v927
  %vm998 = vcmp.eq.f32.partialorder %v997, 8.507059e+37
  %v999 = vand.u32 %v927, 2147483648
  %v1000 = vor.u32 1.1754944e-38, %v999
  %v1001 = vsel %vm998, %v1000, %v996
  %v1002 = vmul.f32 %v912, %v1001
  %v1003 = vpack.c.bf16 %v957, %v942
  %v1004 = vpack.c.bf16 %v987, %v972
  %v1005 = vpack.c.bf16 %v1002, %v1002
  %1006 = vrot.lane.b32.xlu0 %v385, 48
  %v1007 = vpop.permute.xlu0 %1006
  %1008 = vrot.lane.b32.xlu0 %v386, 48
  %v1009 = vpop.permute.xlu0 %1008
  %1010 = vrot.lane.b32.xlu0 %v387, 48
  %v1011 = vpop.permute.xlu0 %1010
  %v1015 = vsel %vm439, %v1003, 0
  %v1018 = vsel %vm439, %v1004, 0
  %v1021 = vsel %vm439, %v1005, 0
  %v1024 = vsel %vm581, %v1011, 0
  %1026 = vmatpush.bf16.msra.mxu0 0
  %1027 = vmatpush.bf16.msra.mxu0 0
  %1028 = vmatpush.bf16.msra.mxu0 0
  %1029 = vmatpush.bf16.msra.mxu0 0
  %1030 = vmatpush.bf16.msra.mxu0 0
  %1031 = vmatpush.bf16.msra.mxu0 %v1024
  %1032 = vmatpush.bf16.msra.mxu0 %v1009
  %1033 = vmatpush.bf16.msra.mxu0 %v1007
  %1034 = vmatmul.bf16.gmra.mxu0 %v1015
  %v1035 = vpop.f32.mrf.mxu0
  %v1036 = vadd.f32 0.0, %v1035
  %v1037 = vpop.f32.mrf.mxu0
  %v1038 = vadd.f32 0.0, %v1037
  %1039 = vmatmul.bf16.gmra.mxu0 %v1018
  %v1040 = vpop.f32.mrf.mxu0
  %v1041 = vadd.f32 0.0, %v1040
  %v1042 = vpop.f32.mrf.mxu0
  %v1043 = vadd.f32 0.0, %v1042
  %1044 = vmatmul.bf16.gmra.mxu0 %v1021
  %v1045 = vpop.f32.mrf.mxu0
  %v1046 = vadd.f32 0.0, %v1045
  %v1047 = vpop.f32.mrf.mxu0
  %1048 = vdwg.mxu0
  %1049 = vrot.lane.b32.xlu0 %v382, 104
  %v1050 = vpop.permute.xlu0 %1049
  %1051 = vrot.lane.b32.xlu0 %v383, 104
  %v1052 = vpop.permute.xlu0 %1051
  %1053 = vrot.lane.b32.xlu0 %v384, 104
  %v1054 = vpop.permute.xlu0 %1053
  %1055 = vrot.lane.b32.xlu0 %v385, 72
  %v1056 = vpop.permute.xlu0 %1055
  %1057 = vrot.lane.b32.xlu0 %v386, 72
  %v1058 = vpop.permute.xlu0 %1057
  %1059 = vrot.lane.b32.xlu0 %v387, 72
  %v1060 = vpop.permute.xlu0 %1059
  %v1062 = vsel %vm397, %v1050, 0
  %v1065 = vsel %vm397, %v1052, 0
  %v1068 = vsel %vm397, %v1054, 0
  %v1071 = vsel %vm397, %v1056, 0
  %v1074 = vsel %vm397, %v1058, 0
  %v1077 = vsel %vm397, %v1060, 0
  %1079 = vmatpush.bf16.xpose.msra.mxu0 0
  %1080 = vmatpush.bf16.xpose.msra.mxu0 0
  %1081 = vmatpush.bf16.xpose.msra.mxu0 0
  %1082 = vmatpush.bf16.xpose.msra.mxu0 0
  %1083 = vmatpush.bf16.xpose.msra.mxu0 0
  %1084 = vmatpush.bf16.xpose.msra.mxu0 %v1077
  %1085 = vmatpush.bf16.xpose.msra.mxu0 %v1074
  %1086 = vmatpush.bf16.xpose.msra.mxu0 %v1071
  %1087 = vmatmul.bf16.gmra.mxu0 %v1062
  %v1088 = vpop.f32.mrf.mxu0
  %v1089 = vadd.f32 %v190, %v1088
  %v1090 = vpop.f32.mrf.mxu0
  %v1091 = vadd.f32 %v191, %v1090
  %1092 = vmatmul.bf16.gmra.mxu0 %v1065
  %v1093 = vpop.f32.mrf.mxu0
  %v1094 = vadd.f32 %v192, %v1093
  %v1095 = vpop.f32.mrf.mxu0
  %v1096 = vadd.f32 %v193, %v1095
  %1097 = vmatmul.bf16.gmra.mxu0 %v1068
  %v1098 = vpop.f32.mrf.mxu0
  %v1099 = vadd.f32 %v194, %v1098
  %v1100 = vpop.f32.mrf.mxu0
  %1101 = vdwg.mxu0
  %v1102 = vsel %vm439, %v1089, -inf
  %1103 = vmax.xlane.f32.xlu0 %v1102
  %v1104 = vpop.xlane.xlu0 %1103
  %v1105 = vsel %vm439, %v1091, -inf
  %1106 = vmax.xlane.f32.xlu0 %v1105
  %v1107 = vpop.xlane.xlu0 %1106
  %v1108 = vsel %vm439, %v1094, -inf
  %1109 = vmax.xlane.f32.xlu0 %v1108
  %v1110 = vpop.xlane.xlu0 %1109
  %v1111 = vsel %vm439, %v1096, -inf
  %1112 = vmax.xlane.f32.xlu0 %v1111
  %v1113 = vpop.xlane.xlu0 %1112
  %v1114 = vsel %vm452, %v1099, -inf
  %1115 = vmax.xlane.f32.xlu0 %v1114
  %v1116 = vpop.xlane.xlu0 %1115
  %v1117 = vsub.f32 %v1089, %v1104
  %v1118 = vsub.f32 %v1091, %v1107
  %v1119 = vsub.f32 %v1094, %v1110
  %v1120 = vsub.f32 %v1096, %v1113
  %v1121 = vsub.f32 %v1099, %v1116
  %v1122 = vmul.f32 %v1117, 1.442695
  %v1123 = vpow.pop %v1122
  %v1124 = vmul.f32 %v1118, 1.442695
  %v1125 = vpow.pop %v1124
  %v1126 = vmul.f32 %v1119, 1.442695
  %v1127 = vpow.pop %v1126
  %v1128 = vmul.f32 %v1120, 1.442695
  %v1129 = vpow.pop %v1128
  %v1130 = vmul.f32 %v1121, 1.442695
  %v1131 = vpow.pop %v1130
  %v1132 = vsel %vm439, %v1123, 0.0
  %1133 = vadd.xlane.f32.xlu0 %v1132
  %v1134 = vpop.xlane.xlu0 %1133
  %v1135 = vsel %vm439, %v1125, 0.0
  %1136 = vadd.xlane.f32.xlu0 %v1135
  %v1137 = vpop.xlane.xlu0 %1136
  %v1138 = vsel %vm439, %v1127, 0.0
  %1139 = vadd.xlane.f32.xlu0 %v1138
  %v1140 = vpop.xlane.xlu0 %1139
  %v1141 = vsel %vm439, %v1129, 0.0
  %1142 = vadd.xlane.f32.xlu0 %v1141
  %v1143 = vpop.xlane.xlu0 %1142
  %v1144 = vsel %vm452, %v1131, 0.0
  %1145 = vadd.xlane.f32.xlu0 %v1144
  %v1146 = vpop.xlane.xlu0 %1145
  %v1147 = vrcp.pop %v1134
  %v1148 = vmul.f32 %v1134, %v1147
  %v1149 = vsub.f32 1.0, %v1148
  %v1150 = vmul.f32 %v1147, %v1149
  %v1151 = vadd.f32 %v1147, %v1150
  %vm1152 = vweird.f32 %v1134
  %vm1153 = vweird.f32 %v1147
  %vm1154 = vmor %vm1152, %vm1153
  %v1155 = vsel %vm1154, %v1147, %v1151
  %v1156 = vand.u32 2147483647, %v1134
  %vm1157 = vcmp.eq.f32.partialorder %v1156, 8.507059e+37
  %v1158 = vand.u32 %v1134, 2147483648
  %v1159 = vor.u32 1.1754944e-38, %v1158
  %v1160 = vsel %vm1157, %v1159, %v1155
  %v1161 = vmul.f32 %v1123, %v1160
  %v1162 = vrcp.pop %v1137
  %v1163 = vmul.f32 %v1137, %v1162
  %v1164 = vsub.f32 1.0, %v1163
  %v1165 = vmul.f32 %v1162, %v1164
  %v1166 = vadd.f32 %v1162, %v1165
  %vm1167 = vweird.f32 %v1137
  %vm1168 = vweird.f32 %v1162
  %vm1169 = vmor %vm1167, %vm1168
  %v1170 = vsel %vm1169, %v1162, %v1166
  %v1171 = vand.u32 2147483647, %v1137
  %vm1172 = vcmp.eq.f32.partialorder %v1171, 8.507059e+37
  %v1173 = vand.u32 %v1137, 2147483648
  %v1174 = vor.u32 1.1754944e-38, %v1173
  %v1175 = vsel %vm1172, %v1174, %v1170
  %v1176 = vmul.f32 %v1125, %v1175
  %v1177 = vrcp.pop %v1140
  %v1178 = vmul.f32 %v1140, %v1177
  %v1179 = vsub.f32 1.0, %v1178
  %v1180 = vmul.f32 %v1177, %v1179
  %v1181 = vadd.f32 %v1177, %v1180
  %vm1182 = vweird.f32 %v1140
  %vm1183 = vweird.f32 %v1177
  %vm1184 = vmor %vm1182, %vm1183
  %v1185 = vsel %vm1184, %v1177, %v1181
  %v1186 = vand.u32 2147483647, %v1140
  %vm1187 = vcmp.eq.f32.partialorder %v1186, 8.507059e+37
  %v1188 = vand.u32 %v1140, 2147483648
  %v1189 = vor.u32 1.1754944e-38, %v1188
  %v1190 = vsel %vm1187, %v1189, %v1185
  %v1191 = vmul.f32 %v1127, %v1190
  %v1192 = vrcp.pop %v1143
  %v1193 = vmul.f32 %v1143, %v1192
  %v1194 = vsub.f32 1.0, %v1193
  %v1195 = vmul.f32 %v1192, %v1194
  %v1196 = vadd.f32 %v1192, %v1195
  %vm1197 = vweird.f32 %v1143
  %vm1198 = vweird.f32 %v1192
  %vm1199 = vmor %vm1197, %vm1198
  %v1200 = vsel %vm1199, %v1192, %v1196
  %v1201 = vand.u32 2147483647, %v1143
  %vm1202 = vcmp.eq.f32.partialorder %v1201, 8.507059e+37
  %v1203 = vand.u32 %v1143, 2147483648
  %v1204 = vor.u32 1.1754944e-38, %v1203
  %v1205 = vsel %vm1202, %v1204, %v1200
  %v1206 = vmul.f32 %v1129, %v1205
  %v1207 = vrcp.pop %v1146
  %v1208 = vmul.f32 %v1146, %v1207
  %v1209 = vsub.f32 1.0, %v1208
  %v1210 = vmul.f32 %v1207, %v1209
  %v1211 = vadd.f32 %v1207, %v1210
  %vm1212 = vweird.f32 %v1146
  %vm1213 = vweird.f32 %v1207
  %vm1214 = vmor %vm1212, %vm1213
  %v1215 = vsel %vm1214, %v1207, %v1211
  %v1216 = vand.u32 2147483647, %v1146
  %vm1217 = vcmp.eq.f32.partialorder %v1216, 8.507059e+37
  %v1218 = vand.u32 %v1146, 2147483648
  %v1219 = vor.u32 1.1754944e-38, %v1218
  %v1220 = vsel %vm1217, %v1219, %v1215
  %v1221 = vmul.f32 %v1131, %v1220
  %v1222 = vpack.c.bf16 %v1176, %v1161
  %v1223 = vpack.c.bf16 %v1206, %v1191
  %v1224 = vpack.c.bf16 %v1221, %v1221
  %1225 = vrot.lane.b32.xlu0 %v385, 40
  %v1226 = vpop.permute.xlu0 %1225
  %1227 = vrot.lane.b32.xlu0 %v386, 40
  %v1228 = vpop.permute.xlu0 %1227
  %1229 = vrot.lane.b32.xlu0 %v387, 40
  %v1230 = vpop.permute.xlu0 %1229
  %v1234 = vsel %vm439, %v1222, 0
  %v1237 = vsel %vm439, %v1223, 0
  %v1240 = vsel %vm439, %v1224, 0
  %v1243 = vsel %vm581, %v1230, 0
  %1245 = vmatpush.bf16.msra.mxu0 0
  %1246 = vmatpush.bf16.msra.mxu0 0
  %1247 = vmatpush.bf16.msra.mxu0 0
  %1248 = vmatpush.bf16.msra.mxu0 0
  %1249 = vmatpush.bf16.msra.mxu0 0
  %1250 = vmatpush.bf16.msra.mxu0 %v1243
  %1251 = vmatpush.bf16.msra.mxu0 %v1228
  %1252 = vmatpush.bf16.msra.mxu0 %v1226
  %1253 = vmatmul.bf16.gmra.mxu0 %v1234
  %v1254 = vpop.f32.mrf.mxu0
  %v1255 = vadd.f32 0.0, %v1254
  %v1256 = vpop.f32.mrf.mxu0
  %v1257 = vadd.f32 0.0, %v1256
  %1258 = vmatmul.bf16.gmra.mxu0 %v1237
  %v1259 = vpop.f32.mrf.mxu0
  %v1260 = vadd.f32 0.0, %v1259
  %v1261 = vpop.f32.mrf.mxu0
  %v1262 = vadd.f32 0.0, %v1261
  %1263 = vmatmul.bf16.gmra.mxu0 %v1240
  %v1264 = vpop.f32.mrf.mxu0
  %v1265 = vadd.f32 0.0, %v1264
  %v1266 = vpop.f32.mrf.mxu0
  %1267 = vdwg.mxu0
  %1273 = vrot.lane.b32.xlu0 %v817, 8
  %v1274 = vpop.permute.xlu0 %1273
  %1275 = vrot.lane.b32.xlu0 %v819, 8
  %v1276 = vpop.permute.xlu0 %1275
  %1277 = vrot.lane.b32.xlu0 %v822, 8
  %v1278 = vpop.permute.xlu0 %1277
  %1279 = vrot.lane.b32.xlu0 %v824, 8
  %v1280 = vpop.permute.xlu0 %1279
  %1281 = vrot.lane.b32.xlu0 %v827, 8
  %v1282 = vpop.permute.xlu0 %1281
  %1293 = vrot.lane.b32.xlu0 %v1036, 16
  %v1294 = vpop.permute.xlu0 %1293
  %1295 = vrot.lane.b32.xlu0 %v1038, 16
  %v1296 = vpop.permute.xlu0 %1295
  %1297 = vrot.lane.b32.xlu0 %v1041, 16
  %v1298 = vpop.permute.xlu0 %1297
  %1299 = vrot.lane.b32.xlu0 %v1043, 16
  %v1300 = vpop.permute.xlu0 %1299
  %1301 = vrot.lane.b32.xlu0 %v1046, 16
  %v1302 = vpop.permute.xlu0 %1301
  %1313 = vrot.lane.b32.xlu0 %v1255, 24
  %v1314 = vpop.permute.xlu0 %1313
  %1315 = vrot.lane.b32.xlu0 %v1257, 24
  %v1316 = vpop.permute.xlu0 %1315
  %1317 = vrot.lane.b32.xlu0 %v1260, 24
  %v1318 = vpop.permute.xlu0 %1317
  %1319 = vrot.lane.b32.xlu0 %v1262, 24
  %v1320 = vpop.permute.xlu0 %1319
  %1321 = vrot.lane.b32.xlu0 %v1265, 24
  %v1322 = vpop.permute.xlu0 %1321
  %v1328 = vsel %vm397, %v595, %v1274
  %v1329 = vsel %vm397, %v597, %v1276
  %v1330 = vsel %vm397, %v600, %v1278
  %v1331 = vsel %vm397, %v602, %v1280
  %v1332 = vsel %vm397, %v605, %v1282
  %vm1333 = vcmask 130048
  %v1334 = vsel %vm1333, %v1328, %v1294
  %v1335 = vsel %vm1333, %v1329, %v1296
  %v1336 = vsel %vm1333, %v1330, %v1298
  %v1337 = vsel %vm1333, %v1331, %v1300
  %v1338 = vsel %vm1333, %v1332, %v1302
  %vm1339 = vcmask 195584
  %v1340 = vsel %vm1339, %v1334, %v1314
  %v1341 = vsel %vm1339, %v1335, %v1316
  %v1342 = vsel %vm1339, %v1336, %v1318
  %v1343 = vsel %vm1339, %v1337, %v1320
  %v1344 = vsel %vm1339, %v1338, %v1322
  %v1345 = vpack.c.bf16 %v1341, %v1340
  %v1346 = vpack.c.bf16 %v1343, %v1342
  %v1347 = vpack.c.bf16 %v1344, %v1344
  %v1348 = vld [vmem:[%s17] sm:$0xff]
  %v1349 = vld [vmem:[%s17 + $0x8] sm:$0xff]
  %v1350 = vld [vmem:[%s17 + $0x10] sm:$0xff]
  %v1351 = vld [vmem:[%s17 + $0x18] sm:$0xff]
  %v1352 = vpack.c.bf16 %v1349, %v1348
  %v1353 = vpack.c.bf16 %v1351, %v1350
  %v1354 = vld [vmem:[%s19] sm:$0x1]
  %v1356 = vperm.slane %v1354, 0
  %v1359 = vsel %vm197, %v1345, 0
  %v1362 = vsel %vm197, %v1346, 0
  %v1365 = vsel %vm197, %v1347, 0
  %1367 = vmatpush.bf16.msra.mxu0 0
  %1368 = vmatpush.bf16.msra.mxu0 0
  %1369 = vmatpush.bf16.msra.mxu0 0
  %1370 = vmatpush.bf16.msra.mxu0 0
  %1371 = vmatpush.bf16.msra.mxu0 0
  %1372 = vmatpush.bf16.msra.mxu0 0
  %1373 = vmatpush.bf16.msra.mxu0 %v1353
  %1374 = vmatpush.bf16.msra.mxu0 %v1352
  %1375 = vmatmul.bf16.gmra.mxu0 %v1359
  %v1376 = vpop.f32.mrf.mxu0
  %v1377 = vadd.f32 %v1356, %v1376
  %v1378 = vpop.f32.mrf.mxu0
  %v1379 = vadd.f32 %v1356, %v1378
  %1380 = vmatmul.bf16.gmra.mxu0 %v1362
  %v1381 = vpop.f32.mrf.mxu0
  %v1382 = vadd.f32 %v1356, %v1381
  %v1383 = vpop.f32.mrf.mxu0
  %v1384 = vadd.f32 %v1356, %v1383
  %1385 = vmatmul.bf16.gmra.mxu0 %v1365
  %v1386 = vpop.f32.mrf.mxu0
  %v1387 = vadd.f32 %v1356, %v1386
  %v1388 = vpop.f32.mrf.mxu0
  %1389 = vdwg.mxu0
  %v1390 = vadd.f32 %v177, %v1377
  %v1391 = vadd.f32 %v179, %v1379
  %v1392 = vadd.f32 %v182, %v1382
  %v1393 = vadd.f32 %v184, %v1384
  %v1394 = vadd.f32 %v187, %v1387
  %v1395 = vld [vmem:[%s21] sm:$0x1]
  %v1396 = vld [vmem:[%s23] sm:$0x1]
  %v1397 = vsel %vm197, %v1390, 0.0
  %1398 = vadd.xlane.f32.xlu0 %v1397
  %v1399 = vpop.xlane.xlu0 %1398
  %v1400 = vsel %vm197, %v1391, 0.0
  %1401 = vadd.xlane.f32.xlu0 %v1400
  %v1402 = vpop.xlane.xlu0 %1401
  %v1403 = vsel %vm197, %v1392, 0.0
  %1404 = vadd.xlane.f32.xlu0 %v1403
  %v1405 = vpop.xlane.xlu0 %1404
  %v1406 = vsel %vm197, %v1393, 0.0
  %1407 = vadd.xlane.f32.xlu0 %v1406
  %v1408 = vpop.xlane.xlu0 %1407
  %v1409 = vsel %vm210, %v1394, 0.0
  %1410 = vadd.xlane.f32.xlu0 %v1409
  %v1411 = vpop.xlane.xlu0 %1410
  %v1412 = vmul.f32 %v1399, %v220
  %v1413 = vmul.f32 %v1402, %v220
  %v1414 = vmul.f32 %v1405, %v220
  %v1415 = vmul.f32 %v1408, %v220
  %v1416 = vmul.f32 %v1411, %v220
  %v1417 = vsub.f32 %v1390, %v1412
  %v1418 = vsub.f32 %v1391, %v1413
  %v1419 = vsub.f32 %v1392, %v1414
  %v1420 = vsub.f32 %v1393, %v1415
  %v1421 = vsub.f32 %v1394, %v1416
  %v1422 = vmul.f32 %v1417, %v1417
  %v1423 = vmul.f32 %v1418, %v1418
  %v1424 = vmul.f32 %v1419, %v1419
  %v1425 = vmul.f32 %v1420, %v1420
  %v1426 = vmul.f32 %v1421, %v1421
  %v1427 = vsel %vm197, %v1422, 0.0
  %1428 = vadd.xlane.f32.xlu0 %v1427
  %v1429 = vpop.xlane.xlu0 %1428
  %v1430 = vsel %vm197, %v1423, 0.0
  %1431 = vadd.xlane.f32.xlu0 %v1430
  %v1432 = vpop.xlane.xlu0 %1431
  %v1433 = vsel %vm197, %v1424, 0.0
  %1434 = vadd.xlane.f32.xlu0 %v1433
  %v1435 = vpop.xlane.xlu0 %1434
  %v1436 = vsel %vm197, %v1425, 0.0
  %1437 = vadd.xlane.f32.xlu0 %v1436
  %v1438 = vpop.xlane.xlu0 %1437
  %v1439 = vsel %vm210, %v1426, 0.0
  %1440 = vadd.xlane.f32.xlu0 %v1439
  %v1441 = vpop.xlane.xlu0 %1440
  %v1442 = vmul.f32 %v1429, %v220
  %v1443 = vmul.f32 %v1432, %v220
  %v1444 = vmul.f32 %v1435, %v220
  %v1445 = vmul.f32 %v1438, %v220
  %v1446 = vmul.f32 %v1441, %v220
  %v1447 = vadd.f32 %v1442, 1e-12
  %v1448 = vadd.f32 %v1443, 1e-12
  %v1449 = vadd.f32 %v1444, 1e-12
  %v1450 = vadd.f32 %v1445, 1e-12
  %v1451 = vadd.f32 %v1446, 1e-12
  %v1452 = vrsqrt.pop %v1447
  %v1453 = vmul.f32 %v1452, %v1447
  %v1454 = vmul.f32 %v1453, %v1452
  %v1455 = vmul.f32 0.5, %v1454
  %v1456 = vsub.f32 1.5, %v1455
  %v1457 = vmul.f32 %v1452, %v1456
  %vm1458 = vweird.f32 %v1447
  %vm1459 = vweird.f32 %v1452
  %vm1460 = vmor %vm1458, %vm1459
  %v1461 = vsel %vm1460, %v1452, %v1457
  %v1462 = vrsqrt.pop %v1448
  %v1463 = vmul.f32 %v1462, %v1448
  %v1464 = vmul.f32 %v1463, %v1462
  %v1465 = vmul.f32 0.5, %v1464
  %v1466 = vsub.f32 1.5, %v1465
  %v1467 = vmul.f32 %v1462, %v1466
  %vm1468 = vweird.f32 %v1448
  %vm1469 = vweird.f32 %v1462
  %vm1470 = vmor %vm1468, %vm1469
  %v1471 = vsel %vm1470, %v1462, %v1467
  %v1472 = vrsqrt.pop %v1449
  %v1473 = vmul.f32 %v1472, %v1449
  %v1474 = vmul.f32 %v1473, %v1472
  %v1475 = vmul.f32 0.5, %v1474
  %v1476 = vsub.f32 1.5, %v1475
  %v1477 = vmul.f32 %v1472, %v1476
  %vm1478 = vweird.f32 %v1449
  %vm1479 = vweird.f32 %v1472
  %vm1480 = vmor %vm1478, %vm1479
  %v1481 = vsel %vm1480, %v1472, %v1477
  %v1482 = vrsqrt.pop %v1450
  %v1483 = vmul.f32 %v1482, %v1450
  %v1484 = vmul.f32 %v1483, %v1482
  %v1485 = vmul.f32 0.5, %v1484
  %v1486 = vsub.f32 1.5, %v1485
  %v1487 = vmul.f32 %v1482, %v1486
  %vm1488 = vweird.f32 %v1450
  %vm1489 = vweird.f32 %v1482
  %vm1490 = vmor %vm1488, %vm1489
  %v1491 = vsel %vm1490, %v1482, %v1487
  %v1492 = vrsqrt.pop %v1451
  %v1493 = vmul.f32 %v1492, %v1451
  %v1494 = vmul.f32 %v1493, %v1492
  %v1495 = vmul.f32 0.5, %v1494
  %v1496 = vsub.f32 1.5, %v1495
  %v1497 = vmul.f32 %v1492, %v1496
  %vm1498 = vweird.f32 %v1451
  %vm1499 = vweird.f32 %v1492
  %vm1500 = vmor %vm1498, %vm1499
  %v1501 = vsel %vm1500, %v1492, %v1497
  %v1502 = vmul.f32 %v1417, %v1461
  %v1503 = vmul.f32 %v1418, %v1471
  %v1504 = vmul.f32 %v1419, %v1481
  %v1505 = vmul.f32 %v1420, %v1491
  %v1506 = vmul.f32 %v1421, %v1501
  %v1508 = vperm.slane %v1395, 0
  %v1510 = vmul.f32 %v1502, %v1508
  %v1511 = vmul.f32 %v1503, %v1508
  %v1512 = vmul.f32 %v1504, %v1508
  %v1513 = vmul.f32 %v1505, %v1508
  %v1514 = vmul.f32 %v1506, %v1508
  %v1516 = vperm.slane %v1396, 0
  %v1518 = vadd.f32 %v1510, %v1516
  %v1519 = vadd.f32 %v1511, %v1516
  %v1520 = vadd.f32 %v1512, %v1516
  %v1521 = vadd.f32 %v1513, %v1516
  %v1522 = vadd.f32 %v1514, %v1516
  %v1523 = vpack.c.bf16 %v1519, %v1518
  %v1524 = vpack.c.bf16 %v1521, %v1520
  %v1525 = vpack.c.bf16 %v1522, %v1522
  %v1526 = vld [vmem:[%s25] sm:$0xff]
  %v1527 = vld [vmem:[%s25 + $0x8] sm:$0xff]
  %v1528 = vld [vmem:[%s25 + $0x10] sm:$0xff]
  %v1529 = vld [vmem:[%s25 + $0x18] sm:$0xff]
  %v1530 = vpack.c.bf16 %v1527, %v1526
  %v1531 = vpack.c.bf16 %v1529, %v1528
  %v1532 = vld [vmem:[%s27] sm:$0x1]
  %v1534 = vperm.slane %v1532, 0
  %v1537 = vsel %vm197, %v1523, 0
  %v1540 = vsel %vm197, %v1524, 0
  %v1543 = vsel %vm197, %v1525, 0
  %1545 = vmatpush.bf16.msra.mxu0 0
  %1546 = vmatpush.bf16.msra.mxu0 0
  %1547 = vmatpush.bf16.msra.mxu0 0
  %1548 = vmatpush.bf16.msra.mxu0 0
  %1549 = vmatpush.bf16.msra.mxu0 0
  %1550 = vmatpush.bf16.msra.mxu0 0
  %1551 = vmatpush.bf16.msra.mxu0 %v1531
  %1552 = vmatpush.bf16.msra.mxu0 %v1530
  %1553 = vmatmul.bf16.gmra.mxu0 %v1537
  %v1554 = vpop.f32.mrf.mxu0
  %v1555 = vadd.f32 %v1534, %v1554
  %v1556 = vpop.f32.mrf.mxu0
  %v1557 = vadd.f32 %v1534, %v1556
  %1558 = vmatmul.bf16.gmra.mxu0 %v1540
  %v1559 = vpop.f32.mrf.mxu0
  %v1560 = vadd.f32 %v1534, %v1559
  %v1561 = vpop.f32.mrf.mxu0
  %v1562 = vadd.f32 %v1534, %v1561
  %1563 = vmatmul.bf16.gmra.mxu0 %v1543
  %v1564 = vpop.f32.mrf.mxu0
  %v1565 = vadd.f32 %v1534, %v1564
  %v1566 = vpop.f32.mrf.mxu0
  %1567 = vdwg.mxu0
  %v1568 = vmul.f32 %v1555, %v1555
  %v1569 = vmul.f32 %v1557, %v1557
  %v1570 = vmul.f32 %v1560, %v1560
  %v1571 = vmul.f32 %v1562, %v1562
  %v1572 = vmul.f32 %v1565, %v1565
  %v1573 = vmul.f32 %v1555, %v1568
  %v1574 = vmul.f32 %v1557, %v1569
  %v1575 = vmul.f32 %v1560, %v1570
  %v1576 = vmul.f32 %v1562, %v1571
  %v1577 = vmul.f32 %v1565, %v1572
  %v1578 = vmul.f32 %v1573, 0.044715
  %v1579 = vmul.f32 %v1574, 0.044715
  %v1580 = vmul.f32 %v1575, 0.044715
  %v1581 = vmul.f32 %v1576, 0.044715
  %v1582 = vmul.f32 %v1577, 0.044715
  %v1583 = vadd.f32 %v1555, %v1578
  %v1584 = vadd.f32 %v1557, %v1579
  %v1585 = vadd.f32 %v1560, %v1580
  %v1586 = vadd.f32 %v1562, %v1581
  %v1587 = vadd.f32 %v1565, %v1582
  %v1588 = vmul.f32 %v1583, 0.7978846
  %v1589 = vmul.f32 %v1584, 0.7978846
  %v1590 = vmul.f32 %v1585, 0.7978846
  %v1591 = vmul.f32 %v1586, 0.7978846
  %v1592 = vmul.f32 %v1587, 0.7978846
  %v1593 = vtanh.pop %v1588
  %v1594 = vtanh.pop %v1589
  %v1595 = vtanh.pop %v1590
  %v1596 = vtanh.pop %v1591
  %v1597 = vtanh.pop %v1592
  %v1598 = vadd.f32 %v1593, 1.0
  %v1599 = vadd.f32 %v1594, 1.0
  %v1600 = vadd.f32 %v1595, 1.0
  %v1601 = vadd.f32 %v1596, 1.0
  %v1602 = vadd.f32 %v1597, 1.0
  %v1603 = vmul.f32 %v1598, 0.5
  %v1604 = vmul.f32 %v1599, 0.5
  %v1605 = vmul.f32 %v1600, 0.5
  %v1606 = vmul.f32 %v1601, 0.5
  %v1607 = vmul.f32 %v1602, 0.5
  %v1608 = vmul.f32 %v1555, %v1603
  %v1609 = vmul.f32 %v1557, %v1604
  %v1610 = vmul.f32 %v1560, %v1605
  %v1611 = vmul.f32 %v1562, %v1606
  %v1612 = vmul.f32 %v1565, %v1607
  %v1613 = vpack.c.bf16 %v1609, %v1608
  %v1614 = vpack.c.bf16 %v1611, %v1610
  %v1615 = vpack.c.bf16 %v1612, %v1612
  %v1616 = vld [vmem:[%s29] sm:$0xff]
  %v1617 = vld [vmem:[%s29 + $0x8] sm:$0xff]
  %v1618 = vld [vmem:[%s29 + $0x10] sm:$0xff]
  %v1619 = vld [vmem:[%s29 + $0x18] sm:$0xff]
  %v1620 = vld [vmem:[%s29 + $0x20] sm:$0xff]
  %v1621 = vld [vmem:[%s29 + $0x28] sm:$0xff]
  %v1622 = vld [vmem:[%s29 + $0x30] sm:$0xff]
  %v1623 = vld [vmem:[%s29 + $0x38] sm:$0xff]
  %v1624 = vld [vmem:[%s29 + $0x40] sm:$0xff]
  %v1625 = vld [vmem:[%s29 + $0x48] sm:$0xff]
  %v1626 = vld [vmem:[%s29 + $0x50] sm:$0xff]
  %v1627 = vld [vmem:[%s29 + $0x58] sm:$0xff]
  %v1628 = vld [vmem:[%s29 + $0x60] sm:$0xff]
  %v1629 = vld [vmem:[%s29 + $0x68] sm:$0xff]
  %v1630 = vld [vmem:[%s29 + $0x70] sm:$0xff]
  %v1631 = vld [vmem:[%s29 + $0x78] sm:$0xff]
  %v1632 = vpack.c.bf16 %v1617, %v1616
  %v1633 = vpack.c.bf16 %v1619, %v1618
  %v1634 = vpack.c.bf16 %v1621, %v1620
  %v1635 = vpack.c.bf16 %v1623, %v1622
  %v1636 = vpack.c.bf16 %v1625, %v1624
  %v1637 = vpack.c.bf16 %v1627, %v1626
  %v1638 = vpack.c.bf16 %v1629, %v1628
  %v1639 = vpack.c.bf16 %v1631, %v1630
  %v1640 = vld [vmem:[%s31] sm:$0x1]
  %v1642 = vperm.slane %v1640, 0
  %1644 = vmatpush.bf16.msra.mxu0 %v1639
  %1645 = vmatpush.bf16.msra.mxu0 %v1638
  %1646 = vmatpush.bf16.msra.mxu0 %v1637
  %1647 = vmatpush.bf16.msra.mxu0 %v1636
  %1648 = vmatpush.bf16.msra.mxu0 %v1635
  %1649 = vmatpush.bf16.msra.mxu0 %v1634
  %1650 = vmatpush.bf16.msra.mxu0 %v1633
  %1651 = vmatpush.bf16.msra.mxu0 %v1632
  %1652 = vmatmul.bf16.gmra.mxu0 %v1613
  %v1653 = vpop.f32.mrf.mxu0
  %v1654 = vadd.f32 %v1642, %v1653
  %v1655 = vpop.f32.mrf.mxu0
  %v1656 = vadd.f32 %v1642, %v1655
  %1657 = vmatmul.bf16.gmra.mxu0 %v1614
  %v1658 = vpop.f32.mrf.mxu0
  %v1659 = vadd.f32 %v1642, %v1658
  %v1660 = vpop.f32.mrf.mxu0
  %v1661 = vadd.f32 %v1642, %v1660
  %1662 = vmatmul.bf16.gmra.mxu0 %v1615
  %v1663 = vpop.f32.mrf.mxu0
  %v1664 = vadd.f32 %v1642, %v1663
  %v1665 = vpop.f32.mrf.mxu0
  %1666 = vdwg.mxu0
  %v1667 = vadd.f32 %v1390, %v1654
  %v1668 = vadd.f32 %v1391, %v1656
  %v1669 = vadd.f32 %v1392, %v1659
  %v1670 = vadd.f32 %v1393, %v1661
  %v1671 = vadd.f32 %v1394, %v1664
  %v1672 = vld [vmem:[%s33] sm:$0x1]
  %v1673 = vld [vmem:[%s35] sm:$0x1]
  %v1674 = vsel %vm197, %v1667, 0.0
  %1675 = vadd.xlane.f32.xlu0 %v1674
  %v1676 = vpop.xlane.xlu0 %1675
  %v1677 = vsel %vm197, %v1668, 0.0
  %1678 = vadd.xlane.f32.xlu0 %v1677
  %v1679 = vpop.xlane.xlu0 %1678
  %v1680 = vsel %vm197, %v1669, 0.0
  %1681 = vadd.xlane.f32.xlu0 %v1680
  %v1682 = vpop.xlane.xlu0 %1681
  %v1683 = vsel %vm197, %v1670, 0.0
  %1684 = vadd.xlane.f32.xlu0 %v1683
  %v1685 = vpop.xlane.xlu0 %1684
  %v1686 = vsel %vm210, %v1671, 0.0
  %1687 = vadd.xlane.f32.xlu0 %v1686
  %v1688 = vpop.xlane.xlu0 %1687
  %v1689 = vmul.f32 %v1676, %v220
  %v1690 = vmul.f32 %v1679, %v220
  %v1691 = vmul.f32 %v1682, %v220
  %v1692 = vmul.f32 %v1685, %v220
  %v1693 = vmul.f32 %v1688, %v220
  %v1694 = vsub.f32 %v1667, %v1689
  %v1695 = vsub.f32 %v1668, %v1690
  %v1696 = vsub.f32 %v1669, %v1691
  %v1697 = vsub.f32 %v1670, %v1692
  %v1698 = vsub.f32 %v1671, %v1693
  %v1699 = vmul.f32 %v1694, %v1694
  %v1700 = vmul.f32 %v1695, %v1695
  %v1701 = vmul.f32 %v1696, %v1696
  %v1702 = vmul.f32 %v1697, %v1697
  %v1703 = vmul.f32 %v1698, %v1698
  %v1704 = vsel %vm197, %v1699, 0.0
  %1705 = vadd.xlane.f32.xlu0 %v1704
  %v1706 = vpop.xlane.xlu0 %1705
  %v1707 = vsel %vm197, %v1700, 0.0
  %1708 = vadd.xlane.f32.xlu0 %v1707
  %v1709 = vpop.xlane.xlu0 %1708
  %v1710 = vsel %vm197, %v1701, 0.0
  %1711 = vadd.xlane.f32.xlu0 %v1710
  %v1712 = vpop.xlane.xlu0 %1711
  %v1713 = vsel %vm197, %v1702, 0.0
  %1714 = vadd.xlane.f32.xlu0 %v1713
  %v1715 = vpop.xlane.xlu0 %1714
  %v1716 = vsel %vm210, %v1703, 0.0
  %1717 = vadd.xlane.f32.xlu0 %v1716
  %v1718 = vpop.xlane.xlu0 %1717
  %v1719 = vmul.f32 %v1706, %v220
  %v1720 = vmul.f32 %v1709, %v220
  %v1721 = vmul.f32 %v1712, %v220
  %v1722 = vmul.f32 %v1715, %v220
  %v1723 = vmul.f32 %v1718, %v220
  %v1724 = vadd.f32 %v1719, 1e-12
  %v1725 = vadd.f32 %v1720, 1e-12
  %v1726 = vadd.f32 %v1721, 1e-12
  %v1727 = vadd.f32 %v1722, 1e-12
  %v1728 = vadd.f32 %v1723, 1e-12
  %v1729 = vrsqrt.pop %v1724
  %v1730 = vmul.f32 %v1729, %v1724
  %v1731 = vmul.f32 %v1730, %v1729
  %v1732 = vmul.f32 0.5, %v1731
  %v1733 = vsub.f32 1.5, %v1732
  %v1734 = vmul.f32 %v1729, %v1733
  %vm1735 = vweird.f32 %v1724
  %vm1736 = vweird.f32 %v1729
  %vm1737 = vmor %vm1735, %vm1736
  %v1738 = vsel %vm1737, %v1729, %v1734
  %v1739 = vrsqrt.pop %v1725
  %v1740 = vmul.f32 %v1739, %v1725
  %v1741 = vmul.f32 %v1740, %v1739
  %v1742 = vmul.f32 0.5, %v1741
  %v1743 = vsub.f32 1.5, %v1742
  %v1744 = vmul.f32 %v1739, %v1743
  %vm1745 = vweird.f32 %v1725
  %vm1746 = vweird.f32 %v1739
  %vm1747 = vmor %vm1745, %vm1746
  %v1748 = vsel %vm1747, %v1739, %v1744
  %v1749 = vrsqrt.pop %v1726
  %v1750 = vmul.f32 %v1749, %v1726
  %v1751 = vmul.f32 %v1750, %v1749
  %v1752 = vmul.f32 0.5, %v1751
  %v1753 = vsub.f32 1.5, %v1752
  %v1754 = vmul.f32 %v1749, %v1753
  %vm1755 = vweird.f32 %v1726
  %vm1756 = vweird.f32 %v1749
  %vm1757 = vmor %vm1755, %vm1756
  %v1758 = vsel %vm1757, %v1749, %v1754
  %v1759 = vrsqrt.pop %v1727
  %v1760 = vmul.f32 %v1759, %v1727
  %v1761 = vmul.f32 %v1760, %v1759
  %v1762 = vmul.f32 0.5, %v1761
  %v1763 = vsub.f32 1.5, %v1762
  %v1764 = vmul.f32 %v1759, %v1763
  %vm1765 = vweird.f32 %v1727
  %vm1766 = vweird.f32 %v1759
  %vm1767 = vmor %vm1765, %vm1766
  %v1768 = vsel %vm1767, %v1759, %v1764
  %v1769 = vrsqrt.pop %v1728
  %v1770 = vmul.f32 %v1769, %v1728
  %v1771 = vmul.f32 %v1770, %v1769
  %v1772 = vmul.f32 0.5, %v1771
  %v1773 = vsub.f32 1.5, %v1772
  %v1774 = vmul.f32 %v1769, %v1773
  %vm1775 = vweird.f32 %v1728
  %vm1776 = vweird.f32 %v1769
  %vm1777 = vmor %vm1775, %vm1776
  %v1778 = vsel %vm1777, %v1769, %v1774
  %v1779 = vmul.f32 %v1694, %v1738
  %v1780 = vmul.f32 %v1695, %v1748
  %v1781 = vmul.f32 %v1696, %v1758
  %v1782 = vmul.f32 %v1697, %v1768
  %v1783 = vmul.f32 %v1698, %v1778
  %v1785 = vperm.slane %v1672, 0
  %v1787 = vmul.f32 %v1779, %v1785
  %v1788 = vmul.f32 %v1780, %v1785
  %v1789 = vmul.f32 %v1781, %v1785
  %v1790 = vmul.f32 %v1782, %v1785
  %v1791 = vmul.f32 %v1783, %v1785
  %v1793 = vperm.slane %v1673, 0
  %v1795 = vadd.f32 %v1787, %v1793
  %v1796 = vadd.f32 %v1788, %v1793
  %v1797 = vadd.f32 %v1789, %v1793
  %v1798 = vadd.f32 %v1790, %v1793
  %v1799 = vadd.f32 %v1791, %v1793
  %v1800 = vpack.c.bf16 %v1796, %v1795
  %v1801 = vpack.c.bf16 %v1798, %v1797
  %v1802 = vpack.c.bf16 %v1799, %v1799
  %v1803 = vld [vmem:[%s37] sm:$0xff]
  %v1804 = vld [vmem:[%s37 + $0x8] sm:$0xff]
  %v1805 = vld [vmem:[%s37 + $0x10] sm:$0xff]
  %v1806 = vld [vmem:[%s37 + $0x18] sm:$0xff]
  %v1807 = vpack.c.bf16 %v1804, %v1803
  %v1808 = vpack.c.bf16 %v1806, %v1805
  %v1809 = vld [vmem:[%s39] sm:$0x1]
  %v1811 = vperm.slane %v1809, 0
  %v1814 = vsel %vm197, %v1800, 0
  %v1817 = vsel %vm197, %v1801, 0
  %v1820 = vsel %vm197, %v1802, 0
  %1822 = vmatpush.bf16.msra.mxu0 0
  %1823 = vmatpush.bf16.msra.mxu0 0
  %1824 = vmatpush.bf16.msra.mxu0 0
  %1825 = vmatpush.bf16.msra.mxu0 0
  %1826 = vmatpush.bf16.msra.mxu0 0
  %1827 = vmatpush.bf16.msra.mxu0 0
  %1828 = vmatpush.bf16.msra.mxu0 %v1808
  %1829 = vmatpush.bf16.msra.mxu0 %v1807
  %1830 = vmatmul.bf16.gmra.mxu0 %v1814
  %v1831 = vpop.f32.mrf.mxu0
  %v1832 = vadd.f32 %v1811, %v1831
  %v1833 = vpop.f32.mrf.mxu0
  %v1834 = vadd.f32 %v1811, %v1833
  %1835 = vmatmul.bf16.gmra.mxu0 %v1817
  %v1836 = vpop.f32.mrf.mxu0
  %v1837 = vadd.f32 %v1811, %v1836
  %v1838 = vpop.f32.mrf.mxu0
  %v1839 = vadd.f32 %v1811, %v1838
  %1840 = vmatmul.bf16.gmra.mxu0 %v1820
  %v1841 = vpop.f32.mrf.mxu0
  %v1842 = vadd.f32 %v1811, %v1841
  %v1843 = vpop.f32.mrf.mxu0
  %1844 = vdwg.mxu0
  %v1845 = vmul.f32 %v1832, 0.35355338
  %v1846 = vmul.f32 %v1834, 0.35355338
  %v1847 = vmul.f32 %v1837, 0.35355338
  %v1848 = vmul.f32 %v1839, 0.35355338
  %v1849 = vmul.f32 %v1842, 0.35355338
  %v1850 = vpack.c.bf16 %v1846, %v1845
  %v1851 = vpack.c.bf16 %v1848, %v1847
  %v1852 = vpack.c.bf16 %v1849, %v1849
  %v1853 = vpack.c.bf16 %v1834, %v1832
  %v1854 = vpack.c.bf16 %v1839, %v1837
  %v1855 = vpack.c.bf16 %v1842, %v1842
  %1859 = vrot.lane.b32.xlu0 %v1853, 96
  %v1860 = vpop.permute.xlu0 %1859
  %1861 = vrot.lane.b32.xlu0 %v1854, 96
  %v1862 = vpop.permute.xlu0 %1861
  %1863 = vrot.lane.b32.xlu0 %v1855, 96
  %v1864 = vpop.permute.xlu0 %1863
  %v1866 = vsel %vm397, %v1850, 0
  %v1869 = vsel %vm397, %v1851, 0
  %v1872 = vsel %vm397, %v1852, 0
  %v1875 = vsel %vm397, %v1860, 0
  %v1878 = vsel %vm397, %v1862, 0
  %v1881 = vsel %vm397, %v1864, 0
  %1883 = vmatpush.bf16.xpose.msra.mxu0 0
  %1884 = vmatpush.bf16.xpose.msra.mxu0 0
  %1885 = vmatpush.bf16.xpose.msra.mxu0 0
  %1886 = vmatpush.bf16.xpose.msra.mxu0 0
  %1887 = vmatpush.bf16.xpose.msra.mxu0 0
  %1888 = vmatpush.bf16.xpose.msra.mxu0 %v1881
  %1889 = vmatpush.bf16.xpose.msra.mxu0 %v1878
  %1890 = vmatpush.bf16.xpose.msra.mxu0 %v1875
  %1891 = vmatmul.bf16.gmra.mxu0 %v1866
  %v1892 = vpop.f32.mrf.mxu0
  %v1893 = vadd.f32 %v190, %v1892
  %v1894 = vpop.f32.mrf.mxu0
  %v1895 = vadd.f32 %v191, %v1894
  %1896 = vmatmul.bf16.gmra.mxu0 %v1869
  %v1897 = vpop.f32.mrf.mxu0
  %v1898 = vadd.f32 %v192, %v1897
  %v1899 = vpop.f32.mrf.mxu0
  %v1900 = vadd.f32 %v193, %v1899
  %1901 = vmatmul.bf16.gmra.mxu0 %v1872
  %v1902 = vpop.f32.mrf.mxu0
  %v1903 = vadd.f32 %v194, %v1902
  %v1904 = vpop.f32.mrf.mxu0
  %1905 = vdwg.mxu0
  %v1906 = vsel %vm439, %v1893, -inf
  %1907 = vmax.xlane.f32.xlu0 %v1906
  %v1908 = vpop.xlane.xlu0 %1907
  %v1909 = vsel %vm439, %v1895, -inf
  %1910 = vmax.xlane.f32.xlu0 %v1909
  %v1911 = vpop.xlane.xlu0 %1910
  %v1912 = vsel %vm439, %v1898, -inf
  %1913 = vmax.xlane.f32.xlu0 %v1912
  %v1914 = vpop.xlane.xlu0 %1913
  %v1915 = vsel %vm439, %v1900, -inf
  %1916 = vmax.xlane.f32.xlu0 %v1915
  %v1917 = vpop.xlane.xlu0 %1916
  %v1918 = vsel %vm452, %v1903, -inf
  %1919 = vmax.xlane.f32.xlu0 %v1918
  %v1920 = vpop.xlane.xlu0 %1919
  %v1921 = vsub.f32 %v1893, %v1908
  %v1922 = vsub.f32 %v1895, %v1911
  %v1923 = vsub.f32 %v1898, %v1914
  %v1924 = vsub.f32 %v1900, %v1917
  %v1925 = vsub.f32 %v1903, %v1920
  %v1926 = vmul.f32 %v1921, 1.442695
  %v1927 = vpow.pop %v1926
  %v1928 = vmul.f32 %v1922, 1.442695
  %v1929 = vpow.pop %v1928
  %v1930 = vmul.f32 %v1923, 1.442695
  %v1931 = vpow.pop %v1930
  %v1932 = vmul.f32 %v1924, 1.442695
  %v1933 = vpow.pop %v1932
  %v1934 = vmul.f32 %v1925, 1.442695
  %v1935 = vpow.pop %v1934
  %v1936 = vsel %vm439, %v1927, 0.0
  %1937 = vadd.xlane.f32.xlu0 %v1936
  %v1938 = vpop.xlane.xlu0 %1937
  %v1939 = vsel %vm439, %v1929, 0.0
  %1940 = vadd.xlane.f32.xlu0 %v1939
  %v1941 = vpop.xlane.xlu0 %1940
  %v1942 = vsel %vm439, %v1931, 0.0
  %1943 = vadd.xlane.f32.xlu0 %v1942
  %v1944 = vpop.xlane.xlu0 %1943
  %v1945 = vsel %vm439, %v1933, 0.0
  %1946 = vadd.xlane.f32.xlu0 %v1945
  %v1947 = vpop.xlane.xlu0 %1946
  %v1948 = vsel %vm452, %v1935, 0.0
  %1949 = vadd.xlane.f32.xlu0 %v1948
  %v1950 = vpop.xlane.xlu0 %1949
  %v1951 = vrcp.pop %v1938
  %v1952 = vmul.f32 %v1938, %v1951
  %v1953 = vsub.f32 1.0, %v1952
  %v1954 = vmul.f32 %v1951, %v1953
  %v1955 = vadd.f32 %v1951, %v1954
  %vm1956 = vweird.f32 %v1938
  %vm1957 = vweird.f32 %v1951
  %vm1958 = vmor %vm1956, %vm1957
  %v1959 = vsel %vm1958, %v1951, %v1955
  %v1960 = vand.u32 2147483647, %v1938
  %vm1961 = vcmp.eq.f32.partialorder %v1960, 8.507059e+37
  %v1962 = vand.u32 %v1938, 2147483648
  %v1963 = vor.u32 1.1754944e-38, %v1962
  %v1964 = vsel %vm1961, %v1963, %v1959
  %v1965 = vmul.f32 %v1927, %v1964
  %v1966 = vrcp.pop %v1941
  %v1967 = vmul.f32 %v1941, %v1966
  %v1968 = vsub.f32 1.0, %v1967
  %v1969 = vmul.f32 %v1966, %v1968
  %v1970 = vadd.f32 %v1966, %v1969
  %vm1971 = vweird.f32 %v1941
  %vm1972 = vweird.f32 %v1966
  %vm1973 = vmor %vm1971, %vm1972
  %v1974 = vsel %vm1973, %v1966, %v1970
  %v1975 = vand.u32 2147483647, %v1941
  %vm1976 = vcmp.eq.f32.partialorder %v1975, 8.507059e+37
  %v1977 = vand.u32 %v1941, 2147483648
  %v1978 = vor.u32 1.1754944e-38, %v1977
  %v1979 = vsel %vm1976, %v1978, %v1974
  %v1980 = vmul.f32 %v1929, %v1979
  %v1981 = vrcp.pop %v1944
  %v1982 = vmul.f32 %v1944, %v1981
  %v1983 = vsub.f32 1.0, %v1982
  %v1984 = vmul.f32 %v1981, %v1983
  %v1985 = vadd.f32 %v1981, %v1984
  %vm1986 = vweird.f32 %v1944
  %vm1987 = vweird.f32 %v1981
  %vm1988 = vmor %vm1986, %vm1987
  %v1989 = vsel %vm1988, %v1981, %v1985
  %v1990 = vand.u32 2147483647, %v1944
  %vm1991 = vcmp.eq.f32.partialorder %v1990, 8.507059e+37
  %v1992 = vand.u32 %v1944, 2147483648
  %v1993 = vor.u32 1.1754944e-38, %v1992
  %v1994 = vsel %vm1991, %v1993, %v1989
  %v1995 = vmul.f32 %v1931, %v1994
  %v1996 = vrcp.pop %v1947
  %v1997 = vmul.f32 %v1947, %v1996
  %v1998 = vsub.f32 1.0, %v1997
  %v1999 = vmul.f32 %v1996, %v1998
  %v2000 = vadd.f32 %v1996, %v1999
  %vm2001 = vweird.f32 %v1947
  %vm2002 = vweird.f32 %v1996
  %vm2003 = vmor %vm2001, %vm2002
  %v2004 = vsel %vm2003, %v1996, %v2000
  %v2005 = vand.u32 2147483647, %v1947
  %vm2006 = vcmp.eq.f32.partialorder %v2005, 8.507059e+37
  %v2007 = vand.u32 %v1947, 2147483648
  %v2008 = vor.u32 1.1754944e-38, %v2007
  %v2009 = vsel %vm2006, %v2008, %v2004
  %v2010 = vmul.f32 %v1933, %v2009
  %v2011 = vrcp.pop %v1950
  %v2012 = vmul.f32 %v1950, %v2011
  %v2013 = vsub.f32 1.0, %v2012
  %v2014 = vmul.f32 %v2011, %v2013
  %v2015 = vadd.f32 %v2011, %v2014
  %vm2016 = vweird.f32 %v1950
  %vm2017 = vweird.f32 %v2011
  %vm2018 = vmor %vm2016, %vm2017
  %v2019 = vsel %vm2018, %v2011, %v2015
  %v2020 = vand.u32 2147483647, %v1950
  %vm2021 = vcmp.eq.f32.partialorder %v2020, 8.507059e+37
  %v2022 = vand.u32 %v1950, 2147483648
  %v2023 = vor.u32 1.1754944e-38, %v2022
  %v2024 = vsel %vm2021, %v2023, %v2019
  %v2025 = vmul.f32 %v1935, %v2024
  %v2026 = vpack.c.bf16 %v1980, %v1965
  %v2027 = vpack.c.bf16 %v2010, %v1995
  %v2028 = vpack.c.bf16 %v2025, %v2025
  %2029 = vrot.lane.b32.xlu0 %v1853, 64
  %v2030 = vpop.permute.xlu0 %2029
  %2031 = vrot.lane.b32.xlu0 %v1854, 64
  %v2032 = vpop.permute.xlu0 %2031
  %2033 = vrot.lane.b32.xlu0 %v1855, 64
  %v2034 = vpop.permute.xlu0 %2033
  %v2038 = vsel %vm439, %v2026, 0
  %v2041 = vsel %vm439, %v2027, 0
  %v2044 = vsel %vm439, %v2028, 0
  %v2047 = vsel %vm581, %v2034, 0
  %2049 = vmatpush.bf16.msra.mxu0 0
  %2050 = vmatpush.bf16.msra.mxu0 0
  %2051 = vmatpush.bf16.msra.mxu0 0
  %2052 = vmatpush.bf16.msra.mxu0 0
  %2053 = vmatpush.bf16.msra.mxu0 0
  %2054 = vmatpush.bf16.msra.mxu0 %v2047
  %2055 = vmatpush.bf16.msra.mxu0 %v2032
  %2056 = vmatpush.bf16.msra.mxu0 %v2030
  %2057 = vmatmul.bf16.gmra.mxu0 %v2038
  %v2058 = vpop.f32.mrf.mxu0
  %v2059 = vadd.f32 0.0, %v2058
  %v2060 = vpop.f32.mrf.mxu0
  %v2061 = vadd.f32 0.0, %v2060
  %2062 = vmatmul.bf16.gmra.mxu0 %v2041
  %v2063 = vpop.f32.mrf.mxu0
  %v2064 = vadd.f32 0.0, %v2063
  %v2065 = vpop.f32.mrf.mxu0
  %v2066 = vadd.f32 0.0, %v2065
  %2067 = vmatmul.bf16.gmra.mxu0 %v2044
  %v2068 = vpop.f32.mrf.mxu0
  %v2069 = vadd.f32 0.0, %v2068
  %v2070 = vpop.f32.mrf.mxu0
  %2071 = vdwg.mxu0
  %2075 = vrot.lane.b32.xlu0 %v1850, 120
  %v2076 = vpop.permute.xlu0 %2075
  %2077 = vrot.lane.b32.xlu0 %v1851, 120
  %v2078 = vpop.permute.xlu0 %2077
  %2079 = vrot.lane.b32.xlu0 %v1852, 120
  %v2080 = vpop.permute.xlu0 %2079
  %2081 = vrot.lane.b32.xlu0 %v1853, 88
  %v2082 = vpop.permute.xlu0 %2081
  %2083 = vrot.lane.b32.xlu0 %v1854, 88
  %v2084 = vpop.permute.xlu0 %2083
  %2085 = vrot.lane.b32.xlu0 %v1855, 88
  %v2086 = vpop.permute.xlu0 %2085
  %v2088 = vsel %vm397, %v2076, 0
  %v2091 = vsel %vm397, %v2078, 0
  %v2094 = vsel %vm397, %v2080, 0
  %v2097 = vsel %vm397, %v2082, 0
  %v2100 = vsel %vm397, %v2084, 0
  %v2103 = vsel %vm397, %v2086, 0
  %2105 = vmatpush.bf16.xpose.msra.mxu0 0
  %2106 = vmatpush.bf16.xpose.msra.mxu0 0
  %2107 = vmatpush.bf16.xpose.msra.mxu0 0
  %2108 = vmatpush.bf16.xpose.msra.mxu0 0
  %2109 = vmatpush.bf16.xpose.msra.mxu0 0
  %2110 = vmatpush.bf16.xpose.msra.mxu0 %v2103
  %2111 = vmatpush.bf16.xpose.msra.mxu0 %v2100
  %2112 = vmatpush.bf16.xpose.msra.mxu0 %v2097
  %2113 = vmatmul.bf16.gmra.mxu0 %v2088
  %v2114 = vpop.f32.mrf.mxu0
  %v2115 = vadd.f32 %v190, %v2114
  %v2116 = vpop.f32.mrf.mxu0
  %v2117 = vadd.f32 %v191, %v2116
  %2118 = vmatmul.bf16.gmra.mxu0 %v2091
  %v2119 = vpop.f32.mrf.mxu0
  %v2120 = vadd.f32 %v192, %v2119
  %v2121 = vpop.f32.mrf.mxu0
  %v2122 = vadd.f32 %v193, %v2121
  %2123 = vmatmul.bf16.gmra.mxu0 %v2094
  %v2124 = vpop.f32.mrf.mxu0
  %v2125 = vadd.f32 %v194, %v2124
  %v2126 = vpop.f32.mrf.mxu0
  %2127 = vdwg.mxu0
  %v2128 = vsel %vm439, %v2115, -inf
  %2129 = vmax.xlane.f32.xlu0 %v2128
  %v2130 = vpop.xlane.xlu0 %2129
  %v2131 = vsel %vm439, %v2117, -inf
  %2132 = vmax.xlane.f32.xlu0 %v2131
  %v2133 = vpop.xlane.xlu0 %2132
  %v2134 = vsel %vm439, %v2120, -inf
  %2135 = vmax.xlane.f32.xlu0 %v2134
  %v2136 = vpop.xlane.xlu0 %2135
  %v2137 = vsel %vm439, %v2122, -inf
  %2138 = vmax.xlane.f32.xlu0 %v2137
  %v2139 = vpop.xlane.xlu0 %2138
  %v2140 = vsel %vm452, %v2125, -inf
  %2141 = vmax.xlane.f32.xlu0 %v2140
  %v2142 = vpop.xlane.xlu0 %2141
  %v2143 = vsub.f32 %v2115, %v2130
  %v2144 = vsub.f32 %v2117, %v2133
  %v2145 = vsub.f32 %v2120, %v2136
  %v2146 = vsub.f32 %v2122, %v2139
  %v2147 = vsub.f32 %v2125, %v2142
  %v2148 = vmul.f32 %v2143, 1.442695
  %v2149 = vpow.pop %v2148
  %v2150 = vmul.f32 %v2144, 1.442695
  %v2151 = vpow.pop %v2150
  %v2152 = vmul.f32 %v2145, 1.442695
  %v2153 = vpow.pop %v2152
  %v2154 = vmul.f32 %v2146, 1.442695
  %v2155 = vpow.pop %v2154
  %v2156 = vmul.f32 %v2147, 1.442695
  %v2157 = vpow.pop %v2156
  %v2158 = vsel %vm439, %v2149, 0.0
  %2159 = vadd.xlane.f32.xlu0 %v2158
  %v2160 = vpop.xlane.xlu0 %2159
  %v2161 = vsel %vm439, %v2151, 0.0
  %2162 = vadd.xlane.f32.xlu0 %v2161
  %v2163 = vpop.xlane.xlu0 %2162
  %v2164 = vsel %vm439, %v2153, 0.0
  %2165 = vadd.xlane.f32.xlu0 %v2164
  %v2166 = vpop.xlane.xlu0 %2165
  %v2167 = vsel %vm439, %v2155, 0.0
  %2168 = vadd.xlane.f32.xlu0 %v2167
  %v2169 = vpop.xlane.xlu0 %2168
  %v2170 = vsel %vm452, %v2157, 0.0
  %2171 = vadd.xlane.f32.xlu0 %v2170
  %v2172 = vpop.xlane.xlu0 %2171
  %v2173 = vrcp.pop %v2160
  %v2174 = vmul.f32 %v2160, %v2173
  %v2175 = vsub.f32 1.0, %v2174
  %v2176 = vmul.f32 %v2173, %v2175
  %v2177 = vadd.f32 %v2173, %v2176
  %vm2178 = vweird.f32 %v2160
  %vm2179 = vweird.f32 %v2173
  %vm2180 = vmor %vm2178, %vm2179
  %v2181 = vsel %vm2180, %v2173, %v2177
  %v2182 = vand.u32 2147483647, %v2160
  %vm2183 = vcmp.eq.f32.partialorder %v2182, 8.507059e+37
  %v2184 = vand.u32 %v2160, 2147483648
  %v2185 = vor.u32 1.1754944e-38, %v2184
  %v2186 = vsel %vm2183, %v2185, %v2181
  %v2187 = vmul.f32 %v2149, %v2186
  %v2188 = vrcp.pop %v2163
  %v2189 = vmul.f32 %v2163, %v2188
  %v2190 = vsub.f32 1.0, %v2189
  %v2191 = vmul.f32 %v2188, %v2190
  %v2192 = vadd.f32 %v2188, %v2191
  %vm2193 = vweird.f32 %v2163
  %vm2194 = vweird.f32 %v2188
  %vm2195 = vmor %vm2193, %vm2194
  %v2196 = vsel %vm2195, %v2188, %v2192
  %v2197 = vand.u32 2147483647, %v2163
  %vm2198 = vcmp.eq.f32.partialorder %v2197, 8.507059e+37
  %v2199 = vand.u32 %v2163, 2147483648
  %v2200 = vor.u32 1.1754944e-38, %v2199
  %v2201 = vsel %vm2198, %v2200, %v2196
  %v2202 = vmul.f32 %v2151, %v2201
  %v2203 = vrcp.pop %v2166
  %v2204 = vmul.f32 %v2166, %v2203
  %v2205 = vsub.f32 1.0, %v2204
  %v2206 = vmul.f32 %v2203, %v2205
  %v2207 = vadd.f32 %v2203, %v2206
  %vm2208 = vweird.f32 %v2166
  %vm2209 = vweird.f32 %v2203
  %vm2210 = vmor %vm2208, %vm2209
  %v2211 = vsel %vm2210, %v2203, %v2207
  %v2212 = vand.u32 2147483647, %v2166
  %vm2213 = vcmp.eq.f32.partialorder %v2212, 8.507059e+37
  %v2214 = vand.u32 %v2166, 2147483648
  %v2215 = vor.u32 1.1754944e-38, %v2214
  %v2216 = vsel %vm2213, %v2215, %v2211
  %v2217 = vmul.f32 %v2153, %v2216
  %v2218 = vrcp.pop %v2169
  %v2219 = vmul.f32 %v2169, %v2218
  %v2220 = vsub.f32 1.0, %v2219
  %v2221 = vmul.f32 %v2218, %v2220
  %v2222 = vadd.f32 %v2218, %v2221
  %vm2223 = vweird.f32 %v2169
  %vm2224 = vweird.f32 %v2218
  %vm2225 = vmor %vm2223, %vm2224
  %v2226 = vsel %vm2225, %v2218, %v2222
  %v2227 = vand.u32 2147483647, %v2169
  %vm2228 = vcmp.eq.f32.partialorder %v2227, 8.507059e+37
  %v2229 = vand.u32 %v2169, 2147483648
  %v2230 = vor.u32 1.1754944e-38, %v2229
  %v2231 = vsel %vm2228, %v2230, %v2226
  %v2232 = vmul.f32 %v2155, %v2231
  %v2233 = vrcp.pop %v2172
  %v2234 = vmul.f32 %v2172, %v2233
  %v2235 = vsub.f32 1.0, %v2234
  %v2236 = vmul.f32 %v2233, %v2235
  %v2237 = vadd.f32 %v2233, %v2236
  %vm2238 = vweird.f32 %v2172
  %vm2239 = vweird.f32 %v2233
  %vm2240 = vmor %vm2238, %vm2239
  %v2241 = vsel %vm2240, %v2233, %v2237
  %v2242 = vand.u32 2147483647, %v2172
  %vm2243 = vcmp.eq.f32.partialorder %v2242, 8.507059e+37
  %v2244 = vand.u32 %v2172, 2147483648
  %v2245 = vor.u32 1.1754944e-38, %v2244
  %v2246 = vsel %vm2243, %v2245, %v2241
  %v2247 = vmul.f32 %v2157, %v2246
  %v2248 = vpack.c.bf16 %v2202, %v2187
  %v2249 = vpack.c.bf16 %v2232, %v2217
  %v2250 = vpack.c.bf16 %v2247, %v2247
  %2251 = vrot.lane.b32.xlu0 %v1853, 56
  %v2252 = vpop.permute.xlu0 %2251
  %2253 = vrot.lane.b32.xlu0 %v1854, 56
  %v2254 = vpop.permute.xlu0 %2253
  %2255 = vrot.lane.b32.xlu0 %v1855, 56
  %v2256 = vpop.permute.xlu0 %2255
  %v2260 = vsel %vm439, %v2248, 0
  %v2263 = vsel %vm439, %v2249, 0
  %v2266 = vsel %vm439, %v2250, 0
  %v2269 = vsel %vm581, %v2256, 0
  %2271 = vmatpush.bf16.msra.mxu0 0
  %2272 = vmatpush.bf16.msra.mxu0 0
  %2273 = vmatpush.bf16.msra.mxu0 0
  %2274 = vmatpush.bf16.msra.mxu0 0
  %2275 = vmatpush.bf16.msra.mxu0 0
  %2276 = vmatpush.bf16.msra.mxu0 %v2269
  %2277 = vmatpush.bf16.msra.mxu0 %v2254
  %2278 = vmatpush.bf16.msra.mxu0 %v2252
  %2279 = vmatmul.bf16.gmra.mxu0 %v2260
  %v2280 = vpop.f32.mrf.mxu0
  %v2281 = vadd.f32 0.0, %v2280
  %v2282 = vpop.f32.mrf.mxu0
  %v2283 = vadd.f32 0.0, %v2282
  %2284 = vmatmul.bf16.gmra.mxu0 %v2263
  %v2285 = vpop.f32.mrf.mxu0
  %v2286 = vadd.f32 0.0, %v2285
  %v2287 = vpop.f32.mrf.mxu0
  %v2288 = vadd.f32 0.0, %v2287
  %2289 = vmatmul.bf16.gmra.mxu0 %v2266
  %v2290 = vpop.f32.mrf.mxu0
  %v2291 = vadd.f32 0.0, %v2290
  %v2292 = vpop.f32.mrf.mxu0
  %2293 = vdwg.mxu0
  %2294 = vrot.lane.b32.xlu0 %v1850, 112
  %v2295 = vpop.permute.xlu0 %2294
  %2296 = vrot.lane.b32.xlu0 %v1851, 112
  %v2297 = vpop.permute.xlu0 %2296
  %2298 = vrot.lane.b32.xlu0 %v1852, 112
  %v2299 = vpop.permute.xlu0 %2298
  %2300 = vrot.lane.b32.xlu0 %v1853, 80
  %v2301 = vpop.permute.xlu0 %2300
  %2302 = vrot.lane.b32.xlu0 %v1854, 80
  %v2303 = vpop.permute.xlu0 %2302
  %2304 = vrot.lane.b32.xlu0 %v1855, 80
  %v2305 = vpop.permute.xlu0 %2304
  %v2307 = vsel %vm397, %v2295, 0
  %v2310 = vsel %vm397, %v2297, 0
  %v2313 = vsel %vm397, %v2299, 0
  %v2316 = vsel %vm397, %v2301, 0
  %v2319 = vsel %vm397, %v2303, 0
  %v2322 = vsel %vm397, %v2305, 0
  %2324 = vmatpush.bf16.xpose.msra.mxu0 0
  %2325 = vmatpush.bf16.xpose.msra.mxu0 0
  %2326 = vmatpush.bf16.xpose.msra.mxu0 0
  %2327 = vmatpush.bf16.xpose.msra.mxu0 0
  %2328 = vmatpush.bf16.xpose.msra.mxu0 0
  %2329 = vmatpush.bf16.xpose.msra.mxu0 %v2322
  %2330 = vmatpush.bf16.xpose.msra.mxu0 %v2319
  %2331 = vmatpush.bf16.xpose.msra.mxu0 %v2316
  %2332 = vmatmul.bf16.gmra.mxu0 %v2307
  %v2333 = vpop.f32.mrf.mxu0
  %v2334 = vadd.f32 %v190, %v2333
  %v2335 = vpop.f32.mrf.mxu0
  %v2336 = vadd.f32 %v191, %v2335
  %2337 = vmatmul.bf16.gmra.mxu0 %v2310
  %v2338 = vpop.f32.mrf.mxu0
  %v2339 = vadd.f32 %v192, %v2338
  %v2340 = vpop.f32.mrf.mxu0
  %v2341 = vadd.f32 %v193, %v2340
  %2342 = vmatmul.bf16.gmra.mxu0 %v2313
  %v2343 = vpop.f32.mrf.mxu0
  %v2344 = vadd.f32 %v194, %v2343
  %v2345 = vpop.f32.mrf.mxu0
  %2346 = vdwg.mxu0
  %v2347 = vsel %vm439, %v2334, -inf
  %2348 = vmax.xlane.f32.xlu0 %v2347
  %v2349 = vpop.xlane.xlu0 %2348
  %v2350 = vsel %vm439, %v2336, -inf
  %2351 = vmax.xlane.f32.xlu0 %v2350
  %v2352 = vpop.xlane.xlu0 %2351
  %v2353 = vsel %vm439, %v2339, -inf
  %2354 = vmax.xlane.f32.xlu0 %v2353
  %v2355 = vpop.xlane.xlu0 %2354
  %v2356 = vsel %vm439, %v2341, -inf
  %2357 = vmax.xlane.f32.xlu0 %v2356
  %v2358 = vpop.xlane.xlu0 %2357
  %v2359 = vsel %vm452, %v2344, -inf
  %2360 = vmax.xlane.f32.xlu0 %v2359
  %v2361 = vpop.xlane.xlu0 %2360
  %v2362 = vsub.f32 %v2334, %v2349
  %v2363 = vsub.f32 %v2336, %v2352
  %v2364 = vsub.f32 %v2339, %v2355
  %v2365 = vsub.f32 %v2341, %v2358
  %v2366 = vsub.f32 %v2344, %v2361
  %v2367 = vmul.f32 %v2362, 1.442695
  %v2368 = vpow.pop %v2367
  %v2369 = vmul.f32 %v2363, 1.442695
  %v2370 = vpow.pop %v2369
  %v2371 = vmul.f32 %v2364, 1.442695
  %v2372 = vpow.pop %v2371
  %v2373 = vmul.f32 %v2365, 1.442695
  %v2374 = vpow.pop %v2373
  %v2375 = vmul.f32 %v2366, 1.442695
  %v2376 = vpow.pop %v2375
  %v2377 = vsel %vm439, %v2368, 0.0
  %2378 = vadd.xlane.f32.xlu0 %v2377
  %v2379 = vpop.xlane.xlu0 %2378
  %v2380 = vsel %vm439, %v2370, 0.0
  %2381 = vadd.xlane.f32.xlu0 %v2380
  %v2382 = vpop.xlane.xlu0 %2381
  %v2383 = vsel %vm439, %v2372, 0.0
  %2384 = vadd.xlane.f32.xlu0 %v2383
  %v2385 = vpop.xlane.xlu0 %2384
  %v2386 = vsel %vm439, %v2374, 0.0
  %2387 = vadd.xlane.f32.xlu0 %v2386
  %v2388 = vpop.xlane.xlu0 %2387
  %v2389 = vsel %vm452, %v2376, 0.0
  %2390 = vadd.xlane.f32.xlu0 %v2389
  %v2391 = vpop.xlane.xlu0 %2390
  %v2392 = vrcp.pop %v2379
  %v2393 = vmul.f32 %v2379, %v2392
  %v2394 = vsub.f32 1.0, %v2393
  %v2395 = vmul.f32 %v2392, %v2394
  %v2396 = vadd.f32 %v2392, %v2395
  %vm2397 = vweird.f32 %v2379
  %vm2398 = vweird.f32 %v2392
  %vm2399 = vmor %vm2397, %vm2398
  %v2400 = vsel %vm2399, %v2392, %v2396
  %v2401 = vand.u32 2147483647, %v2379
  %vm2402 = vcmp.eq.f32.partialorder %v2401, 8.507059e+37
  %v2403 = vand.u32 %v2379, 2147483648
  %v2404 = vor.u32 1.1754944e-38, %v2403
  %v2405 = vsel %vm2402, %v2404, %v2400
  %v2406 = vmul.f32 %v2368, %v2405
  %v2407 = vrcp.pop %v2382
  %v2408 = vmul.f32 %v2382, %v2407
  %v2409 = vsub.f32 1.0, %v2408
  %v2410 = vmul.f32 %v2407, %v2409
  %v2411 = vadd.f32 %v2407, %v2410
  %vm2412 = vweird.f32 %v2382
  %vm2413 = vweird.f32 %v2407
  %vm2414 = vmor %vm2412, %vm2413
  %v2415 = vsel %vm2414, %v2407, %v2411
  %v2416 = vand.u32 2147483647, %v2382
  %vm2417 = vcmp.eq.f32.partialorder %v2416, 8.507059e+37
  %v2418 = vand.u32 %v2382, 2147483648
  %v2419 = vor.u32 1.1754944e-38, %v2418
  %v2420 = vsel %vm2417, %v2419, %v2415
  %v2421 = vmul.f32 %v2370, %v2420
  %v2422 = vrcp.pop %v2385
  %v2423 = vmul.f32 %v2385, %v2422
  %v2424 = vsub.f32 1.0, %v2423
  %v2425 = vmul.f32 %v2422, %v2424
  %v2426 = vadd.f32 %v2422, %v2425
  %vm2427 = vweird.f32 %v2385
  %vm2428 = vweird.f32 %v2422
  %vm2429 = vmor %vm2427, %vm2428
  %v2430 = vsel %vm2429, %v2422, %v2426
  %v2431 = vand.u32 2147483647, %v2385
  %vm2432 = vcmp.eq.f32.partialorder %v2431, 8.507059e+37
  %v2433 = vand.u32 %v2385, 2147483648
  %v2434 = vor.u32 1.1754944e-38, %v2433
  %v2435 = vsel %vm2432, %v2434, %v2430
  %v2436 = vmul.f32 %v2372, %v2435
  %v2437 = vrcp.pop %v2388
  %v2438 = vmul.f32 %v2388, %v2437
  %v2439 = vsub.f32 1.0, %v2438
  %v2440 = vmul.f32 %v2437, %v2439
  %v2441 = vadd.f32 %v2437, %v2440
  %vm2442 = vweird.f32 %v2388
  %vm2443 = vweird.f32 %v2437
  %vm2444 = vmor %vm2442, %vm2443
  %v2445 = vsel %vm2444, %v2437, %v2441
  %v2446 = vand.u32 2147483647, %v2388
  %vm2447 = vcmp.eq.f32.partialorder %v2446, 8.507059e+37
  %v2448 = vand.u32 %v2388, 2147483648
  %v2449 = vor.u32 1.1754944e-38, %v2448
  %v2450 = vsel %vm2447, %v2449, %v2445
  %v2451 = vmul.f32 %v2374, %v2450
  %v2452 = vrcp.pop %v2391
  %v2453 = vmul.f32 %v2391, %v2452
  %v2454 = vsub.f32 1.0, %v2453
  %v2455 = vmul.f32 %v2452, %v2454
  %v2456 = vadd.f32 %v2452, %v2455
  %vm2457 = vweird.f32 %v2391
  %vm2458 = vweird.f32 %v2452
  %vm2459 = vmor %vm2457, %vm2458
  %v2460 = vsel %vm2459, %v2452, %v2456
  %v2461 = vand.u32 2147483647, %v2391
  %vm2462 = vcmp.eq.f32.partialorder %v2461, 8.507059e+37
  %v2463 = vand.u32 %v2391, 2147483648
  %v2464 = vor.u32 1.1754944e-38, %v2463
  %v2465 = vsel %vm2462, %v2464, %v2460
  %v2466 = vmul.f32 %v2376, %v2465
  %v2467 = vpack.c.bf16 %v2421, %v2406
  %v2468 = vpack.c.bf16 %v2451, %v2436
  %v2469 = vpack.c.bf16 %v2466, %v2466
  %2470 = vrot.lane.b32.xlu0 %v1853, 48
  %v2471 = vpop.permute.xlu0 %2470
  %2472 = vrot.lane.b32.xlu0 %v1854, 48
  %v2473 = vpop.permute.xlu0 %2472
  %2474 = vrot.lane.b32.xlu0 %v1855, 48
  %v2475 = vpop.permute.xlu0 %2474
  %v2479 = vsel %vm439, %v2467, 0
  %v2482 = vsel %vm439, %v2468, 0
  %v2485 = vsel %vm439, %v2469, 0
  %v2488 = vsel %vm581, %v2475, 0
  %2490 = vmatpush.bf16.msra.mxu0 0
  %2491 = vmatpush.bf16.msra.mxu0 0
  %2492 = vmatpush.bf16.msra.mxu0 0
  %2493 = vmatpush.bf16.msra.mxu0 0
  %2494 = vmatpush.bf16.msra.mxu0 0
  %2495 = vmatpush.bf16.msra.mxu0 %v2488
  %2496 = vmatpush.bf16.msra.mxu0 %v2473
  %2497 = vmatpush.bf16.msra.mxu0 %v2471
  %2498 = vmatmul.bf16.gmra.mxu0 %v2479
  %v2499 = vpop.f32.mrf.mxu0
  %v2500 = vadd.f32 0.0, %v2499
  %v2501 = vpop.f32.mrf.mxu0
  %v2502 = vadd.f32 0.0, %v2501
  %2503 = vmatmul.bf16.gmra.mxu0 %v2482
  %v2504 = vpop.f32.mrf.mxu0
  %v2505 = vadd.f32 0.0, %v2504
  %v2506 = vpop.f32.mrf.mxu0
  %v2507 = vadd.f32 0.0, %v2506
  %2508 = vmatmul.bf16.gmra.mxu0 %v2485
  %v2509 = vpop.f32.mrf.mxu0
  %v2510 = vadd.f32 0.0, %v2509
  %v2511 = vpop.f32.mrf.mxu0
  %2512 = vdwg.mxu0
  %2513 = vrot.lane.b32.xlu0 %v1850, 104
  %v2514 = vpop.permute.xlu0 %2513
  %2515 = vrot.lane.b32.xlu0 %v1851, 104
  %v2516 = vpop.permute.xlu0 %2515
  %2517 = vrot.lane.b32.xlu0 %v1852, 104
  %v2518 = vpop.permute.xlu0 %2517
  %2519 = vrot.lane.b32.xlu0 %v1853, 72
  %v2520 = vpop.permute.xlu0 %2519
  %2521 = vrot.lane.b32.xlu0 %v1854, 72
  %v2522 = vpop.permute.xlu0 %2521
  %2523 = vrot.lane.b32.xlu0 %v1855, 72
  %v2524 = vpop.permute.xlu0 %2523
  %v2526 = vsel %vm397, %v2514, 0
  %v2529 = vsel %vm397, %v2516, 0
  %v2532 = vsel %vm397, %v2518, 0
  %v2535 = vsel %vm397, %v2520, 0
  %v2538 = vsel %vm397, %v2522, 0
  %v2541 = vsel %vm397, %v2524, 0
  %2543 = vmatpush.bf16.xpose.msra.mxu0 0
  %2544 = vmatpush.bf16.xpose.msra.mxu0 0
  %2545 = vmatpush.bf16.xpose.msra.mxu0 0
  %2546 = vmatpush.bf16.xpose.msra.mxu0 0
  %2547 = vmatpush.bf16.xpose.msra.mxu0 0
  %2548 = vmatpush.bf16.xpose.msra.mxu0 %v2541
  %2549 = vmatpush.bf16.xpose.msra.mxu0 %v2538
  %2550 = vmatpush.bf16.xpose.msra.mxu0 %v2535
  %2551 = vmatmul.bf16.gmra.mxu0 %v2526
  %v2552 = vpop.f32.mrf.mxu0
  %v2553 = vadd.f32 %v190, %v2552
  %v2554 = vpop.f32.mrf.mxu0
  %v2555 = vadd.f32 %v191, %v2554
  %2556 = vmatmul.bf16.gmra.mxu0 %v2529
  %v2557 = vpop.f32.mrf.mxu0
  %v2558 = vadd.f32 %v192, %v2557
  %v2559 = vpop.f32.mrf.mxu0
  %v2560 = vadd.f32 %v193, %v2559
  %2561 = vmatmul.bf16.gmra.mxu0 %v2532
  %v2562 = vpop.f32.mrf.mxu0
  %v2563 = vadd.f32 %v194, %v2562
  %v2564 = vpop.f32.mrf.mxu0
  %2565 = vdwg.mxu0
  %v2566 = vsel %vm439, %v2553, -inf
  %2567 = vmax.xlane.f32.xlu0 %v2566
  %v2568 = vpop.xlane.xlu0 %2567
  %v2569 = vsel %vm439, %v2555, -inf
  %2570 = vmax.xlane.f32.xlu0 %v2569
  %v2571 = vpop.xlane.xlu0 %2570
  %v2572 = vsel %vm439, %v2558, -inf
  %2573 = vmax.xlane.f32.xlu0 %v2572
  %v2574 = vpop.xlane.xlu0 %2573
  %v2575 = vsel %vm439, %v2560, -inf
  %2576 = vmax.xlane.f32.xlu0 %v2575
  %v2577 = vpop.xlane.xlu0 %2576
  %v2578 = vsel %vm452, %v2563, -inf
  %2579 = vmax.xlane.f32.xlu0 %v2578
  %v2580 = vpop.xlane.xlu0 %2579
  %v2581 = vsub.f32 %v2553, %v2568
  %v2582 = vsub.f32 %v2555, %v2571
  %v2583 = vsub.f32 %v2558, %v2574
  %v2584 = vsub.f32 %v2560, %v2577
  %v2585 = vsub.f32 %v2563, %v2580
  %v2586 = vmul.f32 %v2581, 1.442695
  %v2587 = vpow.pop %v2586
  %v2588 = vmul.f32 %v2582, 1.442695
  %v2589 = vpow.pop %v2588
  %v2590 = vmul.f32 %v2583, 1.442695
  %v2591 = vpow.pop %v2590
  %v2592 = vmul.f32 %v2584, 1.442695
  %v2593 = vpow.pop %v2592
  %v2594 = vmul.f32 %v2585, 1.442695
  %v2595 = vpow.pop %v2594
  %v2596 = vsel %vm439, %v2587, 0.0
  %2597 = vadd.xlane.f32.xlu0 %v2596
  %v2598 = vpop.xlane.xlu0 %2597
  %v2599 = vsel %vm439, %v2589, 0.0
  %2600 = vadd.xlane.f32.xlu0 %v2599
  %v2601 = vpop.xlane.xlu0 %2600
  %v2602 = vsel %vm439, %v2591, 0.0
  %2603 = vadd.xlane.f32.xlu0 %v2602
  %v2604 = vpop.xlane.xlu0 %2603
  %v2605 = vsel %vm439, %v2593, 0.0
  %2606 = vadd.xlane.f32.xlu0 %v2605
  %v2607 = vpop.xlane.xlu0 %2606
  %v2608 = vsel %vm452, %v2595, 0.0
  %2609 = vadd.xlane.f32.xlu0 %v2608
  %v2610 = vpop.xlane.xlu0 %2609
  %v2611 = vrcp.pop %v2598
  %v2612 = vmul.f32 %v2598, %v2611
  %v2613 = vsub.f32 1.0, %v2612
  %v2614 = vmul.f32 %v2611, %v2613
  %v2615 = vadd.f32 %v2611, %v2614
  %vm2616 = vweird.f32 %v2598
  %vm2617 = vweird.f32 %v2611
  %vm2618 = vmor %vm2616, %vm2617
  %v2619 = vsel %vm2618, %v2611, %v2615
  %v2620 = vand.u32 2147483647, %v2598
  %vm2621 = vcmp.eq.f32.partialorder %v2620, 8.507059e+37
  %v2622 = vand.u32 %v2598, 2147483648
  %v2623 = vor.u32 1.1754944e-38, %v2622
  %v2624 = vsel %vm2621, %v2623, %v2619
  %v2625 = vmul.f32 %v2587, %v2624
  %v2626 = vrcp.pop %v2601
  %v2627 = vmul.f32 %v2601, %v2626
  %v2628 = vsub.f32 1.0, %v2627
  %v2629 = vmul.f32 %v2626, %v2628
  %v2630 = vadd.f32 %v2626, %v2629
  %vm2631 = vweird.f32 %v2601
  %vm2632 = vweird.f32 %v2626
  %vm2633 = vmor %vm2631, %vm2632
  %v2634 = vsel %vm2633, %v2626, %v2630
  %v2635 = vand.u32 2147483647, %v2601
  %vm2636 = vcmp.eq.f32.partialorder %v2635, 8.507059e+37
  %v2637 = vand.u32 %v2601, 2147483648
  %v2638 = vor.u32 1.1754944e-38, %v2637
  %v2639 = vsel %vm2636, %v2638, %v2634
  %v2640 = vmul.f32 %v2589, %v2639
  %v2641 = vrcp.pop %v2604
  %v2642 = vmul.f32 %v2604, %v2641
  %v2643 = vsub.f32 1.0, %v2642
  %v2644 = vmul.f32 %v2641, %v2643
  %v2645 = vadd.f32 %v2641, %v2644
  %vm2646 = vweird.f32 %v2604
  %vm2647 = vweird.f32 %v2641
  %vm2648 = vmor %vm2646, %vm2647
  %v2649 = vsel %vm2648, %v2641, %v2645
  %v2650 = vand.u32 2147483647, %v2604
  %vm2651 = vcmp.eq.f32.partialorder %v2650, 8.507059e+37
  %v2652 = vand.u32 %v2604, 2147483648
  %v2653 = vor.u32 1.1754944e-38, %v2652
  %v2654 = vsel %vm2651, %v2653, %v2649
  %v2655 = vmul.f32 %v2591, %v2654
  %v2656 = vrcp.pop %v2607
  %v2657 = vmul.f32 %v2607, %v2656
  %v2658 = vsub.f32 1.0, %v2657
  %v2659 = vmul.f32 %v2656, %v2658
  %v2660 = vadd.f32 %v2656, %v2659
  %vm2661 = vweird.f32 %v2607
  %vm2662 = vweird.f32 %v2656
  %vm2663 = vmor %vm2661, %vm2662
  %v2664 = vsel %vm2663, %v2656, %v2660
  %v2665 = vand.u32 2147483647, %v2607
  %vm2666 = vcmp.eq.f32.partialorder %v2665, 8.507059e+37
  %v2667 = vand.u32 %v2607, 2147483648
  %v2668 = vor.u32 1.1754944e-38, %v2667
  %v2669 = vsel %vm2666, %v2668, %v2664
  %v2670 = vmul.f32 %v2593, %v2669
  %v2671 = vrcp.pop %v2610
  %v2672 = vmul.f32 %v2610, %v2671
  %v2673 = vsub.f32 1.0, %v2672
  %v2674 = vmul.f32 %v2671, %v2673
  %v2675 = vadd.f32 %v2671, %v2674
  %vm2676 = vweird.f32 %v2610
  %vm2677 = vweird.f32 %v2671
  %vm2678 = vmor %vm2676, %vm2677
  %v2679 = vsel %vm2678, %v2671, %v2675
  %v2680 = vand.u32 2147483647, %v2610
  %vm2681 = vcmp.eq.f32.partialorder %v2680, 8.507059e+37
  %v2682 = vand.u32 %v2610, 2147483648
  %v2683 = vor.u32 1.1754944e-38, %v2682
  %v2684 = vsel %vm2681, %v2683, %v2679
  %v2685 = vmul.f32 %v2595, %v2684
  %v2686 = vpack.c.bf16 %v2640, %v2625
  %v2687 = vpack.c.bf16 %v2670, %v2655
  %v2688 = vpack.c.bf16 %v2685, %v2685
  %2689 = vrot.lane.b32.xlu0 %v1853, 40
  %v2690 = vpop.permute.xlu0 %2689
  %2691 = vrot.lane.b32.xlu0 %v1854, 40
  %v2692 = vpop.permute.xlu0 %2691
  %2693 = vrot.lane.b32.xlu0 %v1855, 40
  %v2694 = vpop.permute.xlu0 %2693
  %v2698 = vsel %vm439, %v2686, 0
  %v2701 = vsel %vm439, %v2687, 0
  %v2704 = vsel %vm439, %v2688, 0
  %v2707 = vsel %vm581, %v2694, 0
  %2709 = vmatpush.bf16.msra.mxu0 0
  %2710 = vmatpush.bf16.msra.mxu0 0
  %2711 = vmatpush.bf16.msra.mxu0 0
  %2712 = vmatpush.bf16.msra.mxu0 0
  %2713 = vmatpush.bf16.msra.mxu0 0
  %2714 = vmatpush.bf16.msra.mxu0 %v2707
  %2715 = vmatpush.bf16.msra.mxu0 %v2692
  %2716 = vmatpush.bf16.msra.mxu0 %v2690
  %2717 = vmatmul.bf16.gmra.mxu0 %v2698
  %v2718 = vpop.f32.mrf.mxu0
  %v2719 = vadd.f32 0.0, %v2718
  %v2720 = vpop.f32.mrf.mxu0
  %v2721 = vadd.f32 0.0, %v2720
  %2722 = vmatmul.bf16.gmra.mxu0 %v2701
  %v2723 = vpop.f32.mrf.mxu0
  %v2724 = vadd.f32 0.0, %v2723
  %v2725 = vpop.f32.mrf.mxu0
  %v2726 = vadd.f32 0.0, %v2725
  %2727 = vmatmul.bf16.gmra.mxu0 %v2704
  %v2728 = vpop.f32.mrf.mxu0
  %v2729 = vadd.f32 0.0, %v2728
  %v2730 = vpop.f32.mrf.mxu0
  %2731 = vdwg.mxu0
  %2737 = vrot.lane.b32.xlu0 %v2281, 8
  %v2738 = vpop.permute.xlu0 %2737
  %2739 = vrot.lane.b32.xlu0 %v2283, 8
  %v2740 = vpop.permute.xlu0 %2739
  %2741 = vrot.lane.b32.xlu0 %v2286, 8
  %v2742 = vpop.permute.xlu0 %2741
  %2743 = vrot.lane.b32.xlu0 %v2288, 8
  %v2744 = vpop.permute.xlu0 %2743
  %2745 = vrot.lane.b32.xlu0 %v2291, 8
  %v2746 = vpop.permute.xlu0 %2745
  %2757 = vrot.lane.b32.xlu0 %v2500, 16
  %v2758 = vpop.permute.xlu0 %2757
  %2759 = vrot.lane.b32.xlu0 %v2502, 16
  %v2760 = vpop.permute.xlu0 %2759
  %2761 = vrot.lane.b32.xlu0 %v2505, 16
  %v2762 = vpop.permute.xlu0 %2761
  %2763 = vrot.lane.b32.xlu0 %v2507, 16
  %v2764 = vpop.permute.xlu0 %2763
  %2765 = vrot.lane.b32.xlu0 %v2510, 16
  %v2766 = vpop.permute.xlu0 %2765
  %2777 = vrot.lane.b32.xlu0 %v2719, 24
  %v2778 = vpop.permute.xlu0 %2777
  %2779 = vrot.lane.b32.xlu0 %v2721, 24
  %v2780 = vpop.permute.xlu0 %2779
  %2781 = vrot.lane.b32.xlu0 %v2724, 24
  %v2782 = vpop.permute.xlu0 %2781
  %2783 = vrot.lane.b32.xlu0 %v2726, 24
  %v2784 = vpop.permute.xlu0 %2783
  %2785 = vrot.lane.b32.xlu0 %v2729, 24
  %v2786 = vpop.permute.xlu0 %2785
  %v2792 = vsel %vm397, %v2059, %v2738
  %v2793 = vsel %vm397, %v2061, %v2740
  %v2794 = vsel %vm397, %v2064, %v2742
  %v2795 = vsel %vm397, %v2066, %v2744
  %v2796 = vsel %vm397, %v2069, %v2746
  %v2797 = vsel %vm1333, %v2792, %v2758
  %v2798 = vsel %vm1333, %v2793, %v2760
  %v2799 = vsel %vm1333, %v2794, %v2762
  %v2800 = vsel %vm1333, %v2795, %v2764
  %v2801 = vsel %vm1333, %v2796, %v2766
  %v2802 = vsel %vm1339, %v2797, %v2778
  %v2803 = vsel %vm1339, %v2798, %v2780
  %v2804 = vsel %vm1339, %v2799, %v2782
  %v2805 = vsel %vm1339, %v2800, %v2784
  %v2806 = vsel %vm1339, %v2801, %v2786
  %v2807 = vpack.c.bf16 %v2803, %v2802
  %v2808 = vpack.c.bf16 %v2805, %v2804
  %v2809 = vpack.c.bf16 %v2806, %v2806
  %v2810 = vld [vmem:[%s41] sm:$0xff]
  %v2811 = vld [vmem:[%s41 + $0x8] sm:$0xff]
  %v2812 = vld [vmem:[%s41 + $0x10] sm:$0xff]
  %v2813 = vld [vmem:[%s41 + $0x18] sm:$0xff]
  %v2814 = vpack.c.bf16 %v2811, %v2810
  %v2815 = vpack.c.bf16 %v2813, %v2812
  %v2816 = vld [vmem:[%s43] sm:$0x1]
  %v2818 = vperm.slane %v2816, 0
  %v2821 = vsel %vm197, %v2807, 0
  %v2824 = vsel %vm197, %v2808, 0
  %v2827 = vsel %vm197, %v2809, 0
  %2829 = vmatpush.bf16.msra.mxu0 0
  %2830 = vmatpush.bf16.msra.mxu0 0
  %2831 = vmatpush.bf16.msra.mxu0 0
  %2832 = vmatpush.bf16.msra.mxu0 0
  %2833 = vmatpush.bf16.msra.mxu0 0
  %2834 = vmatpush.bf16.msra.mxu0 0
  %2835 = vmatpush.bf16.msra.mxu0 %v2815
  %2836 = vmatpush.bf16.msra.mxu0 %v2814
  %2837 = vmatmul.bf16.gmra.mxu0 %v2821
  %v2838 = vpop.f32.mrf.mxu0
  %v2839 = vadd.f32 %v2818, %v2838
  %v2840 = vpop.f32.mrf.mxu0
  %v2841 = vadd.f32 %v2818, %v2840
  %2842 = vmatmul.bf16.gmra.mxu0 %v2824
  %v2843 = vpop.f32.mrf.mxu0
  %v2844 = vadd.f32 %v2818, %v2843
  %v2845 = vpop.f32.mrf.mxu0
  %v2846 = vadd.f32 %v2818, %v2845
  %2847 = vmatmul.bf16.gmra.mxu0 %v2827
  %v2848 = vpop.f32.mrf.mxu0
  %v2849 = vadd.f32 %v2818, %v2848
  %v2850 = vpop.f32.mrf.mxu0
  %2851 = vdwg.mxu0
  %v2852 = vadd.f32 %v1667, %v2839
  %v2853 = vadd.f32 %v1668, %v2841
  %v2854 = vadd.f32 %v1669, %v2844
  %v2855 = vadd.f32 %v1670, %v2846
  %v2856 = vadd.f32 %v1671, %v2849
  %v2857 = vld [vmem:[%s45] sm:$0x1]
  %v2858 = vld [vmem:[%s47] sm:$0x1]
  %v2859 = vsel %vm197, %v2852, 0.0
  %2860 = vadd.xlane.f32.xlu0 %v2859
  %v2861 = vpop.xlane.xlu0 %2860
  %v2862 = vsel %vm197, %v2853, 0.0
  %2863 = vadd.xlane.f32.xlu0 %v2862
  %v2864 = vpop.xlane.xlu0 %2863
  %v2865 = vsel %vm197, %v2854, 0.0
  %2866 = vadd.xlane.f32.xlu0 %v2865
  %v2867 = vpop.xlane.xlu0 %2866
  %v2868 = vsel %vm197, %v2855, 0.0
  %2869 = vadd.xlane.f32.xlu0 %v2868
  %v2870 = vpop.xlane.xlu0 %2869
  %v2871 = vsel %vm210, %v2856, 0.0
  %2872 = vadd.xlane.f32.xlu0 %v2871
  %v2873 = vpop.xlane.xlu0 %2872
  %v2874 = vmul.f32 %v2861, %v220
  %v2875 = vmul.f32 %v2864, %v220
  %v2876 = vmul.f32 %v2867, %v220
  %v2877 = vmul.f32 %v2870, %v220
  %v2878 = vmul.f32 %v2873, %v220
  %v2879 = vsub.f32 %v2852, %v2874
  %v2880 = vsub.f32 %v2853, %v2875
  %v2881 = vsub.f32 %v2854, %v2876
  %v2882 = vsub.f32 %v2855, %v2877
  %v2883 = vsub.f32 %v2856, %v2878
  %v2884 = vmul.f32 %v2879, %v2879
  %v2885 = vmul.f32 %v2880, %v2880
  %v2886 = vmul.f32 %v2881, %v2881
  %v2887 = vmul.f32 %v2882, %v2882
  %v2888 = vmul.f32 %v2883, %v2883
  %v2889 = vsel %vm197, %v2884, 0.0
  %2890 = vadd.xlane.f32.xlu0 %v2889
  %v2891 = vpop.xlane.xlu0 %2890
  %v2892 = vsel %vm197, %v2885, 0.0
  %2893 = vadd.xlane.f32.xlu0 %v2892
  %v2894 = vpop.xlane.xlu0 %2893
  %v2895 = vsel %vm197, %v2886, 0.0
  %2896 = vadd.xlane.f32.xlu0 %v2895
  %v2897 = vpop.xlane.xlu0 %2896
  %v2898 = vsel %vm197, %v2887, 0.0
  %2899 = vadd.xlane.f32.xlu0 %v2898
  %v2900 = vpop.xlane.xlu0 %2899
  %v2901 = vsel %vm210, %v2888, 0.0
  %2902 = vadd.xlane.f32.xlu0 %v2901
  %v2903 = vpop.xlane.xlu0 %2902
  %v2904 = vmul.f32 %v2891, %v220
  %v2905 = vmul.f32 %v2894, %v220
  %v2906 = vmul.f32 %v2897, %v220
  %v2907 = vmul.f32 %v2900, %v220
  %v2908 = vmul.f32 %v2903, %v220
  %v2909 = vadd.f32 %v2904, 1e-12
  %v2910 = vadd.f32 %v2905, 1e-12
  %v2911 = vadd.f32 %v2906, 1e-12
  %v2912 = vadd.f32 %v2907, 1e-12
  %v2913 = vadd.f32 %v2908, 1e-12
  %v2914 = vrsqrt.pop %v2909
  %v2915 = vmul.f32 %v2914, %v2909
  %v2916 = vmul.f32 %v2915, %v2914
  %v2917 = vmul.f32 0.5, %v2916
  %v2918 = vsub.f32 1.5, %v2917
  %v2919 = vmul.f32 %v2914, %v2918
  %vm2920 = vweird.f32 %v2909
  %vm2921 = vweird.f32 %v2914
  %vm2922 = vmor %vm2920, %vm2921
  %v2923 = vsel %vm2922, %v2914, %v2919
  %v2924 = vrsqrt.pop %v2910
  %v2925 = vmul.f32 %v2924, %v2910
  %v2926 = vmul.f32 %v2925, %v2924
  %v2927 = vmul.f32 0.5, %v2926
  %v2928 = vsub.f32 1.5, %v2927
  %v2929 = vmul.f32 %v2924, %v2928
  %vm2930 = vweird.f32 %v2910
  %vm2931 = vweird.f32 %v2924
  %vm2932 = vmor %vm2930, %vm2931
  %v2933 = vsel %vm2932, %v2924, %v2929
  %v2934 = vrsqrt.pop %v2911
  %v2935 = vmul.f32 %v2934, %v2911
  %v2936 = vmul.f32 %v2935, %v2934
  %v2937 = vmul.f32 0.5, %v2936
  %v2938 = vsub.f32 1.5, %v2937
  %v2939 = vmul.f32 %v2934, %v2938
  %vm2940 = vweird.f32 %v2911
  %vm2941 = vweird.f32 %v2934
  %vm2942 = vmor %vm2940, %vm2941
  %v2943 = vsel %vm2942, %v2934, %v2939
  %v2944 = vrsqrt.pop %v2912
  %v2945 = vmul.f32 %v2944, %v2912
  %v2946 = vmul.f32 %v2945, %v2944
  %v2947 = vmul.f32 0.5, %v2946
  %v2948 = vsub.f32 1.5, %v2947
  %v2949 = vmul.f32 %v2944, %v2948
  %vm2950 = vweird.f32 %v2912
  %vm2951 = vweird.f32 %v2944
  %vm2952 = vmor %vm2950, %vm2951
  %v2953 = vsel %vm2952, %v2944, %v2949
  %v2954 = vrsqrt.pop %v2913
  %v2955 = vmul.f32 %v2954, %v2913
  %v2956 = vmul.f32 %v2955, %v2954
  %v2957 = vmul.f32 0.5, %v2956
  %v2958 = vsub.f32 1.5, %v2957
  %v2959 = vmul.f32 %v2954, %v2958
  %vm2960 = vweird.f32 %v2913
  %vm2961 = vweird.f32 %v2954
  %vm2962 = vmor %vm2960, %vm2961
  %v2963 = vsel %vm2962, %v2954, %v2959
  %v2964 = vmul.f32 %v2879, %v2923
  %v2965 = vmul.f32 %v2880, %v2933
  %v2966 = vmul.f32 %v2881, %v2943
  %v2967 = vmul.f32 %v2882, %v2953
  %v2968 = vmul.f32 %v2883, %v2963
  %v2970 = vperm.slane %v2857, 0
  %v2972 = vmul.f32 %v2964, %v2970
  %v2973 = vmul.f32 %v2965, %v2970
  %v2974 = vmul.f32 %v2966, %v2970
  %v2975 = vmul.f32 %v2967, %v2970
  %v2976 = vmul.f32 %v2968, %v2970
  %v2978 = vperm.slane %v2858, 0
  %v2980 = vadd.f32 %v2972, %v2978
  %v2981 = vadd.f32 %v2973, %v2978
  %v2982 = vadd.f32 %v2974, %v2978
  %v2983 = vadd.f32 %v2975, %v2978
  %v2984 = vadd.f32 %v2976, %v2978
  %v2985 = vpack.c.bf16 %v2981, %v2980
  %v2986 = vpack.c.bf16 %v2983, %v2982
  %v2987 = vpack.c.bf16 %v2984, %v2984
  %v2988 = vld [vmem:[%s49] sm:$0xff]
  %v2989 = vld [vmem:[%s49 + $0x8] sm:$0xff]
  %v2990 = vld [vmem:[%s49 + $0x10] sm:$0xff]
  %v2991 = vld [vmem:[%s49 + $0x18] sm:$0xff]
  %v2992 = vpack.c.bf16 %v2989, %v2988
  %v2993 = vpack.c.bf16 %v2991, %v2990
  %v2994 = vld [vmem:[%s51] sm:$0x1]
  %v2996 = vperm.slane %v2994, 0
  %v2999 = vsel %vm197, %v2985, 0
  %v3002 = vsel %vm197, %v2986, 0
  %v3005 = vsel %vm197, %v2987, 0
  %3007 = vmatpush.bf16.msra.mxu0 0
  %3008 = vmatpush.bf16.msra.mxu0 0
  %3009 = vmatpush.bf16.msra.mxu0 0
  %3010 = vmatpush.bf16.msra.mxu0 0
  %3011 = vmatpush.bf16.msra.mxu0 0
  %3012 = vmatpush.bf16.msra.mxu0 0
  %3013 = vmatpush.bf16.msra.mxu0 %v2993
  %3014 = vmatpush.bf16.msra.mxu0 %v2992
  %3015 = vmatmul.bf16.gmra.mxu0 %v2999
  %v3016 = vpop.f32.mrf.mxu0
  %v3017 = vadd.f32 %v2996, %v3016
  %v3018 = vpop.f32.mrf.mxu0
  %v3019 = vadd.f32 %v2996, %v3018
  %3020 = vmatmul.bf16.gmra.mxu0 %v3002
  %v3021 = vpop.f32.mrf.mxu0
  %v3022 = vadd.f32 %v2996, %v3021
  %v3023 = vpop.f32.mrf.mxu0
  %v3024 = vadd.f32 %v2996, %v3023
  %3025 = vmatmul.bf16.gmra.mxu0 %v3005
  %v3026 = vpop.f32.mrf.mxu0
  %v3027 = vadd.f32 %v2996, %v3026
  %v3028 = vpop.f32.mrf.mxu0
  %3029 = vdwg.mxu0
  %v3030 = vmul.f32 %v3017, %v3017
  %v3031 = vmul.f32 %v3019, %v3019
  %v3032 = vmul.f32 %v3022, %v3022
  %v3033 = vmul.f32 %v3024, %v3024
  %v3034 = vmul.f32 %v3027, %v3027
  %v3035 = vmul.f32 %v3017, %v3030
  %v3036 = vmul.f32 %v3019, %v3031
  %v3037 = vmul.f32 %v3022, %v3032
  %v3038 = vmul.f32 %v3024, %v3033
  %v3039 = vmul.f32 %v3027, %v3034
  %v3040 = vmul.f32 %v3035, 0.044715
  %v3041 = vmul.f32 %v3036, 0.044715
  %v3042 = vmul.f32 %v3037, 0.044715
  %v3043 = vmul.f32 %v3038, 0.044715
  %v3044 = vmul.f32 %v3039, 0.044715
  %v3045 = vadd.f32 %v3017, %v3040
  %v3046 = vadd.f32 %v3019, %v3041
  %v3047 = vadd.f32 %v3022, %v3042
  %v3048 = vadd.f32 %v3024, %v3043
  %v3049 = vadd.f32 %v3027, %v3044
  %v3050 = vmul.f32 %v3045, 0.7978846
  %v3051 = vmul.f32 %v3046, 0.7978846
  %v3052 = vmul.f32 %v3047, 0.7978846
  %v3053 = vmul.f32 %v3048, 0.7978846
  %v3054 = vmul.f32 %v3049, 0.7978846
  %v3055 = vtanh.pop %v3050
  %v3056 = vtanh.pop %v3051
  %v3057 = vtanh.pop %v3052
  %v3058 = vtanh.pop %v3053
  %v3059 = vtanh.pop %v3054
  %v3060 = vadd.f32 %v3055, 1.0
  %v3061 = vadd.f32 %v3056, 1.0
  %v3062 = vadd.f32 %v3057, 1.0
  %v3063 = vadd.f32 %v3058, 1.0
  %v3064 = vadd.f32 %v3059, 1.0
  %v3065 = vmul.f32 %v3060, 0.5
  %v3066 = vmul.f32 %v3061, 0.5
  %v3067 = vmul.f32 %v3062, 0.5
  %v3068 = vmul.f32 %v3063, 0.5
  %v3069 = vmul.f32 %v3064, 0.5
  %v3070 = vmul.f32 %v3017, %v3065
  %v3071 = vmul.f32 %v3019, %v3066
  %v3072 = vmul.f32 %v3022, %v3067
  %v3073 = vmul.f32 %v3024, %v3068
  %v3074 = vmul.f32 %v3027, %v3069
  %v3075 = vpack.c.bf16 %v3071, %v3070
  %v3076 = vpack.c.bf16 %v3073, %v3072
  %v3077 = vpack.c.bf16 %v3074, %v3074
  %v3078 = vld [vmem:[%s53] sm:$0xff]
  %v3079 = vld [vmem:[%s53 + $0x8] sm:$0xff]
  %v3080 = vld [vmem:[%s53 + $0x10] sm:$0xff]
  %v3081 = vld [vmem:[%s53 + $0x18] sm:$0xff]
  %v3082 = vld [vmem:[%s53 + $0x20] sm:$0xff]
  %v3083 = vld [vmem:[%s53 + $0x28] sm:$0xff]
  %v3084 = vld [vmem:[%s53 + $0x30] sm:$0xff]
  %v3085 = vld [vmem:[%s53 + $0x38] sm:$0xff]
  %v3086 = vld [vmem:[%s53 + $0x40] sm:$0xff]
  %v3087 = vld [vmem:[%s53 + $0x48] sm:$0xff]
  %v3088 = vld [vmem:[%s53 + $0x50] sm:$0xff]
  %v3089 = vld [vmem:[%s53 + $0x58] sm:$0xff]
  %v3090 = vld [vmem:[%s53 + $0x60] sm:$0xff]
  %v3091 = vld [vmem:[%s53 + $0x68] sm:$0xff]
  %v3092 = vld [vmem:[%s53 + $0x70] sm:$0xff]
  %v3093 = vld [vmem:[%s53 + $0x78] sm:$0xff]
  %v3094 = vpack.c.bf16 %v3079, %v3078
  %v3095 = vpack.c.bf16 %v3081, %v3080
  %v3096 = vpack.c.bf16 %v3083, %v3082
  %v3097 = vpack.c.bf16 %v3085, %v3084
  %v3098 = vpack.c.bf16 %v3087, %v3086
  %v3099 = vpack.c.bf16 %v3089, %v3088
  %v3100 = vpack.c.bf16 %v3091, %v3090
  %v3101 = vpack.c.bf16 %v3093, %v3092
  %v3102 = vld [vmem:[%s55] sm:$0x1]
  %v3104 = vperm.slane %v3102, 0
  %3106 = vmatpush.bf16.msra.mxu0 %v3101
  %3107 = vmatpush.bf16.msra.mxu0 %v3100
  %3108 = vmatpush.bf16.msra.mxu0 %v3099
  %3109 = vmatpush.bf16.msra.mxu0 %v3098
  %3110 = vmatpush.bf16.msra.mxu0 %v3097
  %3111 = vmatpush.bf16.msra.mxu0 %v3096
  %3112 = vmatpush.bf16.msra.mxu0 %v3095
  %3113 = vmatpush.bf16.msra.mxu0 %v3094
  %3114 = vmatmul.bf16.gmra.mxu0 %v3075
  %v3115 = vpop.f32.mrf.mxu0
  %v3116 = vadd.f32 %v3104, %v3115
  %v3117 = vpop.f32.mrf.mxu0
  %v3118 = vadd.f32 %v3104, %v3117
  %3119 = vmatmul.bf16.gmra.mxu0 %v3076
  %v3120 = vpop.f32.mrf.mxu0
  %v3121 = vadd.f32 %v3104, %v3120
  %v3122 = vpop.f32.mrf.mxu0
  %v3123 = vadd.f32 %v3104, %v3122
  %3124 = vmatmul.bf16.gmra.mxu0 %v3077
  %v3125 = vpop.f32.mrf.mxu0
  %v3126 = vadd.f32 %v3104, %v3125
  %v3127 = vpop.f32.mrf.mxu0
  %3128 = vdwg.mxu0
  %v3129 = vadd.f32 %v2852, %v3116
  %v3130 = vadd.f32 %v2853, %v3118
  %v3131 = vadd.f32 %v2854, %v3121
  %v3132 = vadd.f32 %v2855, %v3123
  %v3133 = vadd.f32 %v2856, %v3126
  %v3134 = vld [vmem:[%s57] sm:$0x1]
  %v3135 = vld [vmem:[%s59] sm:$0x1]
  %v3136 = vsel %vm197, %v3129, 0.0
  %3137 = vadd.xlane.f32.xlu0 %v3136
  %v3138 = vpop.xlane.xlu0 %3137
  %v3139 = vsel %vm197, %v3130, 0.0
  %3140 = vadd.xlane.f32.xlu0 %v3139
  %v3141 = vpop.xlane.xlu0 %3140
  %v3142 = vsel %vm197, %v3131, 0.0
  %3143 = vadd.xlane.f32.xlu0 %v3142
  %v3144 = vpop.xlane.xlu0 %3143
  %v3145 = vsel %vm197, %v3132, 0.0
  %3146 = vadd.xlane.f32.xlu0 %v3145
  %v3147 = vpop.xlane.xlu0 %3146
  %v3148 = vsel %vm210, %v3133, 0.0
  %3149 = vadd.xlane.f32.xlu0 %v3148
  %v3150 = vpop.xlane.xlu0 %3149
  %v3151 = vmul.f32 %v3138, %v220
  %v3152 = vmul.f32 %v3141, %v220
  %v3153 = vmul.f32 %v3144, %v220
  %v3154 = vmul.f32 %v3147, %v220
  %v3155 = vmul.f32 %v3150, %v220
  %v3156 = vsub.f32 %v3129, %v3151
  %v3157 = vsub.f32 %v3130, %v3152
  %v3158 = vsub.f32 %v3131, %v3153
  %v3159 = vsub.f32 %v3132, %v3154
  %v3160 = vsub.f32 %v3133, %v3155
  %v3161 = vmul.f32 %v3156, %v3156
  %v3162 = vmul.f32 %v3157, %v3157
  %v3163 = vmul.f32 %v3158, %v3158
  %v3164 = vmul.f32 %v3159, %v3159
  %v3165 = vmul.f32 %v3160, %v3160
  %v3166 = vsel %vm197, %v3161, 0.0
  %3167 = vadd.xlane.f32.xlu0 %v3166
  %v3168 = vpop.xlane.xlu0 %3167
  %v3169 = vsel %vm197, %v3162, 0.0
  %3170 = vadd.xlane.f32.xlu0 %v3169
  %v3171 = vpop.xlane.xlu0 %3170
  %v3172 = vsel %vm197, %v3163, 0.0
  %3173 = vadd.xlane.f32.xlu0 %v3172
  %v3174 = vpop.xlane.xlu0 %3173
  %v3175 = vsel %vm197, %v3164, 0.0
  %3176 = vadd.xlane.f32.xlu0 %v3175
  %v3177 = vpop.xlane.xlu0 %3176
  %v3178 = vsel %vm210, %v3165, 0.0
  %3179 = vadd.xlane.f32.xlu0 %v3178
  %v3180 = vpop.xlane.xlu0 %3179
  %v3181 = vmul.f32 %v3168, %v220
  %v3182 = vmul.f32 %v3171, %v220
  %v3183 = vmul.f32 %v3174, %v220
  %v3184 = vmul.f32 %v3177, %v220
  %v3185 = vmul.f32 %v3180, %v220
  %v3186 = vadd.f32 %v3181, 1e-12
  %v3187 = vadd.f32 %v3182, 1e-12
  %v3188 = vadd.f32 %v3183, 1e-12
  %v3189 = vadd.f32 %v3184, 1e-12
  %v3190 = vadd.f32 %v3185, 1e-12
  %v3191 = vrsqrt.pop %v3186
  %v3192 = vmul.f32 %v3191, %v3186
  %v3193 = vmul.f32 %v3192, %v3191
  %v3194 = vmul.f32 0.5, %v3193
  %v3195 = vsub.f32 1.5, %v3194
  %v3196 = vmul.f32 %v3191, %v3195
  %vm3197 = vweird.f32 %v3186
  %vm3198 = vweird.f32 %v3191
  %vm3199 = vmor %vm3197, %vm3198
  %v3200 = vsel %vm3199, %v3191, %v3196
  %v3201 = vrsqrt.pop %v3187
  %v3202 = vmul.f32 %v3201, %v3187
  %v3203 = vmul.f32 %v3202, %v3201
  %v3204 = vmul.f32 0.5, %v3203
  %v3205 = vsub.f32 1.5, %v3204
  %v3206 = vmul.f32 %v3201, %v3205
  %vm3207 = vweird.f32 %v3187
  %vm3208 = vweird.f32 %v3201
  %vm3209 = vmor %vm3207, %vm3208
  %v3210 = vsel %vm3209, %v3201, %v3206
  %v3211 = vrsqrt.pop %v3188
  %v3212 = vmul.f32 %v3211, %v3188
  %v3213 = vmul.f32 %v3212, %v3211
  %v3214 = vmul.f32 0.5, %v3213
  %v3215 = vsub.f32 1.5, %v3214
  %v3216 = vmul.f32 %v3211, %v3215
  %vm3217 = vweird.f32 %v3188
  %vm3218 = vweird.f32 %v3211
  %vm3219 = vmor %vm3217, %vm3218
  %v3220 = vsel %vm3219, %v3211, %v3216
  %v3221 = vrsqrt.pop %v3189
  %v3222 = vmul.f32 %v3221, %v3189
  %v3223 = vmul.f32 %v3222, %v3221
  %v3224 = vmul.f32 0.5, %v3223
  %v3225 = vsub.f32 1.5, %v3224
  %v3226 = vmul.f32 %v3221, %v3225
  %vm3227 = vweird.f32 %v3189
  %vm3228 = vweird.f32 %v3221
  %vm3229 = vmor %vm3227, %vm3228
  %v3230 = vsel %vm3229, %v3221, %v3226
  %v3231 = vrsqrt.pop %v3190
  %v3232 = vmul.f32 %v3231, %v3190
  %v3233 = vmul.f32 %v3232, %v3231
  %v3234 = vmul.f32 0.5, %v3233
  %v3235 = vsub.f32 1.5, %v3234
  %v3236 = vmul.f32 %v3231, %v3235
  %vm3237 = vweird.f32 %v3190
  %vm3238 = vweird.f32 %v3231
  %vm3239 = vmor %vm3237, %vm3238
  %v3240 = vsel %vm3239, %v3231, %v3236
  %v3241 = vmul.f32 %v3156, %v3200
  %v3242 = vmul.f32 %v3157, %v3210
  %v3243 = vmul.f32 %v3158, %v3220
  %v3244 = vmul.f32 %v3159, %v3230
  %v3245 = vmul.f32 %v3160, %v3240
  %v3247 = vperm.slane %v3134, 0
  %v3249 = vmul.f32 %v3241, %v3247
  %v3250 = vmul.f32 %v3242, %v3247
  %v3251 = vmul.f32 %v3243, %v3247
  %v3252 = vmul.f32 %v3244, %v3247
  %v3253 = vmul.f32 %v3245, %v3247
  %v3255 = vperm.slane %v3135, 0
  %v3257 = vadd.f32 %v3249, %v3255
  %v3258 = vadd.f32 %v3250, %v3255
  %v3259 = vadd.f32 %v3251, %v3255
  %v3260 = vadd.f32 %v3252, %v3255
  %v3261 = vadd.f32 %v3253, %v3255
  %v3262 = vpack.c.bf16 %v3258, %v3257
  %v3263 = vpack.c.bf16 %v3260, %v3259
  %v3264 = vpack.c.bf16 %v3261, %v3261
  %v3265 = vld [vmem:[%s61] sm:$0xff]
  %v3266 = vld [vmem:[%s61 + $0x8] sm:$0xff]
  %v3267 = vld [vmem:[%s61 + $0x10] sm:$0xff]
  %v3268 = vld [vmem:[%s61 + $0x18] sm:$0xff]
  %v3269 = vpack.c.bf16 %v3266, %v3265
  %v3270 = vpack.c.bf16 %v3268, %v3267
  %v3271 = vld [vmem:[%s63] sm:$0x1]
  %v3273 = vperm.slane %v3271, 0
  %v3276 = vsel %vm197, %v3262, 0
  %v3279 = vsel %vm197, %v3263, 0
  %v3282 = vsel %vm197, %v3264, 0
  %3284 = vmatpush.bf16.msra.mxu0 0
  %3285 = vmatpush.bf16.msra.mxu0 0
  %3286 = vmatpush.bf16.msra.mxu0 0
  %3287 = vmatpush.bf16.msra.mxu0 0
  %3288 = vmatpush.bf16.msra.mxu0 0
  %3289 = vmatpush.bf16.msra.mxu0 0
  %3290 = vmatpush.bf16.msra.mxu0 %v3270
  %3291 = vmatpush.bf16.msra.mxu0 %v3269
  %3292 = vmatmul.bf16.gmra.mxu0 %v3276
  %v3293 = vpop.f32.mrf.mxu0
  %v3294 = vadd.f32 %v3273, %v3293
  %v3295 = vpop.f32.mrf.mxu0
  %v3296 = vadd.f32 %v3273, %v3295
  %3297 = vmatmul.bf16.gmra.mxu0 %v3279
  %v3298 = vpop.f32.mrf.mxu0
  %v3299 = vadd.f32 %v3273, %v3298
  %v3300 = vpop.f32.mrf.mxu0
  %v3301 = vadd.f32 %v3273, %v3300
  %3302 = vmatmul.bf16.gmra.mxu0 %v3282
  %v3303 = vpop.f32.mrf.mxu0
  %v3304 = vadd.f32 %v3273, %v3303
  %v3305 = vpop.f32.mrf.mxu0
  %3306 = vdwg.mxu0
  %3307 = vmax.xlane.f32.xlu0 %v3294
  %v3308 = vpop.xlane.xlu0 %3307
  %3309 = vmax.xlane.f32.xlu0 %v3296
  %v3310 = vpop.xlane.xlu0 %3309
  %3311 = vmax.xlane.f32.xlu0 %v3299
  %v3312 = vpop.xlane.xlu0 %3311
  %3313 = vmax.xlane.f32.xlu0 %v3301
  %v3314 = vpop.xlane.xlu0 %3313
  %vm3315 = vcmask 1041408
  %v3316 = vsel %vm3315, %v3304, -inf
  %3317 = vmax.xlane.f32.xlu0 %v3316
  %v3318 = vpop.xlane.xlu0 %3317
  %v3319 = vsub.f32 %v3294, %v3308
  %v3320 = vsub.f32 %v3296, %v3310
  %v3321 = vsub.f32 %v3299, %v3312
  %v3322 = vsub.f32 %v3301, %v3314
  %v3323 = vsub.f32 %v3304, %v3318
  %v3324 = vmul.f32 %v3319, 1.442695
  %v3325 = vpow.pop %v3324
  %v3326 = vmul.f32 %v3320, 1.442695
  %v3327 = vpow.pop %v3326
  %v3328 = vmul.f32 %v3321, 1.442695
  %v3329 = vpow.pop %v3328
  %v3330 = vmul.f32 %v3322, 1.442695
  %v3331 = vpow.pop %v3330
  %v3332 = vmul.f32 %v3323, 1.442695
  %v3333 = vpow.pop %v3332
  %3334 = vadd.xlane.f32.xlu0 %v3325
  %v3335 = vpop.xlane.xlu0 %3334
  %3336 = vadd.xlane.f32.xlu0 %v3327
  %v3337 = vpop.xlane.xlu0 %3336
  %3338 = vadd.xlane.f32.xlu0 %v3329
  %v3339 = vpop.xlane.xlu0 %3338
  %3340 = vadd.xlane.f32.xlu0 %v3331
  %v3341 = vpop.xlane.xlu0 %3340
  %v3342 = vsel %vm3315, %v3333, 0.0
  %3343 = vadd.xlane.f32.xlu0 %v3342
  %v3344 = vpop.xlane.xlu0 %3343
  %v3345 = vrcp.pop %v3335
  %v3346 = vmul.f32 %v3335, %v3345
  %v3347 = vsub.f32 1.0, %v3346
  %v3348 = vmul.f32 %v3345, %v3347
  %v3349 = vadd.f32 %v3345, %v3348
  %vm3350 = vweird.f32 %v3335
  %vm3351 = vweird.f32 %v3345
  %vm3352 = vmor %vm3350, %vm3351
  %v3353 = vsel %vm3352, %v3345, %v3349
  %v3354 = vand.u32 2147483647, %v3335
  %vm3355 = vcmp.eq.f32.partialorder %v3354, 8.507059e+37
  %v3356 = vand.u32 %v3335, 2147483648
  %v3357 = vor.u32 1.1754944e-38, %v3356
  %v3358 = vsel %vm3355, %v3357, %v3353
  %v3359 = vmul.f32 %v3325, %v3358
  %v3360 = vrcp.pop %v3337
  %v3361 = vmul.f32 %v3337, %v3360
  %v3362 = vsub.f32 1.0, %v3361
  %v3363 = vmul.f32 %v3360, %v3362
  %v3364 = vadd.f32 %v3360, %v3363
  %vm3365 = vweird.f32 %v3337
  %vm3366 = vweird.f32 %v3360
  %vm3367 = vmor %vm3365, %vm3366
  %v3368 = vsel %vm3367, %v3360, %v3364
  %v3369 = vand.u32 2147483647, %v3337
  %vm3370 = vcmp.eq.f32.partialorder %v3369, 8.507059e+37
  %v3371 = vand.u32 %v3337, 2147483648
  %v3372 = vor.u32 1.1754944e-38, %v3371
  %v3373 = vsel %vm3370, %v3372, %v3368
  %v3374 = vmul.f32 %v3327, %v3373
  %v3375 = vrcp.pop %v3339
  %v3376 = vmul.f32 %v3339, %v3375
  %v3377 = vsub.f32 1.0, %v3376
  %v3378 = vmul.f32 %v3375, %v3377
  %v3379 = vadd.f32 %v3375, %v3378
  %vm3380 = vweird.f32 %v3339
  %vm3381 = vweird.f32 %v3375
  %vm3382 = vmor %vm3380, %vm3381
  %v3383 = vsel %vm3382, %v3375, %v3379
  %v3384 = vand.u32 2147483647, %v3339
  %vm3385 = vcmp.eq.f32.partialorder %v3384, 8.507059e+37
  %v3386 = vand.u32 %v3339, 2147483648
  %v3387 = vor.u32 1.1754944e-38, %v3386
  %v3388 = vsel %vm3385, %v3387, %v3383
  %v3389 = vmul.f32 %v3329, %v3388
  %v3390 = vrcp.pop %v3341
  %v3391 = vmul.f32 %v3341, %v3390
  %v3392 = vsub.f32 1.0, %v3391
  %v3393 = vmul.f32 %v3390, %v3392
  %v3394 = vadd.f32 %v3390, %v3393
  %vm3395 = vweird.f32 %v3341
  %vm3396 = vweird.f32 %v3390
  %vm3397 = vmor %vm3395, %vm3396
  %v3398 = vsel %vm3397, %v3390, %v3394
  %v3399 = vand.u32 2147483647, %v3341
  %vm3400 = vcmp.eq.f32.partialorder %v3399, 8.507059e+37
  %v3401 = vand.u32 %v3341, 2147483648
  %v3402 = vor.u32 1.1754944e-38, %v3401
  %v3403 = vsel %vm3400, %v3402, %v3398
  %v3404 = vmul.f32 %v3331, %v3403
  %v3405 = vrcp.pop %v3344
  %v3406 = vmul.f32 %v3344, %v3405
  %v3407 = vsub.f32 1.0, %v3406
  %v3408 = vmul.f32 %v3405, %v3407
  %v3409 = vadd.f32 %v3405, %v3408
  %vm3410 = vweird.f32 %v3344
  %vm3411 = vweird.f32 %v3405
  %vm3412 = vmor %vm3410, %vm3411
  %v3413 = vsel %vm3412, %v3405, %v3409
  %v3414 = vand.u32 2147483647, %v3344
  %vm3415 = vcmp.eq.f32.partialorder %v3414, 8.507059e+37
  %v3416 = vand.u32 %v3344, 2147483648
  %v3417 = vor.u32 1.1754944e-38, %v3416
  %v3418 = vsel %vm3415, %v3417, %v3413
  %v3419 = vmul.f32 %v3333, %v3418
  %3420 = vst [vmem:[%s65] sm:$0xff] %v3359
  %3421 = vst [vmem:[%s65 + $0x8] sm:$0xff] %v3374
  %3422 = vst [vmem:[%s65 + $0x10] sm:$0xff] %v3389
  %3423 = vst [vmem:[%s65 + $0x18] sm:$0xff] %v3404
  %3424 = vst [vmem:[%s65 + $0x20] sm:$0x3] %v3419
  // Predicated region
  $region130: #{vit_logits_forward.1} parent=0 // pred_check
    _
  $region131: #{vit_logits_forward.1} parent=0 // pred_check_branch
    %3426 = sbr.rel (0) target = $region133
  $region132: #{vit_logits_forward.1} parent=0 // pred_region
    _
  $region133: #{vit_logits_forward.1} parent=0 // pred_fallthru
    _
  // Predicated region
  $region134: #{vit_logits_forward.1} parent=0 // pred_check
    _
  $region135: #{vit_logits_forward.1} parent=0 // pred_check_branch
    %3428 = sbr.rel (0) target = $region137
  $region136: #{vit_logits_forward.1} parent=0 // pred_region
    _
  $region137: #{vit_logits_forward.1} parent=0 // pred_fallthru
    _

</llo_original>
